<compile_context>
chip_gen: v6e
topology: v6e:2x2x1
jax: 0.10.0
libtpu: 0.0.40
codegen_flags: <defaults>
</compile_context>

<pallas_src>
import math

import jax
import jax.numpy as jnp
import numpy as np
from jax import lax
from jax.experimental import pallas as pl
from jax.experimental.pallas import tpu as pltpu

# ---- model configuration (small, TPU-friendly) ----
VOCAB = 256
DIM = 128
N_HEADS = 4
HEAD_DIM = DIM // N_HEADS
N_LAYERS = 2
SEQ = 16
HIDDEN = DIM * 4
EPS = 1e-6
NEG_INF = -1e30


# ----------------------- fused forward kernel -----------------------
def fwd_kernel(x_ref, rope_ref, bias_ref, norms_ref, rot_ref,
               wqkv_ref, wo_ref, w13_ref, w2_ref, wout_ref, o_ref):
    f32 = jnp.float32
    bf16 = jnp.bfloat16

    h = x_ref[...]            # (M, D) f32 activations, batch folded into rows
    cos = rope_ref[0]         # (M, D) f32, cos tiled across heads & batch
    sin = rope_ref[1]         # (M, D) f32
    bias = bias_ref[...]      # (M, M) f32 block-diagonal causal additive mask
    norms = norms_ref[...]    # (2*L+1, D) f32 packed RMSNorm weights
    rot = rot_ref[...]        # (D, D) bf16 signed permutation: x @ rot == per-head rotate_half
    scale = 1.0 / math.sqrt(HEAD_DIM)

    def rmsnorm(t, w):        # t (M, D) f32, w (1, D) f32
        ms = jnp.mean(t * t, axis=-1, keepdims=True)
        return t * lax.rsqrt(ms + EPS) * w

    def rope(t):              # full-width RoPE: lane-dense VPU muls + one tiny MXU matmul
        tr = jnp.dot(t.astype(bf16), rot, preferred_element_type=f32)
        return t * cos + tr * sin

    for l in range(N_LAYERS):
        # ---- attention ----
        xn = rmsnorm(h, norms[2 * l:2 * l + 1]).astype(bf16)
        qkv = jnp.dot(xn, wqkv_ref[l], preferred_element_type=f32)      # (M, 3D) f32
        q = rope(qkv[:, :DIM]).astype(bf16)
        k = rope(qkv[:, DIM:2 * DIM]).astype(bf16)
        v = qkv[:, 2 * DIM:].astype(bf16)
        wo = wo_ref[l]                                                  # (D, D) bf16

        attn = None
        for hd in range(N_HEADS):
            lo = hd * HEAD_DIM
            hi = lo + HEAD_DIM
            # scores = q_h @ k_h^T  (contraction on the head dim, no explicit transpose)
            s = lax.dot_general(q[:, lo:hi], k[:, lo:hi],
                                (((1,), (1,)), ((), ())),
                                preferred_element_type=f32) * scale + bias
            m = jnp.max(s, axis=-1, keepdims=True)
            p = jnp.exp(s - m)
            denom = jnp.sum(p, axis=-1, keepdims=True)
            p = (p * pl.reciprocal(denom, approx=True)).astype(bf16)
            ctx = jnp.dot(p, v[:, lo:hi], preferred_element_type=f32).astype(bf16)
            part = jnp.dot(ctx, wo[lo:hi, :], preferred_element_type=f32)
            attn = part if attn is None else attn + part
        h = h + attn

        # ---- SwiGLU FFN ----
        hn = rmsnorm(h, norms[2 * l + 1:2 * l + 2]).astype(bf16)
        gu = jnp.dot(hn, w13_ref[l], preferred_element_type=f32)        # (M, 2*HIDDEN)
        g = gu[:, :HIDDEN]
        u = gu[:, HIDDEN:]
        act = (g * lax.logistic(g) * u).astype(bf16)
        h = h + jnp.dot(act, w2_ref[l], preferred_element_type=f32)

    # ---- final RMSNorm + LM head ----
    hn = rmsnorm(h, norms[2 * N_LAYERS:2 * N_LAYERS + 1]).astype(bf16)
    o_ref[...] = jnp.dot(hn, wout_ref[...],
                         preferred_element_type=f32).astype(o_ref.dtype)


# ----------------------- wrapper -----------------------
def llama_forward(tokens, kp):
    B, S = tokens.shape
    M = B * S
    L = N_LAYERS
    # token embedding gather (glue), then fold batch into the sublane dim
    h = kp["tok_emb"][tokens].reshape(M, DIM).astype(jnp.float32)

    out = pl.pallas_call(
        fwd_kernel,
        out_shape=jax.ShapeDtypeStruct((M, VOCAB), jnp.float32),
        grid=(1,),
        in_specs=[
            pl.BlockSpec((M, DIM), lambda i: (0, 0)),                  # x
            pl.BlockSpec((2, M, DIM), lambda i: (0, 0, 0)),            # cos/sin packed
            pl.BlockSpec((M, M), lambda i: (0, 0)),                    # causal bias
            pl.BlockSpec((2 * L + 1, DIM), lambda i: (0, 0)),          # packed norms
            pl.BlockSpec((DIM, DIM), lambda i: (0, 0)),                # rotate_half matrix
            pl.BlockSpec((L, DIM, 3 * DIM), lambda i: (0, 0, 0)),      # wqkv
            pl.BlockSpec((L, DIM, DIM), lambda i: (0, 0, 0)),          # wo
            pl.BlockSpec((L, DIM, 2 * HIDDEN), lambda i: (0, 0, 0)),   # w1|w3
            pl.BlockSpec((L, HIDDEN, DIM), lambda i: (0, 0, 0)),       # w2
            pl.BlockSpec((DIM, VOCAB), lambda i: (0, 0)),              # lm head
        ],
        out_specs=pl.BlockSpec((M, VOCAB), lambda i: (0, 0)),
        compiler_params=pltpu.CompilerParams(
            dimension_semantics=("arbitrary",)),
    )(h, kp["rope"], kp["bias"], kp["norms"], kp["rot"],
      kp["wqkv"], kp["wo"], kp["w13"], kp["w2"], kp["out_w"])
    return out.reshape(B, S, VOCAB)


# ----------------------- constants / parameter packing -----------------------
def precompute_cos_sin(seq_len, dim, base=10000):
    inv_freq = 1.0 / (base ** (np.arange(0, dim, 2, dtype=np.float32) / dim))
    t = np.arange(seq_len, dtype=np.float32)
    freqs = np.einsum("i,j->ij", t, inv_freq)
    emb = np.concatenate([freqs, freqs], axis=-1)          # (S, dim)
    return np.cos(emb), np.sin(emb)


def build_kernel_inputs(master, B, S):
    M = B * S
    cos, sin = precompute_cos_sin(S, HEAD_DIM)             # (S, HEAD_DIM)
    cos_full = np.tile(cos, (B, N_HEADS))                  # (M, D)
    sin_full = np.tile(sin, (B, N_HEADS))
    rope = jnp.asarray(np.stack([cos_full, sin_full]), jnp.float32)

    # block-diagonal causal additive bias over the folded batch
    r = np.arange(M)
    same_batch = (r[:, None] // S) == (r[None, :] // S)
    causal = (r[:, None] % S) >= (r[None, :] % S)
    bias = jnp.asarray(np.where(same_batch & causal, 0.0, NEG_INF), np.float32)

    # signed permutation matrix: (x @ rot) == rotate_half applied per 32-lane head block
    rot = np.zeros((DIM, DIM), np.float32)
    half = HEAD_DIM // 2
    for hh in range(N_HEADS):
        base_c = hh * HEAD_DIM
        for j in range(half):
            rot[base_c + half + j, base_c + j] = -1.0      # -x2 -> first half
            rot[base_c + j, base_c + half + j] = 1.0       #  x1 -> second half
    rot = jnp.asarray(rot, jnp.bfloat16)

    layers = master["layers"]
    wqkv = jnp.stack([jnp.concatenate([lp["wq"], lp["wk"], lp["wv"]], axis=1)
                      for lp in layers]).astype(jnp.bfloat16)
    wo = jnp.stack([lp["wo"] for lp in layers]).astype(jnp.bfloat16)
    w13 = jnp.stack([jnp.concatenate([lp["w1"], lp["w3"]], axis=1)
                     for lp in layers]).astype(jnp.bfloat16)
    w2 = jnp.stack([lp["w2"] for lp in layers]).astype(jnp.bfloat16)
    norms = jnp.concatenate(
        [jnp.stack([lp["attn_norm"], lp["ffn_norm"]]) for lp in layers]
        + [master["final_norm"][None, :]], axis=0).astype(jnp.float32)

    return dict(tok_emb=master["tok_emb"], rope=rope, bias=bias, rot=rot,
                norms=norms, wqkv=wqkv, wo=wo, w13=w13, w2=w2,
                out_w=master["out_w"].astype(jnp.bfloat16))


def init_master(key):
    def dense(k, shape):
        return jax.random.normal(k, shape, jnp.float32) * 0.02

    keys = jax.random.split(key, 2 + 7 * N_LAYERS)
    m = {"tok_emb": dense(keys[0], (VOCAB, DIM)),
         "out_w": dense(keys[1], (DIM, VOCAB)),
         "final_norm": jnp.ones((DIM,), jnp.float32),
         "layers": []}
    ki = 2
    for _ in range(N_LAYERS):
        m["layers"].append({
            "wq": dense(keys[ki + 0], (DIM, DIM)),
            "wk": dense(keys[ki + 1], (DIM, DIM)),
            "wv": dense(keys[ki + 2], (DIM, DIM)),
            "wo": dense(keys[ki + 3], (DIM, DIM)),
            "w1": dense(keys[ki + 4], (DIM, HIDDEN)),
            "w2": dense(keys[ki + 5], (HIDDEN, DIM)),
            "w3": dense(keys[ki + 6], (DIM, HIDDEN)),
            "attn_norm": jnp.ones((DIM,), jnp.float32),
            "ffn_norm": jnp.ones((DIM,), jnp.float32)})
        ki += 7
    return m


# ----------------------- pure-JAX fp32 reference (for validation) -----------------------
def ref_forward(tokens, master):
    h = master["tok_emb"][tokens]
    B, S, D = h.shape
    cos_np, sin_np = precompute_cos_sin(S, HEAD_DIM)
    cos = jnp.asarray(cos_np)[None, :, None, :]
    sin = jnp.asarray(sin_np)[None, :, None, :]
    mask = jnp.where(jnp.tril(jnp.ones((S, S), dtype=bool)), 0.0, -jnp.inf)

    def rms(x, w):
        ms = jnp.mean(x * x, axis=-1, keepdims=True)
        return x * lax.rsqrt(ms + EPS) * w

    def rot_half(x):
        return jnp.concatenate([-x[..., HEAD_DIM // 2:], x[..., :HEAD_DIM // 2]], -1)

    for lp in master["layers"]:
        xn = rms(h, lp["attn_norm"])
        q = (xn @ lp["wq"]).reshape(B, S, N_HEADS, HEAD_DIM)
        k = (xn @ lp["wk"]).reshape(B, S, N_HEADS, HEAD_DIM)
        v = (xn @ lp["wv"]).reshape(B, S, N_HEADS, HEAD_DIM)
        q = q * cos + rot_half(q) * sin
        k = k * cos + rot_half(k) * sin
        q, k, v = (t.transpose(0, 2, 1, 3) for t in (q, k, v))
        sc = q @ k.transpose(0, 1, 3, 2) / math.sqrt(HEAD_DIM) + mask
        p = jax.nn.softmax(sc, axis=-1)
        o = (p @ v).transpose(0, 2, 1, 3).reshape(B, S, D)
        h = h + o @ lp["wo"]
        hn = rms(h, lp["ffn_norm"])
        h = h + (jax.nn.silu(hn @ lp["w1"]) * (hn @ lp["w3"])) @ lp["w2"]
    return rms(h, master["final_norm"]) @ master["out_w"]


if __name__ == "__main__":
    key = jax.random.PRNGKey(0)
    pkey, tkey = jax.random.split(key)
    master = init_master(pkey)

    B = 2
    tokens = jax.random.randint(tkey, (B, SEQ), 0, VOCAB, dtype=jnp.int32)
    kparams = build_kernel_inputs(master, B, SEQ)

    out = jax.block_until_ready(llama_forward(tokens, kparams))
    ref = jax.block_until_ready(ref_forward(tokens, master))

    assert out.shape == (B, SEQ, VOCAB), out.shape
    assert bool(jnp.all(jnp.isfinite(out)))
    np.testing.assert_allclose(np.asarray(out), np.asarray(ref), rtol=2e-2, atol=2e-2)

    print("KERNEL_OK")
</pallas_src>

<mosaic_0001>
module attributes {stable_mosaic.version = 11 : i64} {
  func.func @fwd_kernel(%arg0: i32, %arg1: memref<32x128xf32, #tpu.memory_space<vmem>>, %arg2: memref<2x32x128xf32, #tpu.memory_space<vmem>>, %arg3: memref<32x32xf32, #tpu.memory_space<vmem>>, %arg4: memref<5x128xf32, #tpu.memory_space<vmem>>, %arg5: memref<128x128xbf16, #tpu.memory_space<vmem>>, %arg6: memref<2x128x384xbf16, #tpu.memory_space<vmem>>, %arg7: memref<2x128x128xbf16, #tpu.memory_space<vmem>>, %arg8: memref<2x128x1024xbf16, #tpu.memory_space<vmem>>, %arg9: memref<2x512x128xbf16, #tpu.memory_space<vmem>>, %arg10: memref<128x256xbf16, #tpu.memory_space<vmem>>, %arg11: memref<32x256xf32, #tpu.memory_space<vmem>>) attributes {dimension_semantics = [#tpu.dimension_semantics<arbitrary>], iteration_bounds = array<i64: 1>, scalar_prefetch = 0 : i64, scratch_operands = 0 : i64, tpu.core_type = #tpu.core_type<tc>, window_params = [{pipeline_mode = #tpu.pipeline_mode<synchronous>, transform_indices = @transform_0, window_bounds = array<i64: 32, 128>}, {pipeline_mode = #tpu.pipeline_mode<synchronous>, transform_indices = @transform_1, window_bounds = array<i64: 2, 32, 128>}, {pipeline_mode = #tpu.pipeline_mode<synchronous>, transform_indices = @transform_2, window_bounds = array<i64: 32, 32>}, {pipeline_mode = #tpu.pipeline_mode<synchronous>, transform_indices = @transform_3, window_bounds = array<i64: 5, 128>}, {pipeline_mode = #tpu.pipeline_mode<synchronous>, transform_indices = @transform_4, window_bounds = array<i64: 128, 128>}, {pipeline_mode = #tpu.pipeline_mode<synchronous>, transform_indices = @transform_5, window_bounds = array<i64: 2, 128, 384>}, {pipeline_mode = #tpu.pipeline_mode<synchronous>, transform_indices = @transform_6, window_bounds = array<i64: 2, 128, 128>}, {pipeline_mode = #tpu.pipeline_mode<synchronous>, transform_indices = @transform_7, window_bounds = array<i64: 2, 128, 1024>}, {pipeline_mode = #tpu.pipeline_mode<synchronous>, transform_indices = @transform_8, window_bounds = array<i64: 2, 512, 128>}, {pipeline_mode = #tpu.pipeline_mode<synchronous>, transform_indices = @transform_9, window_bounds = array<i64: 128, 256>}, {pipeline_mode = #tpu.pipeline_mode<synchronous>, transform_indices = @transform_10, window_bounds = array<i64: 32, 256>}]} {
    %c0 = arith.constant 0 : index
    %c0_0 = arith.constant 0 : index
    %0 = vector.load %arg1[%c0, %c0_0] : memref<32x128xf32, #tpu.memory_space<vmem>>, vector<32x128xf32>
    %c0_1 = arith.constant 0 : index
    %c0_2 = arith.constant 0 : index
    %c0_3 = arith.constant 0 : index
    %1 = vector.load %arg2[%c0_1, %c0_2, %c0_3] : memref<2x32x128xf32, #tpu.memory_space<vmem>>, vector<1x32x128xf32>
    %2 = vector.shape_cast %1 : vector<1x32x128xf32> to vector<32x128xf32>
    %c1 = arith.constant 1 : index
    %c0_4 = arith.constant 0 : index
    %c0_5 = arith.constant 0 : index
    %3 = vector.load %arg2[%c1, %c0_4, %c0_5] : memref<2x32x128xf32, #tpu.memory_space<vmem>>, vector<1x32x128xf32>
    %4 = vector.shape_cast %3 : vector<1x32x128xf32> to vector<32x128xf32>
    %c0_6 = arith.constant 0 : index
    %c0_7 = arith.constant 0 : index
    %5 = vector.load %arg3[%c0_6, %c0_7] : memref<32x32xf32, #tpu.memory_space<vmem>>, vector<32x32xf32>
    %c0_8 = arith.constant 0 : index
    %c0_9 = arith.constant 0 : index
    %6 = vector.load %arg4[%c0_8, %c0_9] : memref<5x128xf32, #tpu.memory_space<vmem>>, vector<5x128xf32>
    %c0_10 = arith.constant 0 : index
    %c0_11 = arith.constant 0 : index
    %7 = vector.load %arg5[%c0_10, %c0_11] : memref<128x128xbf16, #tpu.memory_space<vmem>>, vector<128x128xbf16>
    %8 = vector.extract_strided_slice %6 {offsets = [0, 0], sizes = [1, 128], strides = [1, 1]} : vector<5x128xf32> to vector<1x128xf32>
    %9 = arith.mulf %0, %0 : vector<32x128xf32>
    %cst = arith.constant dense<0.000000e+00> : vector<32xf32>
    %10 = vector.multi_reduction <add>, %9, %cst [1] : vector<32x128xf32> to vector<32xf32>
    %11 = vector.shape_cast %10 : vector<32xf32> to vector<32x1xf32>
    %cst_12 = arith.constant 1.280000e+02 : f32
    %12 = vector.broadcast %cst_12 : f32 to vector<32x1xf32>
    %13 = arith.divf %11, %12 : vector<32x1xf32>
    %cst_13 = arith.constant 9.99999997E-7 : f32
    %14 = vector.broadcast %cst_13 : f32 to vector<32x1xf32>
    %15 = arith.addf %13, %14 : vector<32x1xf32>
    %16 = math.rsqrt %15 : vector<32x1xf32>
    %17 = vector.broadcast %16 : vector<32x1xf32> to vector<32x128xf32>
    %18 = arith.mulf %0, %17 : vector<32x128xf32>
    %19 = vector.broadcast %8 : vector<1x128xf32> to vector<32x128xf32>
    %20 = arith.mulf %18, %19 : vector<32x128xf32>
    %21 = arith.truncf %20 : vector<32x128xf32> to vector<32x128xbf16>
    %c0_14 = arith.constant 0 : index
    %c0_15 = arith.constant 0 : index
    %c0_16 = arith.constant 0 : index
    %22 = vector.load %arg6[%c0_14, %c0_15, %c0_16] : memref<2x128x384xbf16, #tpu.memory_space<vmem>>, vector<1x128x384xbf16>
    %23 = vector.shape_cast %22 : vector<1x128x384xbf16> to vector<128x384xbf16>
    %cst_17 = arith.constant dense<0.000000e+00> : vector<32x384xf32>
    %24 = tpu.matmul %21, %23, %cst_17 {dimension_numbers = #tpu.dot_dimension_numbers<[1], [0], [0], [1], [0, 0, 1, 1], [], []>} : vector<32x128xbf16>, vector<128x384xbf16>, vector<32x384xf32> -> vector<32x384xf32>
    %25 = vector.extract_strided_slice %24 {offsets = [0, 0], sizes = [32, 128], strides = [1, 1]} : vector<32x384xf32> to vector<32x128xf32>
    %26 = arith.truncf %25 : vector<32x128xf32> to vector<32x128xbf16>
    %cst_18 = arith.constant dense<0.000000e+00> : vector<32x128xf32>
    %27 = tpu.matmul %26, %7, %cst_18 {dimension_numbers = #tpu.dot_dimension_numbers<[1], [0], [0], [1], [0, 0, 1, 1], [], []>} : vector<32x128xbf16>, vector<128x128xbf16>, vector<32x128xf32> -> vector<32x128xf32>
    %28 = arith.mulf %25, %2 : vector<32x128xf32>
    %29 = arith.mulf %27, %4 : vector<32x128xf32>
    %30 = arith.addf %28, %29 : vector<32x128xf32>
    %31 = arith.truncf %30 : vector<32x128xf32> to vector<32x128xbf16>
    %32 = vector.extract_strided_slice %24 {offsets = [0, 128], sizes = [32, 128], strides = [1, 1]} : vector<32x384xf32> to vector<32x128xf32>
    %33 = arith.truncf %32 : vector<32x128xf32> to vector<32x128xbf16>
    %cst_19 = arith.constant dense<0.000000e+00> : vector<32x128xf32>
    %34 = tpu.matmul %33, %7, %cst_19 {dimension_numbers = #tpu.dot_dimension_numbers<[1], [0], [0], [1], [0, 0, 1, 1], [], []>} : vector<32x128xbf16>, vector<128x128xbf16>, vector<32x128xf32> -> vector<32x128xf32>
    %35 = arith.mulf %32, %2 : vector<32x128xf32>
    %36 = arith.mulf %34, %4 : vector<32x128xf32>
    %37 = arith.addf %35, %36 : vector<32x128xf32>
    %38 = arith.truncf %37 : vector<32x128xf32> to vector<32x128xbf16>
    %39 = vector.extract_strided_slice %24 {offsets = [0, 256], sizes = [32, 128], strides = [1, 1]} : vector<32x384xf32> to vector<32x128xf32>
    %40 = arith.truncf %39 : vector<32x128xf32> to vector<32x128xbf16>
    %c0_20 = arith.constant 0 : index
    %c0_21 = arith.constant 0 : index
    %c0_22 = arith.constant 0 : index
    %41 = vector.load %arg7[%c0_20, %c0_21, %c0_22] : memref<2x128x128xbf16, #tpu.memory_space<vmem>>, vector<1x128x128xbf16>
    %42 = vector.shape_cast %41 : vector<1x128x128xbf16> to vector<128x128xbf16>
    %43 = vector.extract_strided_slice %31 {offsets = [0, 0], sizes = [32, 32], strides = [1, 1]} : vector<32x128xbf16> to vector<32x32xbf16>
    %44 = vector.extract_strided_slice %38 {offsets = [0, 0], sizes = [32, 32], strides = [1, 1]} : vector<32x128xbf16> to vector<32x32xbf16>
    %cst_23 = arith.constant dense<0.000000e+00> : vector<32x32xf32>
    %45 = tpu.matmul %43, %44, %cst_23 {dimension_numbers = #tpu.dot_dimension_numbers<[1], [1], [0], [0], [0, 0, 1, 0], [], []>} : vector<32x32xbf16>, vector<32x32xbf16>, vector<32x32xf32> -> vector<32x32xf32>
    %cst_24 = arith.constant 0.176776692 : f32
    %46 = vector.broadcast %cst_24 : f32 to vector<32x32xf32>
    %47 = arith.mulf %45, %46 : vector<32x32xf32>
    %48 = arith.addf %47, %5 : vector<32x32xf32>
    %cst_25 = arith.constant dense<0xFF800000> : vector<32xf32>
    %49 = vector.multi_reduction <maximumf>, %48, %cst_25 [1] : vector<32x32xf32> to vector<32xf32>
    %50 = vector.shape_cast %49 : vector<32xf32> to vector<32x1xf32>
    %51 = vector.broadcast %50 : vector<32x1xf32> to vector<32x32xf32>
    %52 = arith.subf %48, %51 : vector<32x32xf32>
    %53 = math.exp %52 : vector<32x32xf32>
    %cst_26 = arith.constant dense<0.000000e+00> : vector<32xf32>
    %54 = vector.multi_reduction <add>, %53, %cst_26 [1] : vector<32x32xf32> to vector<32xf32>
    %55 = vector.shape_cast %54 : vector<32xf32> to vector<32x1xf32>
    %56 = tpu.reciprocal %55 {approx = true} : vector<32x1xf32> -> vector<32x1xf32>
    %57 = vector.broadcast %56 : vector<32x1xf32> to vector<32x32xf32>
    %58 = arith.mulf %53, %57 : vector<32x32xf32>
    %59 = arith.truncf %58 : vector<32x32xf32> to vector<32x32xbf16>
    %60 = vector.extract_strided_slice %40 {offsets = [0, 0], sizes = [32, 32], strides = [1, 1]} : vector<32x128xbf16> to vector<32x32xbf16>
    %cst_27 = arith.constant dense<0.000000e+00> : vector<32x32xf32>
    %61 = tpu.matmul %59, %60, %cst_27 {dimension_numbers = #tpu.dot_dimension_numbers<[1], [0], [0], [1], [0, 0, 1, 1], [], []>} : vector<32x32xbf16>, vector<32x32xbf16>, vector<32x32xf32> -> vector<32x32xf32>
    %62 = arith.truncf %61 : vector<32x32xf32> to vector<32x32xbf16>
    %63 = vector.extract_strided_slice %42 {offsets = [0, 0], sizes = [32, 128], strides = [1, 1]} : vector<128x128xbf16> to vector<32x128xbf16>
    %cst_28 = arith.constant dense<0.000000e+00> : vector<32x128xf32>
    %64 = tpu.matmul %62, %63, %cst_28 {dimension_numbers = #tpu.dot_dimension_numbers<[1], [0], [0], [1], [0, 0, 1, 1], [], []>} : vector<32x32xbf16>, vector<32x128xbf16>, vector<32x128xf32> -> vector<32x128xf32>
    %65 = vector.extract_strided_slice %31 {offsets = [0, 32], sizes = [32, 32], strides = [1, 1]} : vector<32x128xbf16> to vector<32x32xbf16>
    %66 = vector.extract_strided_slice %38 {offsets = [0, 32], sizes = [32, 32], strides = [1, 1]} : vector<32x128xbf16> to vector<32x32xbf16>
    %cst_29 = arith.constant dense<0.000000e+00> : vector<32x32xf32>
    %67 = tpu.matmul %65, %66, %cst_29 {dimension_numbers = #tpu.dot_dimension_numbers<[1], [1], [0], [0], [0, 0, 1, 0], [], []>} : vector<32x32xbf16>, vector<32x32xbf16>, vector<32x32xf32> -> vector<32x32xf32>
    %cst_30 = arith.constant 0.176776692 : f32
    %68 = vector.broadcast %cst_30 : f32 to vector<32x32xf32>
    %69 = arith.mulf %67, %68 : vector<32x32xf32>
    %70 = arith.addf %69, %5 : vector<32x32xf32>
    %cst_31 = arith.constant dense<0xFF800000> : vector<32xf32>
    %71 = vector.multi_reduction <maximumf>, %70, %cst_31 [1] : vector<32x32xf32> to vector<32xf32>
    %72 = vector.shape_cast %71 : vector<32xf32> to vector<32x1xf32>
    %73 = vector.broadcast %72 : vector<32x1xf32> to vector<32x32xf32>
    %74 = arith.subf %70, %73 : vector<32x32xf32>
    %75 = math.exp %74 : vector<32x32xf32>
    %cst_32 = arith.constant dense<0.000000e+00> : vector<32xf32>
    %76 = vector.multi_reduction <add>, %75, %cst_32 [1] : vector<32x32xf32> to vector<32xf32>
    %77 = vector.shape_cast %76 : vector<32xf32> to vector<32x1xf32>
    %78 = tpu.reciprocal %77 {approx = true} : vector<32x1xf32> -> vector<32x1xf32>
    %79 = vector.broadcast %78 : vector<32x1xf32> to vector<32x32xf32>
    %80 = arith.mulf %75, %79 : vector<32x32xf32>
    %81 = arith.truncf %80 : vector<32x32xf32> to vector<32x32xbf16>
    %82 = vector.extract_strided_slice %40 {offsets = [0, 32], sizes = [32, 32], strides = [1, 1]} : vector<32x128xbf16> to vector<32x32xbf16>
    %cst_33 = arith.constant dense<0.000000e+00> : vector<32x32xf32>
    %83 = tpu.matmul %81, %82, %cst_33 {dimension_numbers = #tpu.dot_dimension_numbers<[1], [0], [0], [1], [0, 0, 1, 1], [], []>} : vector<32x32xbf16>, vector<32x32xbf16>, vector<32x32xf32> -> vector<32x32xf32>
    %84 = arith.truncf %83 : vector<32x32xf32> to vector<32x32xbf16>
    %85 = vector.extract_strided_slice %42 {offsets = [32, 0], sizes = [32, 128], strides = [1, 1]} : vector<128x128xbf16> to vector<32x128xbf16>
    %cst_34 = arith.constant dense<0.000000e+00> : vector<32x128xf32>
    %86 = tpu.matmul %84, %85, %cst_34 {dimension_numbers = #tpu.dot_dimension_numbers<[1], [0], [0], [1], [0, 0, 1, 1], [], []>} : vector<32x32xbf16>, vector<32x128xbf16>, vector<32x128xf32> -> vector<32x128xf32>
    %87 = arith.addf %64, %86 : vector<32x128xf32>
    %88 = vector.extract_strided_slice %31 {offsets = [0, 64], sizes = [32, 32], strides = [1, 1]} : vector<32x128xbf16> to vector<32x32xbf16>
    %89 = vector.extract_strided_slice %38 {offsets = [0, 64], sizes = [32, 32], strides = [1, 1]} : vector<32x128xbf16> to vector<32x32xbf16>
    %cst_35 = arith.constant dense<0.000000e+00> : vector<32x32xf32>
    %90 = tpu.matmul %88, %89, %cst_35 {dimension_numbers = #tpu.dot_dimension_numbers<[1], [1], [0], [0], [0, 0, 1, 0], [], []>} : vector<32x32xbf16>, vector<32x32xbf16>, vector<32x32xf32> -> vector<32x32xf32>
    %cst_36 = arith.constant 0.176776692 : f32
    %91 = vector.broadcast %cst_36 : f32 to vector<32x32xf32>
    %92 = arith.mulf %90, %91 : vector<32x32xf32>
    %93 = arith.addf %92, %5 : vector<32x32xf32>
    %cst_37 = arith.constant dense<0xFF800000> : vector<32xf32>
    %94 = vector.multi_reduction <maximumf>, %93, %cst_37 [1] : vector<32x32xf32> to vector<32xf32>
    %95 = vector.shape_cast %94 : vector<32xf32> to vector<32x1xf32>
    %96 = vector.broadcast %95 : vector<32x1xf32> to vector<32x32xf32>
    %97 = arith.subf %93, %96 : vector<32x32xf32>
    %98 = math.exp %97 : vector<32x32xf32>
    %cst_38 = arith.constant dense<0.000000e+00> : vector<32xf32>
    %99 = vector.multi_reduction <add>, %98, %cst_38 [1] : vector<32x32xf32> to vector<32xf32>
    %100 = vector.shape_cast %99 : vector<32xf32> to vector<32x1xf32>
    %101 = tpu.reciprocal %100 {approx = true} : vector<32x1xf32> -> vector<32x1xf32>
    %102 = vector.broadcast %101 : vector<32x1xf32> to vector<32x32xf32>
    %103 = arith.mulf %98, %102 : vector<32x32xf32>
    %104 = arith.truncf %103 : vector<32x32xf32> to vector<32x32xbf16>
    %105 = vector.extract_strided_slice %40 {offsets = [0, 64], sizes = [32, 32], strides = [1, 1]} : vector<32x128xbf16> to vector<32x32xbf16>
    %cst_39 = arith.constant dense<0.000000e+00> : vector<32x32xf32>
    %106 = tpu.matmul %104, %105, %cst_39 {dimension_numbers = #tpu.dot_dimension_numbers<[1], [0], [0], [1], [0, 0, 1, 1], [], []>} : vector<32x32xbf16>, vector<32x32xbf16>, vector<32x32xf32> -> vector<32x32xf32>
    %107 = arith.truncf %106 : vector<32x32xf32> to vector<32x32xbf16>
    %108 = vector.extract_strided_slice %42 {offsets = [64, 0], sizes = [32, 128], strides = [1, 1]} : vector<128x128xbf16> to vector<32x128xbf16>
    %cst_40 = arith.constant dense<0.000000e+00> : vector<32x128xf32>
    %109 = tpu.matmul %107, %108, %cst_40 {dimension_numbers = #tpu.dot_dimension_numbers<[1], [0], [0], [1], [0, 0, 1, 1], [], []>} : vector<32x32xbf16>, vector<32x128xbf16>, vector<32x128xf32> -> vector<32x128xf32>
    %110 = arith.addf %87, %109 : vector<32x128xf32>
    %111 = vector.extract_strided_slice %31 {offsets = [0, 96], sizes = [32, 32], strides = [1, 1]} : vector<32x128xbf16> to vector<32x32xbf16>
    %112 = vector.extract_strided_slice %38 {offsets = [0, 96], sizes = [32, 32], strides = [1, 1]} : vector<32x128xbf16> to vector<32x32xbf16>
    %cst_41 = arith.constant dense<0.000000e+00> : vector<32x32xf32>
    %113 = tpu.matmul %111, %112, %cst_41 {dimension_numbers = #tpu.dot_dimension_numbers<[1], [1], [0], [0], [0, 0, 1, 0], [], []>} : vector<32x32xbf16>, vector<32x32xbf16>, vector<32x32xf32> -> vector<32x32xf32>
    %cst_42 = arith.constant 0.176776692 : f32
    %114 = vector.broadcast %cst_42 : f32 to vector<32x32xf32>
    %115 = arith.mulf %113, %114 : vector<32x32xf32>
    %116 = arith.addf %115, %5 : vector<32x32xf32>
    %cst_43 = arith.constant dense<0xFF800000> : vector<32xf32>
    %117 = vector.multi_reduction <maximumf>, %116, %cst_43 [1] : vector<32x32xf32> to vector<32xf32>
    %118 = vector.shape_cast %117 : vector<32xf32> to vector<32x1xf32>
    %119 = vector.broadcast %118 : vector<32x1xf32> to vector<32x32xf32>
    %120 = arith.subf %116, %119 : vector<32x32xf32>
    %121 = math.exp %120 : vector<32x32xf32>
    %cst_44 = arith.constant dense<0.000000e+00> : vector<32xf32>
    %122 = vector.multi_reduction <add>, %121, %cst_44 [1] : vector<32x32xf32> to vector<32xf32>
    %123 = vector.shape_cast %122 : vector<32xf32> to vector<32x1xf32>
    %124 = tpu.reciprocal %123 {approx = true} : vector<32x1xf32> -> vector<32x1xf32>
    %125 = vector.broadcast %124 : vector<32x1xf32> to vector<32x32xf32>
    %126 = arith.mulf %121, %125 : vector<32x32xf32>
    %127 = arith.truncf %126 : vector<32x32xf32> to vector<32x32xbf16>
    %128 = vector.extract_strided_slice %40 {offsets = [0, 96], sizes = [32, 32], strides = [1, 1]} : vector<32x128xbf16> to vector<32x32xbf16>
    %cst_45 = arith.constant dense<0.000000e+00> : vector<32x32xf32>
    %129 = tpu.matmul %127, %128, %cst_45 {dimension_numbers = #tpu.dot_dimension_numbers<[1], [0], [0], [1], [0, 0, 1, 1], [], []>} : vector<32x32xbf16>, vector<32x32xbf16>, vector<32x32xf32> -> vector<32x32xf32>
    %130 = arith.truncf %129 : vector<32x32xf32> to vector<32x32xbf16>
    %131 = vector.extract_strided_slice %42 {offsets = [96, 0], sizes = [32, 128], strides = [1, 1]} : vector<128x128xbf16> to vector<32x128xbf16>
    %cst_46 = arith.constant dense<0.000000e+00> : vector<32x128xf32>
    %132 = tpu.matmul %130, %131, %cst_46 {dimension_numbers = #tpu.dot_dimension_numbers<[1], [0], [0], [1], [0, 0, 1, 1], [], []>} : vector<32x32xbf16>, vector<32x128xbf16>, vector<32x128xf32> -> vector<32x128xf32>
    %133 = arith.addf %110, %132 : vector<32x128xf32>
    %134 = arith.addf %0, %133 : vector<32x128xf32>
    %135 = vector.extract_strided_slice %6 {offsets = [1, 0], sizes = [1, 128], strides = [1, 1]} : vector<5x128xf32> to vector<1x128xf32>
    %136 = arith.mulf %134, %134 : vector<32x128xf32>
    %cst_47 = arith.constant dense<0.000000e+00> : vector<32xf32>
    %137 = vector.multi_reduction <add>, %136, %cst_47 [1] : vector<32x128xf32> to vector<32xf32>
    %138 = vector.shape_cast %137 : vector<32xf32> to vector<32x1xf32>
    %cst_48 = arith.constant 1.280000e+02 : f32
    %139 = vector.broadcast %cst_48 : f32 to vector<32x1xf32>
    %140 = arith.divf %138, %139 : vector<32x1xf32>
    %cst_49 = arith.constant 9.99999997E-7 : f32
    %141 = vector.broadcast %cst_49 : f32 to vector<32x1xf32>
    %142 = arith.addf %140, %141 : vector<32x1xf32>
    %143 = math.rsqrt %142 : vector<32x1xf32>
    %144 = vector.broadcast %143 : vector<32x1xf32> to vector<32x128xf32>
    %145 = arith.mulf %134, %144 : vector<32x128xf32>
    %146 = vector.broadcast %135 : vector<1x128xf32> to vector<32x128xf32>
    %147 = arith.mulf %145, %146 : vector<32x128xf32>
    %148 = arith.truncf %147 : vector<32x128xf32> to vector<32x128xbf16>
    %c0_50 = arith.constant 0 : index
    %c0_51 = arith.constant 0 : index
    %c0_52 = arith.constant 0 : index
    %149 = vector.load %arg8[%c0_50, %c0_51, %c0_52] : memref<2x128x1024xbf16, #tpu.memory_space<vmem>>, vector<1x128x1024xbf16>
    %150 = vector.shape_cast %149 : vector<1x128x1024xbf16> to vector<128x1024xbf16>
    %cst_53 = arith.constant dense<0.000000e+00> : vector<32x1024xf32>
    %151 = tpu.matmul %148, %150, %cst_53 {dimension_numbers = #tpu.dot_dimension_numbers<[1], [0], [0], [1], [0, 0, 1, 1], [], []>} : vector<32x128xbf16>, vector<128x1024xbf16>, vector<32x1024xf32> -> vector<32x1024xf32>
    %152 = vector.extract_strided_slice %151 {offsets = [0, 0], sizes = [32, 512], strides = [1, 1]} : vector<32x1024xf32> to vector<32x512xf32>
    %153 = vector.extract_strided_slice %151 {offsets = [0, 512], sizes = [32, 512], strides = [1, 1]} : vector<32x1024xf32> to vector<32x512xf32>
    %154 = arith.negf %152 : vector<32x512xf32>
    %155 = math.exp %154 : vector<32x512xf32>
    %cst_54 = arith.constant 1.000000e+00 : f32
    %156 = vector.broadcast %cst_54 : f32 to vector<32x512xf32>
    %157 = arith.addf %156, %155 : vector<32x512xf32>
    %158 = arith.divf %156, %157 : vector<32x512xf32>
    %159 = arith.mulf %152, %158 : vector<32x512xf32>
    %160 = arith.mulf %159, %153 : vector<32x512xf32>
    %161 = arith.truncf %160 : vector<32x512xf32> to vector<32x512xbf16>
    %c0_55 = arith.constant 0 : index
    %c0_56 = arith.constant 0 : index
    %c0_57 = arith.constant 0 : index
    %162 = vector.load %arg9[%c0_55, %c0_56, %c0_57] : memref<2x512x128xbf16, #tpu.memory_space<vmem>>, vector<1x512x128xbf16>
    %163 = vector.shape_cast %162 : vector<1x512x128xbf16> to vector<512x128xbf16>
    %cst_58 = arith.constant dense<0.000000e+00> : vector<32x128xf32>
    %164 = tpu.matmul %161, %163, %cst_58 {dimension_numbers = #tpu.dot_dimension_numbers<[1], [0], [0], [1], [0, 0, 1, 1], [], []>} : vector<32x512xbf16>, vector<512x128xbf16>, vector<32x128xf32> -> vector<32x128xf32>
    %165 = arith.addf %134, %164 : vector<32x128xf32>
    %166 = vector.extract_strided_slice %6 {offsets = [2, 0], sizes = [1, 128], strides = [1, 1]} : vector<5x128xf32> to vector<1x128xf32>
    %167 = arith.mulf %165, %165 : vector<32x128xf32>
    %cst_59 = arith.constant dense<0.000000e+00> : vector<32xf32>
    %168 = vector.multi_reduction <add>, %167, %cst_59 [1] : vector<32x128xf32> to vector<32xf32>
    %169 = vector.shape_cast %168 : vector<32xf32> to vector<32x1xf32>
    %cst_60 = arith.constant 1.280000e+02 : f32
    %170 = vector.broadcast %cst_60 : f32 to vector<32x1xf32>
    %171 = arith.divf %169, %170 : vector<32x1xf32>
    %cst_61 = arith.constant 9.99999997E-7 : f32
    %172 = vector.broadcast %cst_61 : f32 to vector<32x1xf32>
    %173 = arith.addf %171, %172 : vector<32x1xf32>
    %174 = math.rsqrt %173 : vector<32x1xf32>
    %175 = vector.broadcast %174 : vector<32x1xf32> to vector<32x128xf32>
    %176 = arith.mulf %165, %175 : vector<32x128xf32>
    %177 = vector.broadcast %166 : vector<1x128xf32> to vector<32x128xf32>
    %178 = arith.mulf %176, %177 : vector<32x128xf32>
    %179 = arith.truncf %178 : vector<32x128xf32> to vector<32x128xbf16>
    %c1_62 = arith.constant 1 : index
    %c0_63 = arith.constant 0 : index
    %c0_64 = arith.constant 0 : index
    %180 = vector.load %arg6[%c1_62, %c0_63, %c0_64] : memref<2x128x384xbf16, #tpu.memory_space<vmem>>, vector<1x128x384xbf16>
    %181 = vector.shape_cast %180 : vector<1x128x384xbf16> to vector<128x384xbf16>
    %cst_65 = arith.constant dense<0.000000e+00> : vector<32x384xf32>
    %182 = tpu.matmul %179, %181, %cst_65 {dimension_numbers = #tpu.dot_dimension_numbers<[1], [0], [0], [1], [0, 0, 1, 1], [], []>} : vector<32x128xbf16>, vector<128x384xbf16>, vector<32x384xf32> -> vector<32x384xf32>
    %183 = vector.extract_strided_slice %182 {offsets = [0, 0], sizes = [32, 128], strides = [1, 1]} : vector<32x384xf32> to vector<32x128xf32>
    %184 = arith.truncf %183 : vector<32x128xf32> to vector<32x128xbf16>
    %cst_66 = arith.constant dense<0.000000e+00> : vector<32x128xf32>
    %185 = tpu.matmul %184, %7, %cst_66 {dimension_numbers = #tpu.dot_dimension_numbers<[1], [0], [0], [1], [0, 0, 1, 1], [], []>} : vector<32x128xbf16>, vector<128x128xbf16>, vector<32x128xf32> -> vector<32x128xf32>
    %186 = arith.mulf %183, %2 : vector<32x128xf32>
    %187 = arith.mulf %185, %4 : vector<32x128xf32>
    %188 = arith.addf %186, %187 : vector<32x128xf32>
    %189 = arith.truncf %188 : vector<32x128xf32> to vector<32x128xbf16>
    %190 = vector.extract_strided_slice %182 {offsets = [0, 128], sizes = [32, 128], strides = [1, 1]} : vector<32x384xf32> to vector<32x128xf32>
    %191 = arith.truncf %190 : vector<32x128xf32> to vector<32x128xbf16>
    %cst_67 = arith.constant dense<0.000000e+00> : vector<32x128xf32>
    %192 = tpu.matmul %191, %7, %cst_67 {dimension_numbers = #tpu.dot_dimension_numbers<[1], [0], [0], [1], [0, 0, 1, 1], [], []>} : vector<32x128xbf16>, vector<128x128xbf16>, vector<32x128xf32> -> vector<32x128xf32>
    %193 = arith.mulf %190, %2 : vector<32x128xf32>
    %194 = arith.mulf %192, %4 : vector<32x128xf32>
    %195 = arith.addf %193, %194 : vector<32x128xf32>
    %196 = arith.truncf %195 : vector<32x128xf32> to vector<32x128xbf16>
    %197 = vector.extract_strided_slice %182 {offsets = [0, 256], sizes = [32, 128], strides = [1, 1]} : vector<32x384xf32> to vector<32x128xf32>
    %198 = arith.truncf %197 : vector<32x128xf32> to vector<32x128xbf16>
    %c1_68 = arith.constant 1 : index
    %c0_69 = arith.constant 0 : index
    %c0_70 = arith.constant 0 : index
    %199 = vector.load %arg7[%c1_68, %c0_69, %c0_70] : memref<2x128x128xbf16, #tpu.memory_space<vmem>>, vector<1x128x128xbf16>
    %200 = vector.shape_cast %199 : vector<1x128x128xbf16> to vector<128x128xbf16>
    %201 = vector.extract_strided_slice %189 {offsets = [0, 0], sizes = [32, 32], strides = [1, 1]} : vector<32x128xbf16> to vector<32x32xbf16>
    %202 = vector.extract_strided_slice %196 {offsets = [0, 0], sizes = [32, 32], strides = [1, 1]} : vector<32x128xbf16> to vector<32x32xbf16>
    %cst_71 = arith.constant dense<0.000000e+00> : vector<32x32xf32>
    %203 = tpu.matmul %201, %202, %cst_71 {dimension_numbers = #tpu.dot_dimension_numbers<[1], [1], [0], [0], [0, 0, 1, 0], [], []>} : vector<32x32xbf16>, vector<32x32xbf16>, vector<32x32xf32> -> vector<32x32xf32>
    %cst_72 = arith.constant 0.176776692 : f32
    %204 = vector.broadcast %cst_72 : f32 to vector<32x32xf32>
    %205 = arith.mulf %203, %204 : vector<32x32xf32>
    %206 = arith.addf %205, %5 : vector<32x32xf32>
    %cst_73 = arith.constant dense<0xFF800000> : vector<32xf32>
    %207 = vector.multi_reduction <maximumf>, %206, %cst_73 [1] : vector<32x32xf32> to vector<32xf32>
    %208 = vector.shape_cast %207 : vector<32xf32> to vector<32x1xf32>
    %209 = vector.broadcast %208 : vector<32x1xf32> to vector<32x32xf32>
    %210 = arith.subf %206, %209 : vector<32x32xf32>
    %211 = math.exp %210 : vector<32x32xf32>
    %cst_74 = arith.constant dense<0.000000e+00> : vector<32xf32>
    %212 = vector.multi_reduction <add>, %211, %cst_74 [1] : vector<32x32xf32> to vector<32xf32>
    %213 = vector.shape_cast %212 : vector<32xf32> to vector<32x1xf32>
    %214 = tpu.reciprocal %213 {approx = true} : vector<32x1xf32> -> vector<32x1xf32>
    %215 = vector.broadcast %214 : vector<32x1xf32> to vector<32x32xf32>
    %216 = arith.mulf %211, %215 : vector<32x32xf32>
    %217 = arith.truncf %216 : vector<32x32xf32> to vector<32x32xbf16>
    %218 = vector.extract_strided_slice %198 {offsets = [0, 0], sizes = [32, 32], strides = [1, 1]} : vector<32x128xbf16> to vector<32x32xbf16>
    %cst_75 = arith.constant dense<0.000000e+00> : vector<32x32xf32>
    %219 = tpu.matmul %217, %218, %cst_75 {dimension_numbers = #tpu.dot_dimension_numbers<[1], [0], [0], [1], [0, 0, 1, 1], [], []>} : vector<32x32xbf16>, vector<32x32xbf16>, vector<32x32xf32> -> vector<32x32xf32>
    %220 = arith.truncf %219 : vector<32x32xf32> to vector<32x32xbf16>
    %221 = vector.extract_strided_slice %200 {offsets = [0, 0], sizes = [32, 128], strides = [1, 1]} : vector<128x128xbf16> to vector<32x128xbf16>
    %cst_76 = arith.constant dense<0.000000e+00> : vector<32x128xf32>
    %222 = tpu.matmul %220, %221, %cst_76 {dimension_numbers = #tpu.dot_dimension_numbers<[1], [0], [0], [1], [0, 0, 1, 1], [], []>} : vector<32x32xbf16>, vector<32x128xbf16>, vector<32x128xf32> -> vector<32x128xf32>
    %223 = vector.extract_strided_slice %189 {offsets = [0, 32], sizes = [32, 32], strides = [1, 1]} : vector<32x128xbf16> to vector<32x32xbf16>
    %224 = vector.extract_strided_slice %196 {offsets = [0, 32], sizes = [32, 32], strides = [1, 1]} : vector<32x128xbf16> to vector<32x32xbf16>
    %cst_77 = arith.constant dense<0.000000e+00> : vector<32x32xf32>
    %225 = tpu.matmul %223, %224, %cst_77 {dimension_numbers = #tpu.dot_dimension_numbers<[1], [1], [0], [0], [0, 0, 1, 0], [], []>} : vector<32x32xbf16>, vector<32x32xbf16>, vector<32x32xf32> -> vector<32x32xf32>
    %cst_78 = arith.constant 0.176776692 : f32
    %226 = vector.broadcast %cst_78 : f32 to vector<32x32xf32>
    %227 = arith.mulf %225, %226 : vector<32x32xf32>
    %228 = arith.addf %227, %5 : vector<32x32xf32>
    %cst_79 = arith.constant dense<0xFF800000> : vector<32xf32>
    %229 = vector.multi_reduction <maximumf>, %228, %cst_79 [1] : vector<32x32xf32> to vector<32xf32>
    %230 = vector.shape_cast %229 : vector<32xf32> to vector<32x1xf32>
    %231 = vector.broadcast %230 : vector<32x1xf32> to vector<32x32xf32>
    %232 = arith.subf %228, %231 : vector<32x32xf32>
    %233 = math.exp %232 : vector<32x32xf32>
    %cst_80 = arith.constant dense<0.000000e+00> : vector<32xf32>
    %234 = vector.multi_reduction <add>, %233, %cst_80 [1] : vector<32x32xf32> to vector<32xf32>
    %235 = vector.shape_cast %234 : vector<32xf32> to vector<32x1xf32>
    %236 = tpu.reciprocal %235 {approx = true} : vector<32x1xf32> -> vector<32x1xf32>
    %237 = vector.broadcast %236 : vector<32x1xf32> to vector<32x32xf32>
    %238 = arith.mulf %233, %237 : vector<32x32xf32>
    %239 = arith.truncf %238 : vector<32x32xf32> to vector<32x32xbf16>
    %240 = vector.extract_strided_slice %198 {offsets = [0, 32], sizes = [32, 32], strides = [1, 1]} : vector<32x128xbf16> to vector<32x32xbf16>
    %cst_81 = arith.constant dense<0.000000e+00> : vector<32x32xf32>
    %241 = tpu.matmul %239, %240, %cst_81 {dimension_numbers = #tpu.dot_dimension_numbers<[1], [0], [0], [1], [0, 0, 1, 1], [], []>} : vector<32x32xbf16>, vector<32x32xbf16>, vector<32x32xf32> -> vector<32x32xf32>
    %242 = arith.truncf %241 : vector<32x32xf32> to vector<32x32xbf16>
    %243 = vector.extract_strided_slice %200 {offsets = [32, 0], sizes = [32, 128], strides = [1, 1]} : vector<128x128xbf16> to vector<32x128xbf16>
    %cst_82 = arith.constant dense<0.000000e+00> : vector<32x128xf32>
    %244 = tpu.matmul %242, %243, %cst_82 {dimension_numbers = #tpu.dot_dimension_numbers<[1], [0], [0], [1], [0, 0, 1, 1], [], []>} : vector<32x32xbf16>, vector<32x128xbf16>, vector<32x128xf32> -> vector<32x128xf32>
    %245 = arith.addf %222, %244 : vector<32x128xf32>
    %246 = vector.extract_strided_slice %189 {offsets = [0, 64], sizes = [32, 32], strides = [1, 1]} : vector<32x128xbf16> to vector<32x32xbf16>
    %247 = vector.extract_strided_slice %196 {offsets = [0, 64], sizes = [32, 32], strides = [1, 1]} : vector<32x128xbf16> to vector<32x32xbf16>
    %cst_83 = arith.constant dense<0.000000e+00> : vector<32x32xf32>
    %248 = tpu.matmul %246, %247, %cst_83 {dimension_numbers = #tpu.dot_dimension_numbers<[1], [1], [0], [0], [0, 0, 1, 0], [], []>} : vector<32x32xbf16>, vector<32x32xbf16>, vector<32x32xf32> -> vector<32x32xf32>
    %cst_84 = arith.constant 0.176776692 : f32
    %249 = vector.broadcast %cst_84 : f32 to vector<32x32xf32>
    %250 = arith.mulf %248, %249 : vector<32x32xf32>
    %251 = arith.addf %250, %5 : vector<32x32xf32>
    %cst_85 = arith.constant dense<0xFF800000> : vector<32xf32>
    %252 = vector.multi_reduction <maximumf>, %251, %cst_85 [1] : vector<32x32xf32> to vector<32xf32>
    %253 = vector.shape_cast %252 : vector<32xf32> to vector<32x1xf32>
    %254 = vector.broadcast %253 : vector<32x1xf32> to vector<32x32xf32>
    %255 = arith.subf %251, %254 : vector<32x32xf32>
    %256 = math.exp %255 : vector<32x32xf32>
    %cst_86 = arith.constant dense<0.000000e+00> : vector<32xf32>
    %257 = vector.multi_reduction <add>, %256, %cst_86 [1] : vector<32x32xf32> to vector<32xf32>
    %258 = vector.shape_cast %257 : vector<32xf32> to vector<32x1xf32>
    %259 = tpu.reciprocal %258 {approx = true} : vector<32x1xf32> -> vector<32x1xf32>
    %260 = vector.broadcast %259 : vector<32x1xf32> to vector<32x32xf32>
    %261 = arith.mulf %256, %260 : vector<32x32xf32>
    %262 = arith.truncf %261 : vector<32x32xf32> to vector<32x32xbf16>
    %263 = vector.extract_strided_slice %198 {offsets = [0, 64], sizes = [32, 32], strides = [1, 1]} : vector<32x128xbf16> to vector<32x32xbf16>
    %cst_87 = arith.constant dense<0.000000e+00> : vector<32x32xf32>
    %264 = tpu.matmul %262, %263, %cst_87 {dimension_numbers = #tpu.dot_dimension_numbers<[1], [0], [0], [1], [0, 0, 1, 1], [], []>} : vector<32x32xbf16>, vector<32x32xbf16>, vector<32x32xf32> -> vector<32x32xf32>
    %265 = arith.truncf %264 : vector<32x32xf32> to vector<32x32xbf16>
    %266 = vector.extract_strided_slice %200 {offsets = [64, 0], sizes = [32, 128], strides = [1, 1]} : vector<128x128xbf16> to vector<32x128xbf16>
    %cst_88 = arith.constant dense<0.000000e+00> : vector<32x128xf32>
    %267 = tpu.matmul %265, %266, %cst_88 {dimension_numbers = #tpu.dot_dimension_numbers<[1], [0], [0], [1], [0, 0, 1, 1], [], []>} : vector<32x32xbf16>, vector<32x128xbf16>, vector<32x128xf32> -> vector<32x128xf32>
    %268 = arith.addf %245, %267 : vector<32x128xf32>
    %269 = vector.extract_strided_slice %189 {offsets = [0, 96], sizes = [32, 32], strides = [1, 1]} : vector<32x128xbf16> to vector<32x32xbf16>
    %270 = vector.extract_strided_slice %196 {offsets = [0, 96], sizes = [32, 32], strides = [1, 1]} : vector<32x128xbf16> to vector<32x32xbf16>
    %cst_89 = arith.constant dense<0.000000e+00> : vector<32x32xf32>
    %271 = tpu.matmul %269, %270, %cst_89 {dimension_numbers = #tpu.dot_dimension_numbers<[1], [1], [0], [0], [0, 0, 1, 0], [], []>} : vector<32x32xbf16>, vector<32x32xbf16>, vector<32x32xf32> -> vector<32x32xf32>
    %cst_90 = arith.constant 0.176776692 : f32
    %272 = vector.broadcast %cst_90 : f32 to vector<32x32xf32>
    %273 = arith.mulf %271, %272 : vector<32x32xf32>
    %274 = arith.addf %273, %5 : vector<32x32xf32>
    %cst_91 = arith.constant dense<0xFF800000> : vector<32xf32>
    %275 = vector.multi_reduction <maximumf>, %274, %cst_91 [1] : vector<32x32xf32> to vector<32xf32>
    %276 = vector.shape_cast %275 : vector<32xf32> to vector<32x1xf32>
    %277 = vector.broadcast %276 : vector<32x1xf32> to vector<32x32xf32>
    %278 = arith.subf %274, %277 : vector<32x32xf32>
    %279 = math.exp %278 : vector<32x32xf32>
    %cst_92 = arith.constant dense<0.000000e+00> : vector<32xf32>
    %280 = vector.multi_reduction <add>, %279, %cst_92 [1] : vector<32x32xf32> to vector<32xf32>
    %281 = vector.shape_cast %280 : vector<32xf32> to vector<32x1xf32>
    %282 = tpu.reciprocal %281 {approx = true} : vector<32x1xf32> -> vector<32x1xf32>
    %283 = vector.broadcast %282 : vector<32x1xf32> to vector<32x32xf32>
    %284 = arith.mulf %279, %283 : vector<32x32xf32>
    %285 = arith.truncf %284 : vector<32x32xf32> to vector<32x32xbf16>
    %286 = vector.extract_strided_slice %198 {offsets = [0, 96], sizes = [32, 32], strides = [1, 1]} : vector<32x128xbf16> to vector<32x32xbf16>
    %cst_93 = arith.constant dense<0.000000e+00> : vector<32x32xf32>
    %287 = tpu.matmul %285, %286, %cst_93 {dimension_numbers = #tpu.dot_dimension_numbers<[1], [0], [0], [1], [0, 0, 1, 1], [], []>} : vector<32x32xbf16>, vector<32x32xbf16>, vector<32x32xf32> -> vector<32x32xf32>
    %288 = arith.truncf %287 : vector<32x32xf32> to vector<32x32xbf16>
    %289 = vector.extract_strided_slice %200 {offsets = [96, 0], sizes = [32, 128], strides = [1, 1]} : vector<128x128xbf16> to vector<32x128xbf16>
    %cst_94 = arith.constant dense<0.000000e+00> : vector<32x128xf32>
    %290 = tpu.matmul %288, %289, %cst_94 {dimension_numbers = #tpu.dot_dimension_numbers<[1], [0], [0], [1], [0, 0, 1, 1], [], []>} : vector<32x32xbf16>, vector<32x128xbf16>, vector<32x128xf32> -> vector<32x128xf32>
    %291 = arith.addf %268, %290 : vector<32x128xf32>
    %292 = arith.addf %165, %291 : vector<32x128xf32>
    %293 = vector.extract_strided_slice %6 {offsets = [3, 0], sizes = [1, 128], strides = [1, 1]} : vector<5x128xf32> to vector<1x128xf32>
    %294 = arith.mulf %292, %292 : vector<32x128xf32>
    %cst_95 = arith.constant dense<0.000000e+00> : vector<32xf32>
    %295 = vector.multi_reduction <add>, %294, %cst_95 [1] : vector<32x128xf32> to vector<32xf32>
    %296 = vector.shape_cast %295 : vector<32xf32> to vector<32x1xf32>
    %cst_96 = arith.constant 1.280000e+02 : f32
    %297 = vector.broadcast %cst_96 : f32 to vector<32x1xf32>
    %298 = arith.divf %296, %297 : vector<32x1xf32>
    %cst_97 = arith.constant 9.99999997E-7 : f32
    %299 = vector.broadcast %cst_97 : f32 to vector<32x1xf32>
    %300 = arith.addf %298, %299 : vector<32x1xf32>
    %301 = math.rsqrt %300 : vector<32x1xf32>
    %302 = vector.broadcast %301 : vector<32x1xf32> to vector<32x128xf32>
    %303 = arith.mulf %292, %302 : vector<32x128xf32>
    %304 = vector.broadcast %293 : vector<1x128xf32> to vector<32x128xf32>
    %305 = arith.mulf %303, %304 : vector<32x128xf32>
    %306 = arith.truncf %305 : vector<32x128xf32> to vector<32x128xbf16>
    %c1_98 = arith.constant 1 : index
    %c0_99 = arith.constant 0 : index
    %c0_100 = arith.constant 0 : index
    %307 = vector.load %arg8[%c1_98, %c0_99, %c0_100] : memref<2x128x1024xbf16, #tpu.memory_space<vmem>>, vector<1x128x1024xbf16>
    %308 = vector.shape_cast %307 : vector<1x128x1024xbf16> to vector<128x1024xbf16>
    %cst_101 = arith.constant dense<0.000000e+00> : vector<32x1024xf32>
    %309 = tpu.matmul %306, %308, %cst_101 {dimension_numbers = #tpu.dot_dimension_numbers<[1], [0], [0], [1], [0, 0, 1, 1], [], []>} : vector<32x128xbf16>, vector<128x1024xbf16>, vector<32x1024xf32> -> vector<32x1024xf32>
    %310 = vector.extract_strided_slice %309 {offsets = [0, 0], sizes = [32, 512], strides = [1, 1]} : vector<32x1024xf32> to vector<32x512xf32>
    %311 = vector.extract_strided_slice %309 {offsets = [0, 512], sizes = [32, 512], strides = [1, 1]} : vector<32x1024xf32> to vector<32x512xf32>
    %312 = arith.negf %310 : vector<32x512xf32>
    %313 = math.exp %312 : vector<32x512xf32>
    %cst_102 = arith.constant 1.000000e+00 : f32
    %314 = vector.broadcast %cst_102 : f32 to vector<32x512xf32>
    %315 = arith.addf %314, %313 : vector<32x512xf32>
    %316 = arith.divf %314, %315 : vector<32x512xf32>
    %317 = arith.mulf %310, %316 : vector<32x512xf32>
    %318 = arith.mulf %317, %311 : vector<32x512xf32>
    %319 = arith.truncf %318 : vector<32x512xf32> to vector<32x512xbf16>
    %c1_103 = arith.constant 1 : index
    %c0_104 = arith.constant 0 : index
    %c0_105 = arith.constant 0 : index
    %320 = vector.load %arg9[%c1_103, %c0_104, %c0_105] : memref<2x512x128xbf16, #tpu.memory_space<vmem>>, vector<1x512x128xbf16>
    %321 = vector.shape_cast %320 : vector<1x512x128xbf16> to vector<512x128xbf16>
    %cst_106 = arith.constant dense<0.000000e+00> : vector<32x128xf32>
    %322 = tpu.matmul %319, %321, %cst_106 {dimension_numbers = #tpu.dot_dimension_numbers<[1], [0], [0], [1], [0, 0, 1, 1], [], []>} : vector<32x512xbf16>, vector<512x128xbf16>, vector<32x128xf32> -> vector<32x128xf32>
    %323 = arith.addf %292, %322 : vector<32x128xf32>
    %324 = vector.extract_strided_slice %6 {offsets = [4, 0], sizes = [1, 128], strides = [1, 1]} : vector<5x128xf32> to vector<1x128xf32>
    %325 = arith.mulf %323, %323 : vector<32x128xf32>
    %cst_107 = arith.constant dense<0.000000e+00> : vector<32xf32>
    %326 = vector.multi_reduction <add>, %325, %cst_107 [1] : vector<32x128xf32> to vector<32xf32>
    %327 = vector.shape_cast %326 : vector<32xf32> to vector<32x1xf32>
    %cst_108 = arith.constant 1.280000e+02 : f32
    %328 = vector.broadcast %cst_108 : f32 to vector<32x1xf32>
    %329 = arith.divf %327, %328 : vector<32x1xf32>
    %cst_109 = arith.constant 9.99999997E-7 : f32
    %330 = vector.broadcast %cst_109 : f32 to vector<32x1xf32>
    %331 = arith.addf %329, %330 : vector<32x1xf32>
    %332 = math.rsqrt %331 : vector<32x1xf32>
    %333 = vector.broadcast %332 : vector<32x1xf32> to vector<32x128xf32>
    %334 = arith.mulf %323, %333 : vector<32x128xf32>
    %335 = vector.broadcast %324 : vector<1x128xf32> to vector<32x128xf32>
    %336 = arith.mulf %334, %335 : vector<32x128xf32>
    %337 = arith.truncf %336 : vector<32x128xf32> to vector<32x128xbf16>
    %c0_110 = arith.constant 0 : index
    %c0_111 = arith.constant 0 : index
    %338 = vector.load %arg10[%c0_110, %c0_111] : memref<128x256xbf16, #tpu.memory_space<vmem>>, vector<128x256xbf16>
    %cst_112 = arith.constant dense<0.000000e+00> : vector<32x256xf32>
    %339 = tpu.matmul %337, %338, %cst_112 {dimension_numbers = #tpu.dot_dimension_numbers<[1], [0], [0], [1], [0, 0, 1, 1], [], []>} : vector<32x128xbf16>, vector<128x256xbf16>, vector<32x256xf32> -> vector<32x256xf32>
    %c0_113 = arith.constant 0 : index
    %c0_114 = arith.constant 0 : index
    %340 = vector.load %arg11[%c0_113, %c0_114] : memref<32x256xf32, #tpu.memory_space<vmem>>, vector<32x256xf32>
    tpu.vector_store %arg11[%c0_113, %c0_114], %339 {strides = array<i32>} : memref<32x256xf32, #tpu.memory_space<vmem>>, vector<32x256xf32>,
    return
  }
  func.func @transform_0(%arg0: i32) -> (i32, i32) {
    %c0_i32 = arith.constant 0 : i32
    %c0_i32_0 = arith.constant 0 : i32
    %c0_i32_1 = arith.constant 0 : i32
    return %c0_i32, %c0_i32_0 : i32, i32
  }
  func.func @transform_1(%arg0: i32) -> (i32, i32, i32) {
    %c0_i32 = arith.constant 0 : i32
    %c0_i32_0 = arith.constant 0 : i32
    %c0_i32_1 = arith.constant 0 : i32
    %c0_i32_2 = arith.constant 0 : i32
    return %c0_i32, %c0_i32_0, %c0_i32_1 : i32, i32, i32
  }
  func.func @transform_2(%arg0: i32) -> (i32, i32) {
    %c0_i32 = arith.constant 0 : i32
    %c0_i32_0 = arith.constant 0 : i32
    %c0_i32_1 = arith.constant 0 : i32
    return %c0_i32, %c0_i32_0 : i32, i32
  }
  func.func @transform_3(%arg0: i32) -> (i32, i32) {
    %c0_i32 = arith.constant 0 : i32
    %c0_i32_0 = arith.constant 0 : i32
    %c0_i32_1 = arith.constant 0 : i32
    return %c0_i32, %c0_i32_0 : i32, i32
  }
  func.func @transform_4(%arg0: i32) -> (i32, i32) {
    %c0_i32 = arith.constant 0 : i32
    %c0_i32_0 = arith.constant 0 : i32
    %c0_i32_1 = arith.constant 0 : i32
    return %c0_i32, %c0_i32_0 : i32, i32
  }
  func.func @transform_5(%arg0: i32) -> (i32, i32, i32) {
    %c0_i32 = arith.constant 0 : i32
    %c0_i32_0 = arith.constant 0 : i32
    %c0_i32_1 = arith.constant 0 : i32
    %c0_i32_2 = arith.constant 0 : i32
    return %c0_i32, %c0_i32_0, %c0_i32_1 : i32, i32, i32
  }
  func.func @transform_6(%arg0: i32) -> (i32, i32, i32) {
    %c0_i32 = arith.constant 0 : i32
    %c0_i32_0 = arith.constant 0 : i32
    %c0_i32_1 = arith.constant 0 : i32
    %c0_i32_2 = arith.constant 0 : i32
    return %c0_i32, %c0_i32_0, %c0_i32_1 : i32, i32, i32
  }
  func.func @transform_7(%arg0: i32) -> (i32, i32, i32) {
    %c0_i32 = arith.constant 0 : i32
    %c0_i32_0 = arith.constant 0 : i32
    %c0_i32_1 = arith.constant 0 : i32
    %c0_i32_2 = arith.constant 0 : i32
    return %c0_i32, %c0_i32_0, %c0_i32_1 : i32, i32, i32
  }
  func.func @transform_8(%arg0: i32) -> (i32, i32, i32) {
    %c0_i32 = arith.constant 0 : i32
    %c0_i32_0 = arith.constant 0 : i32
    %c0_i32_1 = arith.constant 0 : i32
    %c0_i32_2 = arith.constant 0 : i32
    return %c0_i32, %c0_i32_0, %c0_i32_1 : i32, i32, i32
  }
  func.func @transform_9(%arg0: i32) -> (i32, i32) {
    %c0_i32 = arith.constant 0 : i32
    %c0_i32_0 = arith.constant 0 : i32
    %c0_i32_1 = arith.constant 0 : i32
    return %c0_i32, %c0_i32_0 : i32, i32
  }
  func.func @transform_10(%arg0: i32) -> (i32, i32) {
    %c0_i32 = arith.constant 0 : i32
    %c0_i32_0 = arith.constant 0 : i32
    %c0_i32_1 = arith.constant 0 : i32
    return %c0_i32, %c0_i32_0 : i32, i32
  }
}

</mosaic_0001>

<llo_original>
// kernel: tpu_custom_call.1
$region0: #{tpu_custom_call.1}
  #allocation0 [shape = 'u32[]', space=smem, size = 0x4, offset = 0x4, fixed_abs, tag = 'smem constant byte address 0x4 - core index']
  #allocation1 [shape = 'u32[144,128]{1,0:T(1,128)}', space=vmem, size = 0x12000, scoped, tag = 'internal scratch']
  %s0 = inlined_call_operand.hbm [shape: f32[32,128], index: 0, kind: input, shape index: {}]
  %s1 = inlined_call_operand.hbm [shape: f32[2,32,128], index: 1, kind: input, shape index: {}]
  %s2 = inlined_call_operand.hbm [shape: f32[32,32], index: 2, kind: input, shape index: {}]
  %s3 = inlined_call_operand.hbm [shape: f32[5,128], index: 3, kind: input, shape index: {}]
  %s4 = inlined_call_operand.hbm [shape: bf16[128,128], index: 4, kind: input, shape index: {}]
  %s5 = inlined_call_operand.hbm [shape: bf16[2,128,384], index: 5, kind: input, shape index: {}]
  %s6 = inlined_call_operand.hbm [shape: bf16[2,128,128], index: 6, kind: input, shape index: {}]
  %s7 = inlined_call_operand.hbm [shape: bf16[2,128,1024], index: 7, kind: input, shape index: {}]
  %s8 = inlined_call_operand.hbm [shape: bf16[2,512,128], index: 8, kind: input, shape index: {}]
  %s9 = inlined_call_operand.hbm [shape: bf16[128,256], index: 9, kind: input, shape index: {}]
  %s10 = inlined_call_operand.hbm [shape: f32[32,256], index: 10, kind: output, shape index: {}]
  %s11 = sld [smem:[#allocation0]]
  $region90: #{tpu_custom_call.1} parent=0
    _
  %s13 = ssub.s32 1, %s11
  %s14 = scalar_select 0, %s13, %s11
  $region1: #{tpu_custom_call.1} parent=0
    #allocation2 [shape = 'u8[16384]{0}', space=vmem, size = 0x4000, scoped, tag = 'input window, operand 0, single buffered']
    #allocation3 [shape = 's32[1]{0}', space=sflag, size = 0x4, scoped, tag = 'scoped memory for tpu_custom_call.1']
    #allocation4 [shape = 's32[1]{0}', space=sflag, size = 0x4, scoped, tag = 'scoped memory for tpu_custom_call.1']
    #allocation5 [shape = 'u8[32768]{0}', space=vmem, size = 0x8000, scoped, tag = 'input window, operand 1, single buffered']
    #allocation6 [shape = 's32[1]{0}', space=sflag, size = 0x4, scoped, tag = 'scoped memory for tpu_custom_call.1']
    #allocation7 [shape = 'u8[16384]{0}', space=vmem, size = 0x4000, scoped, tag = 'input window, operand 2, single buffered']
    #allocation8 [shape = 'u8[4096]{0}', space=vmem, size = 0x1000, scoped, tag = 'input window, operand 3, single buffered']
    #allocation9 [shape = 's32[1]{0}', space=sflag, size = 0x4, scoped, tag = 'scoped memory for tpu_custom_call.1']
    #allocation10 [shape = 'u8[32768]{0}', space=vmem, size = 0x8000, scoped, tag = 'input window, operand 4, single buffered']
    #allocation11 [shape = 'u8[196608]{0}', space=vmem, size = 0x30000, scoped, tag = 'input window, operand 5, single buffered']
    #allocation12 [shape = 's32[1]{0}', space=sflag, size = 0x4, scoped, tag = 'scoped memory for tpu_custom_call.1']
    #allocation13 [shape = 'u8[65536]{0}', space=vmem, size = 0x10000, scoped, tag = 'input window, operand 6, single buffered']
    #allocation14 [shape = 'u8[524288]{0}', space=vmem, size = 0x80000, scoped, tag = 'input window, operand 7, single buffered']
    #allocation15 [shape = 's32[1]{0}', space=sflag, size = 0x4, scoped, tag = 'scoped memory for tpu_custom_call.1']
    #allocation16 [shape = 'u8[262144]{0}', space=vmem, size = 0x40000, scoped, tag = 'input window, operand 8, single buffered']
    #allocation17 [shape = 'u8[65536]{0}', space=vmem, size = 0x10000, scoped, tag = 'input window, operand 9, single buffered']
    #allocation18 [shape = 's32[1]{0}', space=sflag, size = 0x4, scoped, tag = 'scoped memory for tpu_custom_call.1']
    #allocation19 [shape = 'u8[32768]{0}', space=vmem, size = 0x8000, scoped, tag = 'output window, operand 0, single buffered']
    %15 = vsyncpa [#allocation3], 0
    %16 = vsyncpa [#allocation6], 0
    %17 = vsyncpa [#allocation9], 0
    %18 = vsyncpa [#allocation12], 0
    %19 = vsyncpa [#allocation15], 0
    %20 = vsyncpa [#allocation18], 0
    %21 = vsyncpa [#allocation4], 0
    // Predicated region
    $region2: #{tpu_custom_call.1} parent=1 // pred_check
      _
    $region3: #{tpu_custom_call.1} parent=1 // pred_check_branch
      %23 = sbr.rel (0) target = $region5
    $region4: #{tpu_custom_call.1} parent=1 // pred_region
      %s25 = ssub.s32 512, 512
      %26 = vsyncadd [#allocation3], %s25
      %s27 = sshll.u32 [#allocation2], 4
      %s28 = int_to_ptr.vmem [resolvable:$true] %s27
      %33 = dma.hbm_to_vmem [thread:$0]  %s0, 512, %s28, [#allocation3], 128, 128, 8
    $region5: #{tpu_custom_call.1} parent=1 // pred_fallthru
      _
    // Predicated region
    $region6: #{tpu_custom_call.1} parent=1 // pred_check
      _
    $region7: #{tpu_custom_call.1} parent=1 // pred_check_branch
      %35 = sbr.rel (0) target = $region9
    $region8: #{tpu_custom_call.1} parent=1 // pred_region
      %s37 = ssub.s32 1024, 1024
      %38 = vsyncadd [#allocation6], %s37
      %s39 = sshll.u32 [#allocation5], 4
      %s40 = int_to_ptr.vmem [resolvable:$true] %s39
      %45 = dma.hbm_to_vmem [thread:$0]  %s1, 1024, %s40, [#allocation6], 128, 128, 8
    $region9: #{tpu_custom_call.1} parent=1 // pred_fallthru
      _
    // Predicated region
    $region10: #{tpu_custom_call.1} parent=1 // pred_check
      _
    $region11: #{tpu_custom_call.1} parent=1 // pred_check_branch
      %47 = sbr.rel (0) target = $region13
    $region12: #{tpu_custom_call.1} parent=1 // pred_region
      %s49 = ssub.s32 512, 512
      %50 = vsyncadd [#allocation6], %s49
      %s51 = sshll.u32 [#allocation7], 4
      %s52 = int_to_ptr.vmem [resolvable:$true] %s51
      %57 = dma.hbm_to_vmem [thread:$0]  %s2, 512, %s52, [#allocation6], 128, 128, 8
    $region13: #{tpu_custom_call.1} parent=1 // pred_fallthru
      _
    // Predicated region
    $region14: #{tpu_custom_call.1} parent=1 // pred_check
      _
    $region15: #{tpu_custom_call.1} parent=1 // pred_check_branch
      %59 = sbr.rel (0) target = $region17
    $region16: #{tpu_custom_call.1} parent=1 // pred_region
      %s61 = ssub.s32 128, 128
      %62 = vsyncadd [#allocation9], %s61
      %s64 = sshll.u32 [#allocation8], 4
      %s65 = int_to_ptr.vmem [resolvable:$true] %s64
      %67 = dma.hbm_to_vmem [thread:$0]  %s3, 128, %s65, [#allocation9]
    $region17: #{tpu_custom_call.1} parent=1 // pred_fallthru
      _
    // Predicated region
    $region18: #{tpu_custom_call.1} parent=1 // pred_check
      _
    $region19: #{tpu_custom_call.1} parent=1 // pred_check_branch
      %69 = sbr.rel (0) target = $region21
    $region20: #{tpu_custom_call.1} parent=1 // pred_region
      %s71 = ssub.s32 1024, 1024
      %72 = vsyncadd [#allocation9], %s71
      %s73 = sshll.u32 [#allocation10], 4
      %s74 = int_to_ptr.vmem [resolvable:$true] %s73
      %79 = dma.hbm_to_vmem [thread:$0]  %s4, 1024, %s74, [#allocation9], 64, 64, 4
    $region21: #{tpu_custom_call.1} parent=1 // pred_fallthru
      _
    // Predicated region
    $region22: #{tpu_custom_call.1} parent=1 // pred_check
      _
    $region23: #{tpu_custom_call.1} parent=1 // pred_check_branch
      %81 = sbr.rel (0) target = $region25
    $region24: #{tpu_custom_call.1} parent=1 // pred_region
      %s83 = ssub.s32 6144, 6144
      %84 = vsyncadd [#allocation12], %s83
      %s85 = sshll.u32 [#allocation11], 4
      %s86 = int_to_ptr.vmem [resolvable:$true] %s85
      %91 = dma.hbm_to_vmem [thread:$0]  %s5, 6144, %s86, [#allocation12], 192, 192, 12
    $region25: #{tpu_custom_call.1} parent=1 // pred_fallthru
      _
    // Predicated region
    $region26: #{tpu_custom_call.1} parent=1 // pred_check
      _
    $region27: #{tpu_custom_call.1} parent=1 // pred_check_branch
      %93 = sbr.rel (0) target = $region29
    $region28: #{tpu_custom_call.1} parent=1 // pred_region
      %s95 = ssub.s32 2048, 2048
      %96 = vsyncadd [#allocation12], %s95
      %s97 = sshll.u32 [#allocation13], 4
      %s98 = int_to_ptr.vmem [resolvable:$true] %s97
      %103 = dma.hbm_to_vmem [thread:$0]  %s6, 2048, %s98, [#allocation12], 64, 64, 4
    $region29: #{tpu_custom_call.1} parent=1 // pred_fallthru
      _
    // Predicated region
    $region30: #{tpu_custom_call.1} parent=1 // pred_check
      _
    $region31: #{tpu_custom_call.1} parent=1 // pred_check_branch
      %105 = sbr.rel (0) target = $region33
    $region32: #{tpu_custom_call.1} parent=1 // pred_region
      %s107 = ssub.s32 16384, 16384
      %108 = vsyncadd [#allocation15], %s107
      %s109 = sshll.u32 [#allocation14], 4
      %s110 = int_to_ptr.vmem [resolvable:$true] %s109
      %115 = dma.hbm_to_vmem [thread:$0]  %s7, 16384, %s110, [#allocation15], 512, 512, 32
    $region33: #{tpu_custom_call.1} parent=1 // pred_fallthru
      _
    // Predicated region
    $region34: #{tpu_custom_call.1} parent=1 // pred_check
      _
    $region35: #{tpu_custom_call.1} parent=1 // pred_check_branch
      %117 = sbr.rel (0) target = $region37
    $region36: #{tpu_custom_call.1} parent=1 // pred_region
      %s119 = ssub.s32 8192, 8192
      %120 = vsyncadd [#allocation15], %s119
      %s121 = sshll.u32 [#allocation16], 4
      %s122 = int_to_ptr.vmem [resolvable:$true] %s121
      %127 = dma.hbm_to_vmem [thread:$0]  %s8, 8192, %s122, [#allocation15], 64, 64, 4
    $region37: #{tpu_custom_call.1} parent=1 // pred_fallthru
      _
    // Predicated region
    $region38: #{tpu_custom_call.1} parent=1 // pred_check
      _
    $region39: #{tpu_custom_call.1} parent=1 // pred_check_branch
      %129 = sbr.rel (0) target = $region41
    $region40: #{tpu_custom_call.1} parent=1 // pred_region
      %s131 = ssub.s32 2048, 2048
      %132 = vsyncadd [#allocation18], %s131
      %s133 = sshll.u32 [#allocation17], 4
      %s134 = int_to_ptr.vmem [resolvable:$true] %s133
      %139 = dma.hbm_to_vmem [thread:$0]  %s9, 2048, %s134, [#allocation18], 128, 128, 8
    $region41: #{tpu_custom_call.1} parent=1 // pred_fallthru
      _
    // Predicated region
    $region42: #{tpu_custom_call.1} parent=1 // pred_check
      _
    $region43: #{tpu_custom_call.1} parent=1 // pred_check_branch
      %141 = sbr.rel (0) target = $region45
    $region44: #{tpu_custom_call.1} parent=1 // pred_region
      %142 = dma.done [#allocation3], 512
    $region45: #{tpu_custom_call.1} parent=1 // pred_fallthru
      _
    // Predicated region
    $region46: #{tpu_custom_call.1} parent=1 // pred_check
      _
    $region47: #{tpu_custom_call.1} parent=1 // pred_check_branch
      %144 = sbr.rel (0) target = $region49
    $region48: #{tpu_custom_call.1} parent=1 // pred_region
      %145 = dma.done [#allocation6], 1024
    $region49: #{tpu_custom_call.1} parent=1 // pred_fallthru
      _
    // Predicated region
    $region50: #{tpu_custom_call.1} parent=1 // pred_check
      _
    $region51: #{tpu_custom_call.1} parent=1 // pred_check_branch
      %147 = sbr.rel (0) target = $region53
    $region52: #{tpu_custom_call.1} parent=1 // pred_region
      %148 = dma.done [#allocation6], 512
    $region53: #{tpu_custom_call.1} parent=1 // pred_fallthru
      _
    // Predicated region
    $region54: #{tpu_custom_call.1} parent=1 // pred_check
      _
    $region55: #{tpu_custom_call.1} parent=1 // pred_check_branch
      %150 = sbr.rel (0) target = $region57
    $region56: #{tpu_custom_call.1} parent=1 // pred_region
      %151 = dma.done [#allocation9], 128
    $region57: #{tpu_custom_call.1} parent=1 // pred_fallthru
      _
    // Predicated region
    $region58: #{tpu_custom_call.1} parent=1 // pred_check
      _
    $region59: #{tpu_custom_call.1} parent=1 // pred_check_branch
      %153 = sbr.rel (0) target = $region61
    $region60: #{tpu_custom_call.1} parent=1 // pred_region
      %154 = dma.done [#allocation9], 1024
    $region61: #{tpu_custom_call.1} parent=1 // pred_fallthru
      _
    // Predicated region
    $region62: #{tpu_custom_call.1} parent=1 // pred_check
      _
    $region63: #{tpu_custom_call.1} parent=1 // pred_check_branch
      %156 = sbr.rel (0) target = $region65
    $region64: #{tpu_custom_call.1} parent=1 // pred_region
      %157 = dma.done [#allocation12], 6144
    $region65: #{tpu_custom_call.1} parent=1 // pred_fallthru
      _
    // Predicated region
    $region66: #{tpu_custom_call.1} parent=1 // pred_check
      _
    $region67: #{tpu_custom_call.1} parent=1 // pred_check_branch
      %159 = sbr.rel (0) target = $region69
    $region68: #{tpu_custom_call.1} parent=1 // pred_region
      %160 = dma.done [#allocation12], 2048
    $region69: #{tpu_custom_call.1} parent=1 // pred_fallthru
      _
    // Predicated region
    $region70: #{tpu_custom_call.1} parent=1 // pred_check
      _
    $region71: #{tpu_custom_call.1} parent=1 // pred_check_branch
      %162 = sbr.rel (0) target = $region73
    $region72: #{tpu_custom_call.1} parent=1 // pred_region
      %163 = dma.done [#allocation15], 16384
    $region73: #{tpu_custom_call.1} parent=1 // pred_fallthru
      _
    // Predicated region
    $region74: #{tpu_custom_call.1} parent=1 // pred_check
      _
    $region75: #{tpu_custom_call.1} parent=1 // pred_check_branch
      %165 = sbr.rel (0) target = $region77
    $region76: #{tpu_custom_call.1} parent=1 // pred_region
      %166 = dma.done [#allocation15], 8192
    $region77: #{tpu_custom_call.1} parent=1 // pred_fallthru
      _
    // Predicated region
    $region78: #{tpu_custom_call.1} parent=1 // pred_check
      _
    $region79: #{tpu_custom_call.1} parent=1 // pred_check_branch
      %168 = sbr.rel (0) target = $region81
    $region80: #{tpu_custom_call.1} parent=1 // pred_region
      %169 = dma.done [#allocation18], 2048
    $region81: #{tpu_custom_call.1} parent=1 // pred_fallthru
      _
    %v171 = vld [vmem:[#allocation2] sm:$0xff]
    %v172 = vld [vmem:[#allocation2 + $0x8] sm:$0xff]
    %v173 = vld [vmem:[#allocation2 + $0x10] sm:$0xff]
    %v174 = vld [vmem:[#allocation2 + $0x18] sm:$0xff]
    %v175 = vld [vmem:[#allocation5] sm:$0xff]
    %v176 = vld [vmem:[#allocation5 + $0x8] sm:$0xff]
    %v177 = vld [vmem:[#allocation5 + $0x10] sm:$0xff]
    %v178 = vld [vmem:[#allocation5 + $0x18] sm:$0xff]
    %s179 = scalar_lea.vmem [#allocation5], 32
    %v180 = vld [vmem:[%s179] sm:$0xff]
    %v181 = vld [vmem:[%s179 + $0x8] sm:$0xff]
    %v182 = vld [vmem:[%s179 + $0x10] sm:$0xff]
    %v183 = vld [vmem:[%s179 + $0x18] sm:$0xff]
    %v184 = vld [vmem:[#allocation7] sm:$0xff]
    %v185 = vld [vmem:[#allocation7 + $0x8] sm:$0xff]
    %v186 = vld [vmem:[#allocation7 + $0x10] sm:$0xff]
    %v187 = vld [vmem:[#allocation7 + $0x18] sm:$0xff]
    %v188 = vld [vmem:[#allocation8] sm:$0x1f]
    %v189 = vld [vmem:[#allocation10] sm:$0xf]
    %v190 = vld [vmem:[#allocation10 + $0x4] sm:$0xf]
    %v191 = vld [vmem:[#allocation10 + $0x8] sm:$0xf]
    %v192 = vld [vmem:[#allocation10 + $0xc] sm:$0xf]
    %v193 = vld [vmem:[#allocation10 + $0x10] sm:$0xf]
    %v194 = vld [vmem:[#allocation10 + $0x14] sm:$0xf]
    %v195 = vld [vmem:[#allocation10 + $0x18] sm:$0xf]
    %v196 = vld [vmem:[#allocation10 + $0x1c] sm:$0xf]
    %v197 = vld [vmem:[#allocation10 + $0x20] sm:$0xf]
    %v198 = vld [vmem:[#allocation10 + $0x24] sm:$0xf]
    %v199 = vld [vmem:[#allocation10 + $0x28] sm:$0xf]
    %v200 = vld [vmem:[#allocation10 + $0x2c] sm:$0xf]
    %v201 = vld [vmem:[#allocation10 + $0x30] sm:$0xf]
    %v202 = vld [vmem:[#allocation10 + $0x34] sm:$0xf]
    %v203 = vld [vmem:[#allocation10 + $0x38] sm:$0xf]
    %v204 = vld [vmem:[#allocation10 + $0x3c] sm:$0xf]
    %v205 = vmul.f32 %v171, %v171
    %v206 = vmul.f32 %v172, %v172
    %v207 = vmul.f32 %v173, %v173
    %v208 = vmul.f32 %v174, %v174
    %209 = vadd.xlane.f32.xlu0 %v205
    %v210 = vpop.xlane.xlu0 %209
    %211 = vadd.xlane.f32.xlu0 %v206
    %v212 = vpop.xlane.xlu0 %211
    %213 = vadd.xlane.f32.xlu0 %v207
    %v214 = vpop.xlane.xlu0 %213
    %215 = vadd.xlane.f32.xlu0 %v208
    %v216 = vpop.xlane.xlu0 %215
    %v217 = vrcp.pop 128.0
    %v218 = vmul.f32 %v210, %v217
    %v219 = vmul.f32 %v212, %v217
    %v220 = vmul.f32 %v214, %v217
    %v221 = vmul.f32 %v216, %v217
    %v222 = vadd.f32 %v218, 1e-06
    %v223 = vadd.f32 %v219, 1e-06
    %v224 = vadd.f32 %v220, 1e-06
    %v225 = vadd.f32 %v221, 1e-06
    %v226 = vrsqrt.pop %v222
    %v227 = vrsqrt.pop %v223
    %v228 = vrsqrt.pop %v224
    %v229 = vrsqrt.pop %v225
    %v230 = vmul.f32 %v171, %v226
    %v231 = vmul.f32 %v172, %v227
    %v232 = vmul.f32 %v173, %v228
    %v233 = vmul.f32 %v174, %v229
    %v234 = vlaneseq
    %v235 = vshrl.u32 %v234, 7
    %v236 = vsub.s32 0, %v235
    %v237 = vrot.slane %v188, %v236
    %v238 = vmul.f32 %v230, %v237
    %v239 = vmul.f32 %v231, %v237
    %v240 = vmul.f32 %v232, %v237
    %v241 = vmul.f32 %v233, %v237
    %v242 = vpack.c.bf16 %v239, %v238
    %v243 = vpack.c.bf16 %v241, %v240
    %v244 = vld [vmem:[#allocation11] sm:$0xff]
    %v245 = vld [vmem:[#allocation11 + $0x8] sm:$0xf]
    %v246 = vld [vmem:[#allocation11 + $0xc] sm:$0xff]
    %v247 = vld [vmem:[#allocation11 + $0x14] sm:$0xf]
    %v248 = vld [vmem:[#allocation11 + $0x18] sm:$0xff]
    %v249 = vld [vmem:[#allocation11 + $0x20] sm:$0xf]
    %v250 = vld [vmem:[#allocation11 + $0x24] sm:$0xff]
    %v251 = vld [vmem:[#allocation11 + $0x2c] sm:$0xf]
    %v252 = vld [vmem:[#allocation11 + $0x30] sm:$0xff]
    %v253 = vld [vmem:[#allocation11 + $0x38] sm:$0xf]
    %v254 = vld [vmem:[#allocation11 + $0x3c] sm:$0xff]
    %v255 = vld [vmem:[#allocation11 + $0x44] sm:$0xf]
    %v256 = vld [vmem:[#allocation11 + $0x48] sm:$0xff]
    %v257 = vld [vmem:[#allocation11 + $0x50] sm:$0xf]
    %v258 = vld [vmem:[#allocation11 + $0x54] sm:$0xff]
    %v259 = vld [vmem:[#allocation11 + $0x5c] sm:$0xf]
    %v260 = vld [vmem:[#allocation11 + $0x60] sm:$0xff]
    %v261 = vld [vmem:[#allocation11 + $0x68] sm:$0xf]
    %v262 = vld [vmem:[#allocation11 + $0x6c] sm:$0xff]
    %v263 = vld [vmem:[#allocation11 + $0x74] sm:$0xf]
    %v264 = vld [vmem:[#allocation11 + $0x78] sm:$0xff]
    %v265 = vld [vmem:[#allocation11 + $0x80] sm:$0xf]
    %v266 = vld [vmem:[#allocation11 + $0x84] sm:$0xff]
    %v267 = vld [vmem:[#allocation11 + $0x8c] sm:$0xf]
    %v268 = vld [vmem:[#allocation11 + $0x90] sm:$0xff]
    %v269 = vld [vmem:[#allocation11 + $0x98] sm:$0xf]
    %v270 = vld [vmem:[#allocation11 + $0x9c] sm:$0xff]
    %v271 = vld [vmem:[#allocation11 + $0xa4] sm:$0xf]
    %v272 = vld [vmem:[#allocation11 + $0xa8] sm:$0xff]
    %v273 = vld [vmem:[#allocation11 + $0xb0] sm:$0xf]
    %v274 = vld [vmem:[#allocation11 + $0xb4] sm:$0xff]
    %v275 = vld [vmem:[#allocation11 + $0xbc] sm:$0xf]
    %v308 = vunpack.c.l.b16 %v244
    %v309 = vunpack.c.h.b16 %v244
    %v310 = vunpack.c.l.b16 %v245
    %v311 = vunpack.c.l.b16 %v246
    %v312 = vunpack.c.h.b16 %v246
    %v313 = vunpack.c.l.b16 %v247
    %v314 = vunpack.c.l.b16 %v248
    %v315 = vunpack.c.h.b16 %v248
    %v316 = vunpack.c.l.b16 %v249
    %v317 = vunpack.c.l.b16 %v250
    %v318 = vunpack.c.h.b16 %v250
    %v319 = vunpack.c.l.b16 %v251
    %v320 = vunpack.c.l.b16 %v252
    %v321 = vunpack.c.h.b16 %v252
    %v322 = vunpack.c.l.b16 %v253
    %v323 = vunpack.c.l.b16 %v254
    %v324 = vunpack.c.h.b16 %v254
    %v325 = vunpack.c.l.b16 %v255
    %v326 = vunpack.c.l.b16 %v256
    %v327 = vunpack.c.h.b16 %v256
    %v328 = vunpack.c.l.b16 %v257
    %v329 = vunpack.c.l.b16 %v258
    %v330 = vunpack.c.h.b16 %v258
    %v331 = vunpack.c.l.b16 %v259
    %v332 = vunpack.c.l.b16 %v260
    %v333 = vunpack.c.h.b16 %v260
    %v334 = vunpack.c.l.b16 %v261
    %v335 = vunpack.c.l.b16 %v262
    %v336 = vunpack.c.h.b16 %v262
    %v337 = vunpack.c.l.b16 %v263
    %v338 = vunpack.c.l.b16 %v264
    %v339 = vunpack.c.h.b16 %v264
    %v340 = vunpack.c.l.b16 %v265
    %v341 = vunpack.c.l.b16 %v266
    %v342 = vunpack.c.h.b16 %v266
    %v343 = vunpack.c.l.b16 %v267
    %v344 = vunpack.c.l.b16 %v268
    %v345 = vunpack.c.h.b16 %v268
    %v346 = vunpack.c.l.b16 %v269
    %v347 = vunpack.c.l.b16 %v270
    %v348 = vunpack.c.h.b16 %v270
    %v349 = vunpack.c.l.b16 %v271
    %v350 = vunpack.c.l.b16 %v272
    %v351 = vunpack.c.h.b16 %v272
    %v352 = vunpack.c.l.b16 %v273
    %v353 = vunpack.c.l.b16 %v274
    %v354 = vunpack.c.h.b16 %v274
    %v355 = vunpack.c.l.b16 %v275
    %v356 = vpack.c.b16 %v311, %v308
    %v357 = vpack.c.b16 %v312, %v309
    %v358 = vpack.c.b16 %v313, %v310
    %v359 = vpack.c.b16 %v317, %v314
    %v360 = vpack.c.b16 %v318, %v315
    %v361 = vpack.c.b16 %v319, %v316
    %v362 = vpack.c.b16 %v323, %v320
    %v363 = vpack.c.b16 %v324, %v321
    %v364 = vpack.c.b16 %v325, %v322
    %v365 = vpack.c.b16 %v329, %v326
    %v366 = vpack.c.b16 %v330, %v327
    %v367 = vpack.c.b16 %v331, %v328
    %v368 = vpack.c.b16 %v335, %v332
    %v369 = vpack.c.b16 %v336, %v333
    %v370 = vpack.c.b16 %v337, %v334
    %v371 = vpack.c.b16 %v341, %v338
    %v372 = vpack.c.b16 %v342, %v339
    %v373 = vpack.c.b16 %v343, %v340
    %v374 = vpack.c.b16 %v347, %v344
    %v375 = vpack.c.b16 %v348, %v345
    %v376 = vpack.c.b16 %v349, %v346
    %v377 = vpack.c.b16 %v353, %v350
    %v378 = vpack.c.b16 %v354, %v351
    %v379 = vpack.c.b16 %v355, %v352
    %404 = vmatprep.subr.bf16.mxu0 %v378
    %405 = vmatpush1.bf16.msra.mxu0 %v377
    %406 = vmatprep.subr.bf16.mxu0 %v375
    %407 = vmatpush1.bf16.msra.mxu0 %v374
    %408 = vmatprep.subr.bf16.mxu0 %v372
    %409 = vmatpush1.bf16.msra.mxu0 %v371
    %410 = vmatprep.subr.bf16.mxu0 %v369
    %411 = vmatpush1.bf16.msra.mxu0 %v368
    %412 = vmatprep.subr.bf16.mxu0 %v366
    %413 = vmatpush1.bf16.msra.mxu0 %v365
    %414 = vmatprep.subr.bf16.mxu0 %v363
    %415 = vmatpush1.bf16.msra.mxu0 %v362
    %416 = vmatprep.subr.bf16.mxu0 %v360
    %417 = vmatpush1.bf16.msra.mxu0 %v359
    %418 = vmatprep.subr.bf16.mxu0 %v357
    %419 = vmatpush1.bf16.msra.mxu0 %v356
    %420 = vmatprep.subr.bf16.mxu0 0
    %421 = vmatpush2.bf16.msra.mxu0 0
    %422 = vmatprep.subr.bf16.mxu0 0
    %423 = vmatpush2.bf16.msra.mxu0 0
    %424 = vmatprep.subr.bf16.mxu0 0
    %425 = vmatpush2.bf16.msra.mxu0 0
    %426 = vmatprep.subr.bf16.mxu0 0
    %427 = vmatpush2.bf16.msra.mxu0 0
    %428 = vmatprep.subr.bf16.mxu0 0
    %429 = vmatpush2.bf16.msra.mxu0 0
    %430 = vmatprep.subr.bf16.mxu0 0
    %431 = vmatpush2.bf16.msra.mxu0 0
    %432 = vmatprep.subr.bf16.mxu0 0
    %433 = vmatpush2.bf16.msra.mxu0 0
    %434 = vmatprep.subr.bf16.mxu0 0
    %435 = vmatpush2.bf16.msra.mxu0 0
    %436 = vmatprep.mubr.bf16.mxu0 0
    %437 = vmatmul.mubr.bf16.gmra.mxu0 %v242
    %v438 = vpop.f32.mrf.mxu0
    %v439 = vadd.f32 0.0, %v438
    %v440 = vpop.f32.mrf.mxu0
    %v441 = vadd.f32 0.0, %v440
    %v442 = vpop.f32.mrf.mxu0
    %v443 = vadd.f32 0.0, %v442
    %v444 = vpop.f32.mrf.mxu0
    %v445 = vadd.f32 0.0, %v444
    %446 = vmatprep.mubr.bf16.mxu0 0
    %447 = vmatmul.mubr.bf16.gmra.mxu0 %v243
    %v448 = vpop.f32.mrf.mxu0
    %v449 = vadd.f32 0.0, %v448
    %v450 = vpop.f32.mrf.mxu0
    %v451 = vadd.f32 0.0, %v450
    %v452 = vpop.f32.mrf.mxu0
    %v453 = vadd.f32 0.0, %v452
    %v454 = vpop.f32.mrf.mxu0
    %v455 = vadd.f32 0.0, %v454
    %456 = vdwg.mxu0
    %457 = vmatprep.subr.bf16.mxu0 0
    %458 = vmatpush1.bf16.msra.mxu0 %v379
    %459 = vmatprep.subr.bf16.mxu0 0
    %460 = vmatpush1.bf16.msra.mxu0 %v376
    %461 = vmatprep.subr.bf16.mxu0 0
    %462 = vmatpush1.bf16.msra.mxu0 %v373
    %463 = vmatprep.subr.bf16.mxu0 0
    %464 = vmatpush1.bf16.msra.mxu0 %v370
    %465 = vmatprep.subr.bf16.mxu0 0
    %466 = vmatpush1.bf16.msra.mxu0 %v367
    %467 = vmatprep.subr.bf16.mxu0 0
    %468 = vmatpush1.bf16.msra.mxu0 %v364
    %469 = vmatprep.subr.bf16.mxu0 0
    %470 = vmatpush1.bf16.msra.mxu0 %v361
    %471 = vmatprep.subr.bf16.mxu0 0
    %472 = vmatpush1.bf16.msra.mxu0 %v358
    %473 = vmatprep.subr.bf16.mxu0 0
    %474 = vmatpush2.bf16.msra.mxu0 0
    %475 = vmatprep.subr.bf16.mxu0 0
    %476 = vmatpush2.bf16.msra.mxu0 0
    %477 = vmatprep.subr.bf16.mxu0 0
    %478 = vmatpush2.bf16.msra.mxu0 0
    %479 = vmatprep.subr.bf16.mxu0 0
    %480 = vmatpush2.bf16.msra.mxu0 0
    %481 = vmatprep.subr.bf16.mxu0 0
    %482 = vmatpush2.bf16.msra.mxu0 0
    %483 = vmatprep.subr.bf16.mxu0 0
    %484 = vmatpush2.bf16.msra.mxu0 0
    %485 = vmatprep.subr.bf16.mxu0 0
    %486 = vmatpush2.bf16.msra.mxu0 0
    %487 = vmatprep.subr.bf16.mxu0 0
    %488 = vmatpush2.bf16.msra.mxu0 0
    %489 = vmatprep.mubr.bf16.mxu0 0
    %490 = vmatmul.mubr.bf16.gmra.mxu0 %v242
    %v491 = vpop.f32.mrf.mxu0
    %v492 = vadd.f32 0.0, %v491
    %v493 = vpop.f32.mrf.mxu0
    %v494 = vpop.f32.mrf.mxu0
    %v495 = vadd.f32 0.0, %v494
    %v496 = vpop.f32.mrf.mxu0
    %497 = vmatprep.mubr.bf16.mxu0 0
    %498 = vmatmul.mubr.bf16.gmra.mxu0 %v243
    %v499 = vpop.f32.mrf.mxu0
    %v500 = vadd.f32 0.0, %v499
    %v501 = vpop.f32.mrf.mxu0
    %v502 = vpop.f32.mrf.mxu0
    %v503 = vadd.f32 0.0, %v502
    %v504 = vpop.f32.mrf.mxu0
    %505 = vdwg.mxu0
    %v506 = vpack.c.bf16 %v443, %v439
    %v507 = vpack.c.bf16 %v453, %v449
    %v524 = vunpack.c.l.b16 %v189
    %v525 = vunpack.c.l.b16 %v190
    %v526 = vunpack.c.l.b16 %v191
    %v527 = vunpack.c.l.b16 %v192
    %v528 = vunpack.c.l.b16 %v193
    %v529 = vunpack.c.l.b16 %v194
    %v530 = vunpack.c.l.b16 %v195
    %v531 = vunpack.c.l.b16 %v196
    %v532 = vunpack.c.l.b16 %v197
    %v533 = vunpack.c.l.b16 %v198
    %v534 = vunpack.c.l.b16 %v199
    %v535 = vunpack.c.l.b16 %v200
    %v536 = vunpack.c.l.b16 %v201
    %v537 = vunpack.c.l.b16 %v202
    %v538 = vunpack.c.l.b16 %v203
    %v539 = vunpack.c.l.b16 %v204
    %v540 = vpack.c.b16 %v525, %v524
    %v541 = vpack.c.b16 %v527, %v526
    %v542 = vpack.c.b16 %v529, %v528
    %v543 = vpack.c.b16 %v531, %v530
    %v544 = vpack.c.b16 %v533, %v532
    %v545 = vpack.c.b16 %v535, %v534
    %v546 = vpack.c.b16 %v537, %v536
    %v547 = vpack.c.b16 %v539, %v538
    %556 = vmatprep.subr.bf16.mxu0 0
    %557 = vmatpush1.bf16.msra.mxu0 %v547
    %558 = vmatprep.subr.bf16.mxu0 0
    %559 = vmatpush1.bf16.msra.mxu0 %v546
    %560 = vmatprep.subr.bf16.mxu0 0
    %561 = vmatpush1.bf16.msra.mxu0 %v545
    %562 = vmatprep.subr.bf16.mxu0 0
    %563 = vmatpush1.bf16.msra.mxu0 %v544
    %564 = vmatprep.subr.bf16.mxu0 0
    %565 = vmatpush1.bf16.msra.mxu0 %v543
    %566 = vmatprep.subr.bf16.mxu0 0
    %567 = vmatpush1.bf16.msra.mxu0 %v542
    %568 = vmatprep.subr.bf16.mxu0 0
    %569 = vmatpush1.bf16.msra.mxu0 %v541
    %570 = vmatprep.subr.bf16.mxu0 0
    %571 = vmatpush1.bf16.msra.mxu0 %v540
    %572 = vmatprep.subr.bf16.mxu0 0
    %573 = vmatpush2.bf16.msra.mxu0 0
    %574 = vmatprep.subr.bf16.mxu0 0
    %575 = vmatpush2.bf16.msra.mxu0 0
    %576 = vmatprep.subr.bf16.mxu0 0
    %577 = vmatpush2.bf16.msra.mxu0 0
    %578 = vmatprep.subr.bf16.mxu0 0
    %579 = vmatpush2.bf16.msra.mxu0 0
    %580 = vmatprep.subr.bf16.mxu0 0
    %581 = vmatpush2.bf16.msra.mxu0 0
    %582 = vmatprep.subr.bf16.mxu0 0
    %583 = vmatpush2.bf16.msra.mxu0 0
    %584 = vmatprep.subr.bf16.mxu0 0
    %585 = vmatpush2.bf16.msra.mxu0 0
    %586 = vmatprep.subr.bf16.mxu0 0
    %587 = vmatpush2.bf16.msra.mxu0 0
    %588 = vmatprep.mubr.bf16.mxu0 0
    %589 = vmatmul.mubr.bf16.gmra.mxu0 %v506
    %v590 = vpop.f32.mrf.mxu0
    %v591 = vadd.f32 0.0, %v590
    %v592 = vpop.f32.mrf.mxu0
    %v593 = vpop.f32.mrf.mxu0
    %v594 = vadd.f32 0.0, %v593
    %v595 = vpop.f32.mrf.mxu0
    %596 = vmatprep.mubr.bf16.mxu0 0
    %597 = vmatmul.mubr.bf16.gmra.mxu0 %v507
    %v598 = vpop.f32.mrf.mxu0
    %v599 = vadd.f32 0.0, %v598
    %v600 = vpop.f32.mrf.mxu0
    %v601 = vpop.f32.mrf.mxu0
    %v602 = vadd.f32 0.0, %v601
    %v603 = vpop.f32.mrf.mxu0
    %604 = vdwg.mxu0
    %v605 = vmul.f32 %v439, %v175
    %v606 = vmul.f32 %v443, %v176
    %v607 = vmul.f32 %v449, %v177
    %v608 = vmul.f32 %v453, %v178
    %v609 = vmul.f32 %v591, %v180
    %v610 = vmul.f32 %v594, %v181
    %v611 = vmul.f32 %v599, %v182
    %v612 = vmul.f32 %v602, %v183
    %v613 = vadd.f32 %v605, %v609
    %v614 = vadd.f32 %v606, %v610
    %v615 = vadd.f32 %v607, %v611
    %v616 = vadd.f32 %v608, %v612
    %v617 = vpack.c.bf16 %v614, %v613
    %v618 = vpack.c.bf16 %v616, %v615
    %v619 = vpack.c.bf16 %v445, %v441
    %v620 = vpack.c.bf16 %v455, %v451
    %621 = vmatprep.subr.bf16.mxu0 0
    %622 = vmatpush1.bf16.msra.mxu0 %v547
    %623 = vmatprep.subr.bf16.mxu0 0
    %624 = vmatpush1.bf16.msra.mxu0 %v546
    %625 = vmatprep.subr.bf16.mxu0 0
    %626 = vmatpush1.bf16.msra.mxu0 %v545
    %627 = vmatprep.subr.bf16.mxu0 0
    %628 = vmatpush1.bf16.msra.mxu0 %v544
    %629 = vmatprep.subr.bf16.mxu0 0
    %630 = vmatpush1.bf16.msra.mxu0 %v543
    %631 = vmatprep.subr.bf16.mxu0 0
    %632 = vmatpush1.bf16.msra.mxu0 %v542
    %633 = vmatprep.subr.bf16.mxu0 0
    %634 = vmatpush1.bf16.msra.mxu0 %v541
    %635 = vmatprep.subr.bf16.mxu0 0
    %636 = vmatpush1.bf16.msra.mxu0 %v540
    %637 = vmatprep.subr.bf16.mxu0 0
    %638 = vmatpush2.bf16.msra.mxu0 0
    %639 = vmatprep.subr.bf16.mxu0 0
    %640 = vmatpush2.bf16.msra.mxu0 0
    %641 = vmatprep.subr.bf16.mxu0 0
    %642 = vmatpush2.bf16.msra.mxu0 0
    %643 = vmatprep.subr.bf16.mxu0 0
    %644 = vmatpush2.bf16.msra.mxu0 0
    %645 = vmatprep.subr.bf16.mxu0 0
    %646 = vmatpush2.bf16.msra.mxu0 0
    %647 = vmatprep.subr.bf16.mxu0 0
    %648 = vmatpush2.bf16.msra.mxu0 0
    %649 = vmatprep.subr.bf16.mxu0 0
    %650 = vmatpush2.bf16.msra.mxu0 0
    %651 = vmatprep.subr.bf16.mxu0 0
    %652 = vmatpush2.bf16.msra.mxu0 0
    %653 = vmatprep.mubr.bf16.mxu0 0
    %654 = vmatmul.mubr.bf16.gmra.mxu0 %v619
    %v655 = vpop.f32.mrf.mxu0
    %v656 = vadd.f32 0.0, %v655
    %v657 = vpop.f32.mrf.mxu0
    %v658 = vpop.f32.mrf.mxu0
    %v659 = vadd.f32 0.0, %v658
    %v660 = vpop.f32.mrf.mxu0
    %661 = vmatprep.mubr.bf16.mxu0 0
    %662 = vmatmul.mubr.bf16.gmra.mxu0 %v620
    %v663 = vpop.f32.mrf.mxu0
    %v664 = vadd.f32 0.0, %v663
    %v665 = vpop.f32.mrf.mxu0
    %v666 = vpop.f32.mrf.mxu0
    %v667 = vadd.f32 0.0, %v666
    %v668 = vpop.f32.mrf.mxu0
    %669 = vdwg.mxu0
    %v670 = vmul.f32 %v441, %v175
    %v671 = vmul.f32 %v445, %v176
    %v672 = vmul.f32 %v451, %v177
    %v673 = vmul.f32 %v455, %v178
    %v674 = vmul.f32 %v656, %v180
    %v675 = vmul.f32 %v659, %v181
    %v676 = vmul.f32 %v664, %v182
    %v677 = vmul.f32 %v667, %v183
    %v678 = vadd.f32 %v670, %v674
    %v679 = vadd.f32 %v671, %v675
    %v680 = vadd.f32 %v672, %v676
    %v681 = vadd.f32 %v673, %v677
    %v682 = vpack.c.bf16 %v679, %v678
    %v683 = vpack.c.bf16 %v681, %v680
    %v684 = vpack.c.bf16 %v495, %v492
    %v685 = vpack.c.bf16 %v503, %v500
    %v686 = vld [vmem:[#allocation13] sm:$0xf]
    %v687 = vld [vmem:[#allocation13 + $0x4] sm:$0xf]
    %v688 = vld [vmem:[#allocation13 + $0x8] sm:$0xf]
    %v689 = vld [vmem:[#allocation13 + $0xc] sm:$0xf]
    %v690 = vld [vmem:[#allocation13 + $0x10] sm:$0xf]
    %v691 = vld [vmem:[#allocation13 + $0x14] sm:$0xf]
    %v692 = vld [vmem:[#allocation13 + $0x18] sm:$0xf]
    %v693 = vld [vmem:[#allocation13 + $0x1c] sm:$0xf]
    %v694 = vld [vmem:[#allocation13 + $0x20] sm:$0xf]
    %v695 = vld [vmem:[#allocation13 + $0x24] sm:$0xf]
    %v696 = vld [vmem:[#allocation13 + $0x28] sm:$0xf]
    %v697 = vld [vmem:[#allocation13 + $0x2c] sm:$0xf]
    %v698 = vld [vmem:[#allocation13 + $0x30] sm:$0xf]
    %v699 = vld [vmem:[#allocation13 + $0x34] sm:$0xf]
    %v700 = vld [vmem:[#allocation13 + $0x38] sm:$0xf]
    %v701 = vld [vmem:[#allocation13 + $0x3c] sm:$0xf]
    %vm702 = vcmask 261120
    %v704 = vsel %vm702, %v617, 0
    %v707 = vsel %vm702, %v618, 0
    %v710 = vsel %vm702, %v682, 0
    %v713 = vsel %vm702, %v683, 0
    %715 = vmatprep.subr.bf16.mxu0 0
    %716 = vmatpush1.bf16.xpose.msra.mxu0 0
    %717 = vmatprep.subr.bf16.mxu0 0
    %718 = vmatpush1.bf16.xpose.msra.mxu0 0
    %719 = vmatprep.subr.bf16.mxu0 0
    %720 = vmatpush1.bf16.xpose.msra.mxu0 0
    %721 = vmatprep.subr.bf16.mxu0 0
    %722 = vmatpush1.bf16.xpose.msra.mxu0 0
    %723 = vmatprep.subr.bf16.mxu0 0
    %724 = vmatpush1.bf16.xpose.msra.mxu0 0
    %725 = vmatprep.subr.bf16.mxu0 0
    %726 = vmatpush1.bf16.xpose.msra.mxu0 0
    %727 = vmatprep.subr.bf16.mxu0 0
    %728 = vmatpush1.bf16.xpose.msra.mxu0 %v713
    %729 = vmatprep.subr.bf16.mxu0 0
    %730 = vmatpush1.bf16.xpose.msra.mxu0 %v710
    %731 = vmatprep.subr.bf16.mxu0 0
    %732 = vmatpush2.bf16.xpose.msra.mxu0 0
    %733 = vmatprep.subr.bf16.mxu0 0
    %734 = vmatpush2.bf16.xpose.msra.mxu0 0
    %735 = vmatprep.subr.bf16.mxu0 0
    %736 = vmatpush2.bf16.xpose.msra.mxu0 0
    %737 = vmatprep.subr.bf16.mxu0 0
    %738 = vmatpush2.bf16.xpose.msra.mxu0 0
    %739 = vmatprep.subr.bf16.mxu0 0
    %740 = vmatpush2.bf16.xpose.msra.mxu0 0
    %741 = vmatprep.subr.bf16.mxu0 0
    %742 = vmatpush2.bf16.xpose.msra.mxu0 0
    %743 = vmatprep.subr.bf16.mxu0 0
    %744 = vmatpush2.bf16.xpose.msra.mxu0 0
    %745 = vmatprep.subr.bf16.mxu0 0
    %746 = vmatpush2.bf16.xpose.msra.mxu0 0
    %747 = vmatprep.mubr.bf16.mxu0 0
    %748 = vmatmul.mubr.bf16.gmra.mxu0 %v704
    %v749 = vpop.f32.mrf.mxu0
    %v750 = vadd.f32 0.0, %v749
    %v751 = vpop.f32.mrf.mxu0
    %v752 = vpop.f32.mrf.mxu0
    %v753 = vadd.f32 0.0, %v752
    %v754 = vpop.f32.mrf.mxu0
    %755 = vmatprep.mubr.bf16.mxu0 0
    %756 = vmatmul.mubr.bf16.gmra.mxu0 %v707
    %v757 = vpop.f32.mrf.mxu0
    %v758 = vadd.f32 0.0, %v757
    %v759 = vpop.f32.mrf.mxu0
    %v760 = vpop.f32.mrf.mxu0
    %v761 = vadd.f32 0.0, %v760
    %v762 = vpop.f32.mrf.mxu0
    %763 = vdwg.mxu0
    %v764 = vmul.f32 %v750, 0.17677669
    %v765 = vmul.f32 %v753, 0.17677669
    %v766 = vmul.f32 %v758, 0.17677669
    %v767 = vmul.f32 %v761, 0.17677669
    %v768 = vadd.f32 %v764, %v184
    %v769 = vadd.f32 %v765, %v185
    %v770 = vadd.f32 %v766, %v186
    %v771 = vadd.f32 %v767, %v187
    %v772 = vsel %vm702, %v768, -inf
    %773 = vmax.xlane.f32.xlu0 %v772
    %v774 = vpop.xlane.xlu0 %773
    %v775 = vsel %vm702, %v769, -inf
    %776 = vmax.xlane.f32.xlu0 %v775
    %v777 = vpop.xlane.xlu0 %776
    %v778 = vsel %vm702, %v770, -inf
    %779 = vmax.xlane.f32.xlu0 %v778
    %v780 = vpop.xlane.xlu0 %779
    %v781 = vsel %vm702, %v771, -inf
    %782 = vmax.xlane.f32.xlu0 %v781
    %v783 = vpop.xlane.xlu0 %782
    %v784 = vsub.f32 %v768, %v774
    %v785 = vsub.f32 %v769, %v777
    %v786 = vsub.f32 %v770, %v780
    %v787 = vsub.f32 %v771, %v783
    %v788 = vmul.f32 %v784, 1.442695
    %v789 = vpow.pop %v788
    %v790 = vmul.f32 %v785, 1.442695
    %v791 = vpow.pop %v790
    %v792 = vmul.f32 %v786, 1.442695
    %v793 = vpow.pop %v792
    %v794 = vmul.f32 %v787, 1.442695
    %v795 = vpow.pop %v794
    %v796 = vsel %vm702, %v789, 0.0
    %797 = vadd.xlane.f32.xlu0 %v796
    %v798 = vpop.xlane.xlu0 %797
    %v799 = vsel %vm702, %v791, 0.0
    %800 = vadd.xlane.f32.xlu0 %v799
    %v801 = vpop.xlane.xlu0 %800
    %v802 = vsel %vm702, %v793, 0.0
    %803 = vadd.xlane.f32.xlu0 %v802
    %v804 = vpop.xlane.xlu0 %803
    %v805 = vsel %vm702, %v795, 0.0
    %806 = vadd.xlane.f32.xlu0 %v805
    %v807 = vpop.xlane.xlu0 %806
    %v808 = vrcp.pop %v798
    %v809 = vrcp.pop %v801
    %v810 = vrcp.pop %v804
    %v811 = vrcp.pop %v807
    %v812 = vmul.f32 %v789, %v808
    %v813 = vmul.f32 %v791, %v809
    %v814 = vmul.f32 %v793, %v810
    %v815 = vmul.f32 %v795, %v811
    %v816 = vpack.c.bf16 %v813, %v812
    %v817 = vpack.c.bf16 %v815, %v814
    %v819 = vsel %vm702, %v816, 0
    %v822 = vsel %vm702, %v817, 0
    %824 = vmatprep.subr.bf16.mxu0 0
    %825 = vmatpush1.bf16.msra.mxu0 0
    %826 = vmatprep.subr.bf16.mxu0 0
    %827 = vmatpush1.bf16.msra.mxu0 0
    %828 = vmatprep.subr.bf16.mxu0 0
    %829 = vmatpush1.bf16.msra.mxu0 0
    %830 = vmatprep.subr.bf16.mxu0 0
    %831 = vmatpush1.bf16.msra.mxu0 0
    %832 = vmatprep.subr.bf16.mxu0 0
    %833 = vmatpush1.bf16.msra.mxu0 0
    %834 = vmatprep.subr.bf16.mxu0 0
    %835 = vmatpush1.bf16.msra.mxu0 0
    %836 = vmatprep.subr.bf16.mxu0 0
    %837 = vmatpush1.bf16.msra.mxu0 %v685
    %838 = vmatprep.subr.bf16.mxu0 0
    %839 = vmatpush1.bf16.msra.mxu0 %v684
    %840 = vmatprep.subr.bf16.mxu0 0
    %841 = vmatpush2.bf16.msra.mxu0 0
    %842 = vmatprep.subr.bf16.mxu0 0
    %843 = vmatpush2.bf16.msra.mxu0 0
    %844 = vmatprep.subr.bf16.mxu0 0
    %845 = vmatpush2.bf16.msra.mxu0 0
    %846 = vmatprep.subr.bf16.mxu0 0
    %847 = vmatpush2.bf16.msra.mxu0 0
    %848 = vmatprep.subr.bf16.mxu0 0
    %849 = vmatpush2.bf16.msra.mxu0 0
    %850 = vmatprep.subr.bf16.mxu0 0
    %851 = vmatpush2.bf16.msra.mxu0 0
    %852 = vmatprep.subr.bf16.mxu0 0
    %853 = vmatpush2.bf16.msra.mxu0 0
    %854 = vmatprep.subr.bf16.mxu0 0
    %855 = vmatpush2.bf16.msra.mxu0 0
    %856 = vmatprep.mubr.bf16.mxu0 0
    %857 = vmatmul.mubr.bf16.gmra.mxu0 %v819
    %v858 = vpop.f32.mrf.mxu0
    %v859 = vadd.f32 0.0, %v858
    %v860 = vpop.f32.mrf.mxu0
    %v861 = vpop.f32.mrf.mxu0
    %v862 = vadd.f32 0.0, %v861
    %v863 = vpop.f32.mrf.mxu0
    %864 = vmatprep.mubr.bf16.mxu0 0
    %865 = vmatmul.mubr.bf16.gmra.mxu0 %v822
    %v866 = vpop.f32.mrf.mxu0
    %v867 = vadd.f32 0.0, %v866
    %v868 = vpop.f32.mrf.mxu0
    %v869 = vpop.f32.mrf.mxu0
    %v870 = vadd.f32 0.0, %v869
    %v871 = vpop.f32.mrf.mxu0
    %872 = vdwg.mxu0
    %v873 = vpack.c.bf16 %v862, %v859
    %v874 = vpack.c.bf16 %v870, %v867
    %877 = vrot.lane.b32.xlu0 %v617, 96
    %v878 = vpop.permute.xlu0 %877
    %879 = vrot.lane.b32.xlu0 %v618, 96
    %v880 = vpop.permute.xlu0 %879
    %883 = vrot.lane.b32.xlu0 %v682, 96
    %v884 = vpop.permute.xlu0 %883
    %885 = vrot.lane.b32.xlu0 %v683, 96
    %v886 = vpop.permute.xlu0 %885
    %v888 = vsel %vm702, %v878, 0
    %v891 = vsel %vm702, %v880, 0
    %v894 = vsel %vm702, %v884, 0
    %v897 = vsel %vm702, %v886, 0
    %899 = vmatprep.subr.bf16.mxu0 0
    %900 = vmatpush1.bf16.xpose.msra.mxu0 0
    %901 = vmatprep.subr.bf16.mxu0 0
    %902 = vmatpush1.bf16.xpose.msra.mxu0 0
    %903 = vmatprep.subr.bf16.mxu0 0
    %904 = vmatpush1.bf16.xpose.msra.mxu0 0
    %905 = vmatprep.subr.bf16.mxu0 0
    %906 = vmatpush1.bf16.xpose.msra.mxu0 0
    %907 = vmatprep.subr.bf16.mxu0 0
    %908 = vmatpush1.bf16.xpose.msra.mxu0 0
    %909 = vmatprep.subr.bf16.mxu0 0
    %910 = vmatpush1.bf16.xpose.msra.mxu0 0
    %911 = vmatprep.subr.bf16.mxu0 0
    %912 = vmatpush1.bf16.xpose.msra.mxu0 %v897
    %913 = vmatprep.subr.bf16.mxu0 0
    %914 = vmatpush1.bf16.xpose.msra.mxu0 %v894
    %915 = vmatprep.subr.bf16.mxu0 0
    %916 = vmatpush2.bf16.xpose.msra.mxu0 0
    %917 = vmatprep.subr.bf16.mxu0 0
    %918 = vmatpush2.bf16.xpose.msra.mxu0 0
    %919 = vmatprep.subr.bf16.mxu0 0
    %920 = vmatpush2.bf16.xpose.msra.mxu0 0
    %921 = vmatprep.subr.bf16.mxu0 0
    %922 = vmatpush2.bf16.xpose.msra.mxu0 0
    %923 = vmatprep.subr.bf16.mxu0 0
    %924 = vmatpush2.bf16.xpose.msra.mxu0 0
    %925 = vmatprep.subr.bf16.mxu0 0
    %926 = vmatpush2.bf16.xpose.msra.mxu0 0
    %927 = vmatprep.subr.bf16.mxu0 0
    %928 = vmatpush2.bf16.xpose.msra.mxu0 0
    %929 = vmatprep.subr.bf16.mxu0 0
    %930 = vmatpush2.bf16.xpose.msra.mxu0 0
    %931 = vmatprep.mubr.bf16.mxu0 0
    %932 = vmatmul.mubr.bf16.gmra.mxu0 %v888
    %v933 = vpop.f32.mrf.mxu0
    %v934 = vadd.f32 0.0, %v933
    %v935 = vpop.f32.mrf.mxu0
    %v936 = vpop.f32.mrf.mxu0
    %v937 = vadd.f32 0.0, %v936
    %v938 = vpop.f32.mrf.mxu0
    %939 = vmatprep.mubr.bf16.mxu0 0
    %940 = vmatmul.mubr.bf16.gmra.mxu0 %v891
    %v941 = vpop.f32.mrf.mxu0
    %v942 = vadd.f32 0.0, %v941
    %v943 = vpop.f32.mrf.mxu0
    %v944 = vpop.f32.mrf.mxu0
    %v945 = vadd.f32 0.0, %v944
    %v946 = vpop.f32.mrf.mxu0
    %947 = vdwg.mxu0
    %v948 = vmul.f32 %v934, 0.17677669
    %v949 = vmul.f32 %v937, 0.17677669
    %v950 = vmul.f32 %v942, 0.17677669
    %v951 = vmul.f32 %v945, 0.17677669
    %v952 = vadd.f32 %v948, %v184
    %v953 = vadd.f32 %v949, %v185
    %v954 = vadd.f32 %v950, %v186
    %v955 = vadd.f32 %v951, %v187
    %v956 = vsel %vm702, %v952, -inf
    %957 = vmax.xlane.f32.xlu0 %v956
    %v958 = vpop.xlane.xlu0 %957
    %v959 = vsel %vm702, %v953, -inf
    %960 = vmax.xlane.f32.xlu0 %v959
    %v961 = vpop.xlane.xlu0 %960
    %v962 = vsel %vm702, %v954, -inf
    %963 = vmax.xlane.f32.xlu0 %v962
    %v964 = vpop.xlane.xlu0 %963
    %v965 = vsel %vm702, %v955, -inf
    %966 = vmax.xlane.f32.xlu0 %v965
    %v967 = vpop.xlane.xlu0 %966
    %v968 = vsub.f32 %v952, %v958
    %v969 = vsub.f32 %v953, %v961
    %v970 = vsub.f32 %v954, %v964
    %v971 = vsub.f32 %v955, %v967
    %v972 = vmul.f32 %v968, 1.442695
    %v973 = vpow.pop %v972
    %v974 = vmul.f32 %v969, 1.442695
    %v975 = vpow.pop %v974
    %v976 = vmul.f32 %v970, 1.442695
    %v977 = vpow.pop %v976
    %v978 = vmul.f32 %v971, 1.442695
    %v979 = vpow.pop %v978
    %v980 = vsel %vm702, %v973, 0.0
    %981 = vadd.xlane.f32.xlu0 %v980
    %v982 = vpop.xlane.xlu0 %981
    %v983 = vsel %vm702, %v975, 0.0
    %984 = vadd.xlane.f32.xlu0 %v983
    %v985 = vpop.xlane.xlu0 %984
    %v986 = vsel %vm702, %v977, 0.0
    %987 = vadd.xlane.f32.xlu0 %v986
    %v988 = vpop.xlane.xlu0 %987
    %v989 = vsel %vm702, %v979, 0.0
    %990 = vadd.xlane.f32.xlu0 %v989
    %v991 = vpop.xlane.xlu0 %990
    %v992 = vrcp.pop %v982
    %v993 = vrcp.pop %v985
    %v994 = vrcp.pop %v988
    %v995 = vrcp.pop %v991
    %v996 = vmul.f32 %v973, %v992
    %v997 = vmul.f32 %v975, %v993
    %v998 = vmul.f32 %v977, %v994
    %v999 = vmul.f32 %v979, %v995
    %v1000 = vpack.c.bf16 %v997, %v996
    %v1001 = vpack.c.bf16 %v999, %v998
    %1004 = vrot.lane.b32.xlu0 %v684, 96
    %v1005 = vpop.permute.xlu0 %1004
    %1006 = vrot.lane.b32.xlu0 %v685, 96
    %v1007 = vpop.permute.xlu0 %1006
    %v1011 = vsel %vm702, %v1000, 0
    %v1014 = vsel %vm702, %v1001, 0
    %1016 = vmatprep.subr.bf16.mxu0 0
    %1017 = vmatpush1.bf16.msra.mxu0 0
    %1018 = vmatprep.subr.bf16.mxu0 0
    %1019 = vmatpush1.bf16.msra.mxu0 0
    %1020 = vmatprep.subr.bf16.mxu0 0
    %1021 = vmatpush1.bf16.msra.mxu0 0
    %1022 = vmatprep.subr.bf16.mxu0 0
    %1023 = vmatpush1.bf16.msra.mxu0 0
    %1024 = vmatprep.subr.bf16.mxu0 0
    %1025 = vmatpush1.bf16.msra.mxu0 0
    %1026 = vmatprep.subr.bf16.mxu0 0
    %1027 = vmatpush1.bf16.msra.mxu0 0
    %1028 = vmatprep.subr.bf16.mxu0 0
    %1029 = vmatpush1.bf16.msra.mxu0 %v1007
    %1030 = vmatprep.subr.bf16.mxu0 0
    %1031 = vmatpush1.bf16.msra.mxu0 %v1005
    %1032 = vmatprep.subr.bf16.mxu0 0
    %1033 = vmatpush2.bf16.msra.mxu0 0
    %1034 = vmatprep.subr.bf16.mxu0 0
    %1035 = vmatpush2.bf16.msra.mxu0 0
    %1036 = vmatprep.subr.bf16.mxu0 0
    %1037 = vmatpush2.bf16.msra.mxu0 0
    %1038 = vmatprep.subr.bf16.mxu0 0
    %1039 = vmatpush2.bf16.msra.mxu0 0
    %1040 = vmatprep.subr.bf16.mxu0 0
    %1041 = vmatpush2.bf16.msra.mxu0 0
    %1042 = vmatprep.subr.bf16.mxu0 0
    %1043 = vmatpush2.bf16.msra.mxu0 0
    %1044 = vmatprep.subr.bf16.mxu0 0
    %1045 = vmatpush2.bf16.msra.mxu0 0
    %1046 = vmatprep.subr.bf16.mxu0 0
    %1047 = vmatpush2.bf16.msra.mxu0 0
    %1048 = vmatprep.mubr.bf16.mxu0 0
    %1049 = vmatmul.mubr.bf16.gmra.mxu0 %v1011
    %v1050 = vpop.f32.mrf.mxu0
    %v1051 = vadd.f32 0.0, %v1050
    %v1052 = vpop.f32.mrf.mxu0
    %v1053 = vpop.f32.mrf.mxu0
    %v1054 = vadd.f32 0.0, %v1053
    %v1055 = vpop.f32.mrf.mxu0
    %1056 = vmatprep.mubr.bf16.mxu0 0
    %1057 = vmatmul.mubr.bf16.gmra.mxu0 %v1014
    %v1058 = vpop.f32.mrf.mxu0
    %v1059 = vadd.f32 0.0, %v1058
    %v1060 = vpop.f32.mrf.mxu0
    %v1061 = vpop.f32.mrf.mxu0
    %v1062 = vadd.f32 0.0, %v1061
    %v1063 = vpop.f32.mrf.mxu0
    %1064 = vdwg.mxu0
    %v1065 = vpack.c.bf16 %v1054, %v1051
    %v1066 = vpack.c.bf16 %v1062, %v1059
    %v1071 = vunpack.c.l.b16 %v690
    %v1072 = vunpack.c.l.b16 %v691
    %v1073 = vunpack.c.l.b16 %v692
    %v1074 = vunpack.c.l.b16 %v693
    %v1075 = vpack.c.b16 %v1072, %v1071
    %v1076 = vpack.c.b16 %v1074, %v1073
    %v1080 = vsel %vm702, %v1065, 0
    %v1083 = vsel %vm702, %v1066, 0
    %1085 = vmatprep.subr.bf16.mxu0 0
    %1086 = vmatpush1.bf16.msra.mxu0 0
    %1087 = vmatprep.subr.bf16.mxu0 0
    %1088 = vmatpush1.bf16.msra.mxu0 0
    %1089 = vmatprep.subr.bf16.mxu0 0
    %1090 = vmatpush1.bf16.msra.mxu0 0
    %1091 = vmatprep.subr.bf16.mxu0 0
    %1092 = vmatpush1.bf16.msra.mxu0 0
    %1093 = vmatprep.subr.bf16.mxu0 0
    %1094 = vmatpush1.bf16.msra.mxu0 0
    %1095 = vmatprep.subr.bf16.mxu0 0
    %1096 = vmatpush1.bf16.msra.mxu0 0
    %1097 = vmatprep.subr.bf16.mxu0 0
    %1098 = vmatpush1.bf16.msra.mxu0 %v1076
    %1099 = vmatprep.subr.bf16.mxu0 0
    %1100 = vmatpush1.bf16.msra.mxu0 %v1075
    %1101 = vmatprep.subr.bf16.mxu0 0
    %1102 = vmatpush2.bf16.msra.mxu0 0
    %1103 = vmatprep.subr.bf16.mxu0 0
    %1104 = vmatpush2.bf16.msra.mxu0 0
    %1105 = vmatprep.subr.bf16.mxu0 0
    %1106 = vmatpush2.bf16.msra.mxu0 0
    %1107 = vmatprep.subr.bf16.mxu0 0
    %1108 = vmatpush2.bf16.msra.mxu0 0
    %1109 = vmatprep.subr.bf16.mxu0 0
    %1110 = vmatpush2.bf16.msra.mxu0 0
    %1111 = vmatprep.subr.bf16.mxu0 0
    %1112 = vmatpush2.bf16.msra.mxu0 0
    %1113 = vmatprep.subr.bf16.mxu0 0
    %1114 = vmatpush2.bf16.msra.mxu0 0
    %1115 = vmatprep.subr.bf16.mxu0 0
    %1116 = vmatpush2.bf16.msra.mxu0 0
    %1117 = vmatprep.mubr.bf16.mxu0 0
    %1118 = vmatmul.mubr.bf16.gmra.mxu0 %v1080
    %v1119 = vpop.f32.mrf.mxu0
    %v1120 = vadd.f32 0.0, %v1119
    %v1121 = vpop.f32.mrf.mxu0
    %v1122 = vpop.f32.mrf.mxu0
    %v1123 = vadd.f32 0.0, %v1122
    %v1124 = vpop.f32.mrf.mxu0
    %1125 = vmatprep.mubr.bf16.mxu0 0
    %1126 = vmatmul.mubr.bf16.gmra.mxu0 %v1083
    %v1127 = vpop.f32.mrf.mxu0
    %v1128 = vadd.f32 0.0, %v1127
    %v1129 = vpop.f32.mrf.mxu0
    %v1130 = vpop.f32.mrf.mxu0
    %v1131 = vadd.f32 0.0, %v1130
    %v1132 = vpop.f32.mrf.mxu0
    %1133 = vdwg.mxu0
    %v1138 = vunpack.c.l.b16 %v686
    %v1139 = vunpack.c.l.b16 %v687
    %v1140 = vunpack.c.l.b16 %v688
    %v1141 = vunpack.c.l.b16 %v689
    %v1142 = vpack.c.b16 %v1139, %v1138
    %v1143 = vpack.c.b16 %v1141, %v1140
    %v1147 = vsel %vm702, %v873, 0
    %v1150 = vsel %vm702, %v874, 0
    %1152 = vmatprep.subr.bf16.mxu0 0
    %1153 = vmatpush1.bf16.msra.mxu0 0
    %1154 = vmatprep.subr.bf16.mxu0 0
    %1155 = vmatpush1.bf16.msra.mxu0 0
    %1156 = vmatprep.subr.bf16.mxu0 0
    %1157 = vmatpush1.bf16.msra.mxu0 0
    %1158 = vmatprep.subr.bf16.mxu0 0
    %1159 = vmatpush1.bf16.msra.mxu0 0
    %1160 = vmatprep.subr.bf16.mxu0 0
    %1161 = vmatpush1.bf16.msra.mxu0 0
    %1162 = vmatprep.subr.bf16.mxu0 0
    %1163 = vmatpush1.bf16.msra.mxu0 0
    %1164 = vmatprep.subr.bf16.mxu0 0
    %1165 = vmatpush1.bf16.msra.mxu0 %v1143
    %1166 = vmatprep.subr.bf16.mxu0 0
    %1167 = vmatpush1.bf16.msra.mxu0 %v1142
    %1168 = vmatprep.subr.bf16.mxu0 0
    %1169 = vmatpush2.bf16.msra.mxu0 0
    %1170 = vmatprep.subr.bf16.mxu0 0
    %1171 = vmatpush2.bf16.msra.mxu0 0
    %1172 = vmatprep.subr.bf16.mxu0 0
    %1173 = vmatpush2.bf16.msra.mxu0 0
    %1174 = vmatprep.subr.bf16.mxu0 0
    %1175 = vmatpush2.bf16.msra.mxu0 0
    %1176 = vmatprep.subr.bf16.mxu0 0
    %1177 = vmatpush2.bf16.msra.mxu0 0
    %1178 = vmatprep.subr.bf16.mxu0 0
    %1179 = vmatpush2.bf16.msra.mxu0 0
    %1180 = vmatprep.subr.bf16.mxu0 0
    %1181 = vmatpush2.bf16.msra.mxu0 0
    %1182 = vmatprep.subr.bf16.mxu0 0
    %1183 = vmatpush2.bf16.msra.mxu0 0
    %1184 = vmatprep.mubr.bf16.mxu0 0
    %1185 = vmatmul.mubr.bf16.gmra.mxu0 %v1147
    %v1186 = vpop.f32.mrf.mxu0
    %v1187 = vadd.f32 %v1120, %v1186
    %v1188 = vpop.f32.mrf.mxu0
    %v1189 = vpop.f32.mrf.mxu0
    %v1190 = vadd.f32 %v1123, %v1189
    %v1191 = vpop.f32.mrf.mxu0
    %1192 = vmatprep.mubr.bf16.mxu0 0
    %1193 = vmatmul.mubr.bf16.gmra.mxu0 %v1150
    %v1194 = vpop.f32.mrf.mxu0
    %v1195 = vadd.f32 %v1128, %v1194
    %v1196 = vpop.f32.mrf.mxu0
    %v1197 = vpop.f32.mrf.mxu0
    %v1198 = vadd.f32 %v1131, %v1197
    %v1199 = vpop.f32.mrf.mxu0
    %1200 = vdwg.mxu0
    %1201 = vrot.lane.b32.xlu0 %v617, 64
    %v1202 = vpop.permute.xlu0 %1201
    %1203 = vrot.lane.b32.xlu0 %v618, 64
    %v1204 = vpop.permute.xlu0 %1203
    %1205 = vrot.lane.b32.xlu0 %v682, 64
    %v1206 = vpop.permute.xlu0 %1205
    %1207 = vrot.lane.b32.xlu0 %v683, 64
    %v1208 = vpop.permute.xlu0 %1207
    %v1210 = vsel %vm702, %v1202, 0
    %v1213 = vsel %vm702, %v1204, 0
    %v1216 = vsel %vm702, %v1206, 0
    %v1219 = vsel %vm702, %v1208, 0
    %1221 = vmatprep.subr.bf16.mxu0 0
    %1222 = vmatpush1.bf16.xpose.msra.mxu0 0
    %1223 = vmatprep.subr.bf16.mxu0 0
    %1224 = vmatpush1.bf16.xpose.msra.mxu0 0
    %1225 = vmatprep.subr.bf16.mxu0 0
    %1226 = vmatpush1.bf16.xpose.msra.mxu0 0
    %1227 = vmatprep.subr.bf16.mxu0 0
    %1228 = vmatpush1.bf16.xpose.msra.mxu0 0
    %1229 = vmatprep.subr.bf16.mxu0 0
    %1230 = vmatpush1.bf16.xpose.msra.mxu0 0
    %1231 = vmatprep.subr.bf16.mxu0 0
    %1232 = vmatpush1.bf16.xpose.msra.mxu0 0
    %1233 = vmatprep.subr.bf16.mxu0 0
    %1234 = vmatpush1.bf16.xpose.msra.mxu0 %v1219
    %1235 = vmatprep.subr.bf16.mxu0 0
    %1236 = vmatpush1.bf16.xpose.msra.mxu0 %v1216
    %1237 = vmatprep.subr.bf16.mxu0 0
    %1238 = vmatpush2.bf16.xpose.msra.mxu0 0
    %1239 = vmatprep.subr.bf16.mxu0 0
    %1240 = vmatpush2.bf16.xpose.msra.mxu0 0
    %1241 = vmatprep.subr.bf16.mxu0 0
    %1242 = vmatpush2.bf16.xpose.msra.mxu0 0
    %1243 = vmatprep.subr.bf16.mxu0 0
    %1244 = vmatpush2.bf16.xpose.msra.mxu0 0
    %1245 = vmatprep.subr.bf16.mxu0 0
    %1246 = vmatpush2.bf16.xpose.msra.mxu0 0
    %1247 = vmatprep.subr.bf16.mxu0 0
    %1248 = vmatpush2.bf16.xpose.msra.mxu0 0
    %1249 = vmatprep.subr.bf16.mxu0 0
    %1250 = vmatpush2.bf16.xpose.msra.mxu0 0
    %1251 = vmatprep.subr.bf16.mxu0 0
    %1252 = vmatpush2.bf16.xpose.msra.mxu0 0
    %1253 = vmatprep.mubr.bf16.mxu0 0
    %1254 = vmatmul.mubr.bf16.gmra.mxu0 %v1210
    %v1255 = vpop.f32.mrf.mxu0
    %v1256 = vadd.f32 0.0, %v1255
    %v1257 = vpop.f32.mrf.mxu0
    %v1258 = vpop.f32.mrf.mxu0
    %v1259 = vadd.f32 0.0, %v1258
    %v1260 = vpop.f32.mrf.mxu0
    %1261 = vmatprep.mubr.bf16.mxu0 0
    %1262 = vmatmul.mubr.bf16.gmra.mxu0 %v1213
    %v1263 = vpop.f32.mrf.mxu0
    %v1264 = vadd.f32 0.0, %v1263
    %v1265 = vpop.f32.mrf.mxu0
    %v1266 = vpop.f32.mrf.mxu0
    %v1267 = vadd.f32 0.0, %v1266
    %v1268 = vpop.f32.mrf.mxu0
    %1269 = vdwg.mxu0
    %v1270 = vmul.f32 %v1256, 0.17677669
    %v1271 = vmul.f32 %v1259, 0.17677669
    %v1272 = vmul.f32 %v1264, 0.17677669
    %v1273 = vmul.f32 %v1267, 0.17677669
    %v1274 = vadd.f32 %v1270, %v184
    %v1275 = vadd.f32 %v1271, %v185
    %v1276 = vadd.f32 %v1272, %v186
    %v1277 = vadd.f32 %v1273, %v187
    %v1278 = vsel %vm702, %v1274, -inf
    %1279 = vmax.xlane.f32.xlu0 %v1278
    %v1280 = vpop.xlane.xlu0 %1279
    %v1281 = vsel %vm702, %v1275, -inf
    %1282 = vmax.xlane.f32.xlu0 %v1281
    %v1283 = vpop.xlane.xlu0 %1282
    %v1284 = vsel %vm702, %v1276, -inf
    %1285 = vmax.xlane.f32.xlu0 %v1284
    %v1286 = vpop.xlane.xlu0 %1285
    %v1287 = vsel %vm702, %v1277, -inf
    %1288 = vmax.xlane.f32.xlu0 %v1287
    %v1289 = vpop.xlane.xlu0 %1288
    %v1290 = vsub.f32 %v1274, %v1280
    %v1291 = vsub.f32 %v1275, %v1283
    %v1292 = vsub.f32 %v1276, %v1286
    %v1293 = vsub.f32 %v1277, %v1289
    %v1294 = vmul.f32 %v1290, 1.442695
    %v1295 = vpow.pop %v1294
    %v1296 = vmul.f32 %v1291, 1.442695
    %v1297 = vpow.pop %v1296
    %v1298 = vmul.f32 %v1292, 1.442695
    %v1299 = vpow.pop %v1298
    %v1300 = vmul.f32 %v1293, 1.442695
    %v1301 = vpow.pop %v1300
    %v1302 = vsel %vm702, %v1295, 0.0
    %1303 = vadd.xlane.f32.xlu0 %v1302
    %v1304 = vpop.xlane.xlu0 %1303
    %v1305 = vsel %vm702, %v1297, 0.0
    %1306 = vadd.xlane.f32.xlu0 %v1305
    %v1307 = vpop.xlane.xlu0 %1306
    %v1308 = vsel %vm702, %v1299, 0.0
    %1309 = vadd.xlane.f32.xlu0 %v1308
    %v1310 = vpop.xlane.xlu0 %1309
    %v1311 = vsel %vm702, %v1301, 0.0
    %1312 = vadd.xlane.f32.xlu0 %v1311
    %v1313 = vpop.xlane.xlu0 %1312
    %v1314 = vrcp.pop %v1304
    %v1315 = vrcp.pop %v1307
    %v1316 = vrcp.pop %v1310
    %v1317 = vrcp.pop %v1313
    %v1318 = vmul.f32 %v1295, %v1314
    %v1319 = vmul.f32 %v1297, %v1315
    %v1320 = vmul.f32 %v1299, %v1316
    %v1321 = vmul.f32 %v1301, %v1317
    %v1322 = vpack.c.bf16 %v1319, %v1318
    %v1323 = vpack.c.bf16 %v1321, %v1320
    %1324 = vrot.lane.b32.xlu0 %v684, 64
    %v1325 = vpop.permute.xlu0 %1324
    %1326 = vrot.lane.b32.xlu0 %v685, 64
    %v1327 = vpop.permute.xlu0 %1326
    %v1331 = vsel %vm702, %v1322, 0
    %v1334 = vsel %vm702, %v1323, 0
    %1336 = vmatprep.subr.bf16.mxu0 0
    %1337 = vmatpush1.bf16.msra.mxu0 0
    %1338 = vmatprep.subr.bf16.mxu0 0
    %1339 = vmatpush1.bf16.msra.mxu0 0
    %1340 = vmatprep.subr.bf16.mxu0 0
    %1341 = vmatpush1.bf16.msra.mxu0 0
    %1342 = vmatprep.subr.bf16.mxu0 0
    %1343 = vmatpush1.bf16.msra.mxu0 0
    %1344 = vmatprep.subr.bf16.mxu0 0
    %1345 = vmatpush1.bf16.msra.mxu0 0
    %1346 = vmatprep.subr.bf16.mxu0 0
    %1347 = vmatpush1.bf16.msra.mxu0 0
    %1348 = vmatprep.subr.bf16.mxu0 0
    %1349 = vmatpush1.bf16.msra.mxu0 %v1327
    %1350 = vmatprep.subr.bf16.mxu0 0
    %1351 = vmatpush1.bf16.msra.mxu0 %v1325
    %1352 = vmatprep.subr.bf16.mxu0 0
    %1353 = vmatpush2.bf16.msra.mxu0 0
    %1354 = vmatprep.subr.bf16.mxu0 0
    %1355 = vmatpush2.bf16.msra.mxu0 0
    %1356 = vmatprep.subr.bf16.mxu0 0
    %1357 = vmatpush2.bf16.msra.mxu0 0
    %1358 = vmatprep.subr.bf16.mxu0 0
    %1359 = vmatpush2.bf16.msra.mxu0 0
    %1360 = vmatprep.subr.bf16.mxu0 0
    %1361 = vmatpush2.bf16.msra.mxu0 0
    %1362 = vmatprep.subr.bf16.mxu0 0
    %1363 = vmatpush2.bf16.msra.mxu0 0
    %1364 = vmatprep.subr.bf16.mxu0 0
    %1365 = vmatpush2.bf16.msra.mxu0 0
    %1366 = vmatprep.subr.bf16.mxu0 0
    %1367 = vmatpush2.bf16.msra.mxu0 0
    %1368 = vmatprep.mubr.bf16.mxu0 0
    %1369 = vmatmul.mubr.bf16.gmra.mxu0 %v1331
    %v1370 = vpop.f32.mrf.mxu0
    %v1371 = vadd.f32 0.0, %v1370
    %v1372 = vpop.f32.mrf.mxu0
    %v1373 = vpop.f32.mrf.mxu0
    %v1374 = vadd.f32 0.0, %v1373
    %v1375 = vpop.f32.mrf.mxu0
    %1376 = vmatprep.mubr.bf16.mxu0 0
    %1377 = vmatmul.mubr.bf16.gmra.mxu0 %v1334
    %v1378 = vpop.f32.mrf.mxu0
    %v1379 = vadd.f32 0.0, %v1378
    %v1380 = vpop.f32.mrf.mxu0
    %v1381 = vpop.f32.mrf.mxu0
    %v1382 = vadd.f32 0.0, %v1381
    %v1383 = vpop.f32.mrf.mxu0
    %1384 = vdwg.mxu0
    %v1385 = vpack.c.bf16 %v1374, %v1371
    %v1386 = vpack.c.bf16 %v1382, %v1379
    %v1391 = vunpack.c.l.b16 %v694
    %v1392 = vunpack.c.l.b16 %v695
    %v1393 = vunpack.c.l.b16 %v696
    %v1394 = vunpack.c.l.b16 %v697
    %v1395 = vpack.c.b16 %v1392, %v1391
    %v1396 = vpack.c.b16 %v1394, %v1393
    %v1400 = vsel %vm702, %v1385, 0
    %v1403 = vsel %vm702, %v1386, 0
    %1405 = vmatprep.subr.bf16.mxu0 0
    %1406 = vmatpush1.bf16.msra.mxu0 0
    %1407 = vmatprep.subr.bf16.mxu0 0
    %1408 = vmatpush1.bf16.msra.mxu0 0
    %1409 = vmatprep.subr.bf16.mxu0 0
    %1410 = vmatpush1.bf16.msra.mxu0 0
    %1411 = vmatprep.subr.bf16.mxu0 0
    %1412 = vmatpush1.bf16.msra.mxu0 0
    %1413 = vmatprep.subr.bf16.mxu0 0
    %1414 = vmatpush1.bf16.msra.mxu0 0
    %1415 = vmatprep.subr.bf16.mxu0 0
    %1416 = vmatpush1.bf16.msra.mxu0 0
    %1417 = vmatprep.subr.bf16.mxu0 0
    %1418 = vmatpush1.bf16.msra.mxu0 %v1396
    %1419 = vmatprep.subr.bf16.mxu0 0
    %1420 = vmatpush1.bf16.msra.mxu0 %v1395
    %1421 = vmatprep.subr.bf16.mxu0 0
    %1422 = vmatpush2.bf16.msra.mxu0 0
    %1423 = vmatprep.subr.bf16.mxu0 0
    %1424 = vmatpush2.bf16.msra.mxu0 0
    %1425 = vmatprep.subr.bf16.mxu0 0
    %1426 = vmatpush2.bf16.msra.mxu0 0
    %1427 = vmatprep.subr.bf16.mxu0 0
    %1428 = vmatpush2.bf16.msra.mxu0 0
    %1429 = vmatprep.subr.bf16.mxu0 0
    %1430 = vmatpush2.bf16.msra.mxu0 0
    %1431 = vmatprep.subr.bf16.mxu0 0
    %1432 = vmatpush2.bf16.msra.mxu0 0
    %1433 = vmatprep.subr.bf16.mxu0 0
    %1434 = vmatpush2.bf16.msra.mxu0 0
    %1435 = vmatprep.subr.bf16.mxu0 0
    %1436 = vmatpush2.bf16.msra.mxu0 0
    %1437 = vmatprep.mubr.bf16.mxu0 0
    %1438 = vmatmul.mubr.bf16.gmra.mxu0 %v1400
    %v1439 = vpop.f32.mrf.mxu0
    %v1440 = vadd.f32 0.0, %v1439
    %v1441 = vpop.f32.mrf.mxu0
    %v1442 = vpop.f32.mrf.mxu0
    %v1443 = vadd.f32 0.0, %v1442
    %v1444 = vpop.f32.mrf.mxu0
    %1445 = vmatprep.mubr.bf16.mxu0 0
    %1446 = vmatmul.mubr.bf16.gmra.mxu0 %v1403
    %v1447 = vpop.f32.mrf.mxu0
    %v1448 = vadd.f32 0.0, %v1447
    %v1449 = vpop.f32.mrf.mxu0
    %v1450 = vpop.f32.mrf.mxu0
    %v1451 = vadd.f32 0.0, %v1450
    %v1452 = vpop.f32.mrf.mxu0
    %1453 = vdwg.mxu0
    %v1454 = vadd.f32 %v1187, %v1440
    %v1455 = vadd.f32 %v1190, %v1443
    %v1456 = vadd.f32 %v1195, %v1448
    %v1457 = vadd.f32 %v1198, %v1451
    %1458 = vrot.lane.b32.xlu0 %v617, 32
    %v1459 = vpop.permute.xlu0 %1458
    %1460 = vrot.lane.b32.xlu0 %v618, 32
    %v1461 = vpop.permute.xlu0 %1460
    %1462 = vrot.lane.b32.xlu0 %v682, 32
    %v1463 = vpop.permute.xlu0 %1462
    %1464 = vrot.lane.b32.xlu0 %v683, 32
    %v1465 = vpop.permute.xlu0 %1464
    %v1467 = vsel %vm702, %v1459, 0
    %v1470 = vsel %vm702, %v1461, 0
    %v1473 = vsel %vm702, %v1463, 0
    %v1476 = vsel %vm702, %v1465, 0
    %1478 = vmatprep.subr.bf16.mxu0 0
    %1479 = vmatpush1.bf16.xpose.msra.mxu0 0
    %1480 = vmatprep.subr.bf16.mxu0 0
    %1481 = vmatpush1.bf16.xpose.msra.mxu0 0
    %1482 = vmatprep.subr.bf16.mxu0 0
    %1483 = vmatpush1.bf16.xpose.msra.mxu0 0
    %1484 = vmatprep.subr.bf16.mxu0 0
    %1485 = vmatpush1.bf16.xpose.msra.mxu0 0
    %1486 = vmatprep.subr.bf16.mxu0 0
    %1487 = vmatpush1.bf16.xpose.msra.mxu0 0
    %1488 = vmatprep.subr.bf16.mxu0 0
    %1489 = vmatpush1.bf16.xpose.msra.mxu0 0
    %1490 = vmatprep.subr.bf16.mxu0 0
    %1491 = vmatpush1.bf16.xpose.msra.mxu0 %v1476
    %1492 = vmatprep.subr.bf16.mxu0 0
    %1493 = vmatpush1.bf16.xpose.msra.mxu0 %v1473
    %1494 = vmatprep.subr.bf16.mxu0 0
    %1495 = vmatpush2.bf16.xpose.msra.mxu0 0
    %1496 = vmatprep.subr.bf16.mxu0 0
    %1497 = vmatpush2.bf16.xpose.msra.mxu0 0
    %1498 = vmatprep.subr.bf16.mxu0 0
    %1499 = vmatpush2.bf16.xpose.msra.mxu0 0
    %1500 = vmatprep.subr.bf16.mxu0 0
    %1501 = vmatpush2.bf16.xpose.msra.mxu0 0
    %1502 = vmatprep.subr.bf16.mxu0 0
    %1503 = vmatpush2.bf16.xpose.msra.mxu0 0
    %1504 = vmatprep.subr.bf16.mxu0 0
    %1505 = vmatpush2.bf16.xpose.msra.mxu0 0
    %1506 = vmatprep.subr.bf16.mxu0 0
    %1507 = vmatpush2.bf16.xpose.msra.mxu0 0
    %1508 = vmatprep.subr.bf16.mxu0 0
    %1509 = vmatpush2.bf16.xpose.msra.mxu0 0
    %1510 = vmatprep.mubr.bf16.mxu0 0
    %1511 = vmatmul.mubr.bf16.gmra.mxu0 %v1467
    %v1512 = vpop.f32.mrf.mxu0
    %v1513 = vadd.f32 0.0, %v1512
    %v1514 = vpop.f32.mrf.mxu0
    %v1515 = vpop.f32.mrf.mxu0
    %v1516 = vadd.f32 0.0, %v1515
    %v1517 = vpop.f32.mrf.mxu0
    %1518 = vmatprep.mubr.bf16.mxu0 0
    %1519 = vmatmul.mubr.bf16.gmra.mxu0 %v1470
    %v1520 = vpop.f32.mrf.mxu0
    %v1521 = vadd.f32 0.0, %v1520
    %v1522 = vpop.f32.mrf.mxu0
    %v1523 = vpop.f32.mrf.mxu0
    %v1524 = vadd.f32 0.0, %v1523
    %v1525 = vpop.f32.mrf.mxu0
    %1526 = vdwg.mxu0
    %v1527 = vmul.f32 %v1513, 0.17677669
    %v1528 = vmul.f32 %v1516, 0.17677669
    %v1529 = vmul.f32 %v1521, 0.17677669
    %v1530 = vmul.f32 %v1524, 0.17677669
    %v1531 = vadd.f32 %v1527, %v184
    %v1532 = vadd.f32 %v1528, %v185
    %v1533 = vadd.f32 %v1529, %v186
    %v1534 = vadd.f32 %v1530, %v187
    %v1535 = vsel %vm702, %v1531, -inf
    %1536 = vmax.xlane.f32.xlu0 %v1535
    %v1537 = vpop.xlane.xlu0 %1536
    %v1538 = vsel %vm702, %v1532, -inf
    %1539 = vmax.xlane.f32.xlu0 %v1538
    %v1540 = vpop.xlane.xlu0 %1539
    %v1541 = vsel %vm702, %v1533, -inf
    %1542 = vmax.xlane.f32.xlu0 %v1541
    %v1543 = vpop.xlane.xlu0 %1542
    %v1544 = vsel %vm702, %v1534, -inf
    %1545 = vmax.xlane.f32.xlu0 %v1544
    %v1546 = vpop.xlane.xlu0 %1545
    %v1547 = vsub.f32 %v1531, %v1537
    %v1548 = vsub.f32 %v1532, %v1540
    %v1549 = vsub.f32 %v1533, %v1543
    %v1550 = vsub.f32 %v1534, %v1546
    %v1551 = vmul.f32 %v1547, 1.442695
    %v1552 = vpow.pop %v1551
    %v1553 = vmul.f32 %v1548, 1.442695
    %v1554 = vpow.pop %v1553
    %v1555 = vmul.f32 %v1549, 1.442695
    %v1556 = vpow.pop %v1555
    %v1557 = vmul.f32 %v1550, 1.442695
    %v1558 = vpow.pop %v1557
    %v1559 = vsel %vm702, %v1552, 0.0
    %1560 = vadd.xlane.f32.xlu0 %v1559
    %v1561 = vpop.xlane.xlu0 %1560
    %v1562 = vsel %vm702, %v1554, 0.0
    %1563 = vadd.xlane.f32.xlu0 %v1562
    %v1564 = vpop.xlane.xlu0 %1563
    %v1565 = vsel %vm702, %v1556, 0.0
    %1566 = vadd.xlane.f32.xlu0 %v1565
    %v1567 = vpop.xlane.xlu0 %1566
    %v1568 = vsel %vm702, %v1558, 0.0
    %1569 = vadd.xlane.f32.xlu0 %v1568
    %v1570 = vpop.xlane.xlu0 %1569
    %v1571 = vrcp.pop %v1561
    %v1572 = vrcp.pop %v1564
    %v1573 = vrcp.pop %v1567
    %v1574 = vrcp.pop %v1570
    %v1575 = vmul.f32 %v1552, %v1571
    %v1576 = vmul.f32 %v1554, %v1572
    %v1577 = vmul.f32 %v1556, %v1573
    %v1578 = vmul.f32 %v1558, %v1574
    %v1579 = vpack.c.bf16 %v1576, %v1575
    %v1580 = vpack.c.bf16 %v1578, %v1577
    %1581 = vrot.lane.b32.xlu0 %v684, 32
    %v1582 = vpop.permute.xlu0 %1581
    %1583 = vrot.lane.b32.xlu0 %v685, 32
    %v1584 = vpop.permute.xlu0 %1583
    %v1588 = vsel %vm702, %v1579, 0
    %v1591 = vsel %vm702, %v1580, 0
    %1593 = vmatprep.subr.bf16.mxu0 0
    %1594 = vmatpush1.bf16.msra.mxu0 0
    %1595 = vmatprep.subr.bf16.mxu0 0
    %1596 = vmatpush1.bf16.msra.mxu0 0
    %1597 = vmatprep.subr.bf16.mxu0 0
    %1598 = vmatpush1.bf16.msra.mxu0 0
    %1599 = vmatprep.subr.bf16.mxu0 0
    %1600 = vmatpush1.bf16.msra.mxu0 0
    %1601 = vmatprep.subr.bf16.mxu0 0
    %1602 = vmatpush1.bf16.msra.mxu0 0
    %1603 = vmatprep.subr.bf16.mxu0 0
    %1604 = vmatpush1.bf16.msra.mxu0 0
    %1605 = vmatprep.subr.bf16.mxu0 0
    %1606 = vmatpush1.bf16.msra.mxu0 %v1584
    %1607 = vmatprep.subr.bf16.mxu0 0
    %1608 = vmatpush1.bf16.msra.mxu0 %v1582
    %1609 = vmatprep.subr.bf16.mxu0 0
    %1610 = vmatpush2.bf16.msra.mxu0 0
    %1611 = vmatprep.subr.bf16.mxu0 0
    %1612 = vmatpush2.bf16.msra.mxu0 0
    %1613 = vmatprep.subr.bf16.mxu0 0
    %1614 = vmatpush2.bf16.msra.mxu0 0
    %1615 = vmatprep.subr.bf16.mxu0 0
    %1616 = vmatpush2.bf16.msra.mxu0 0
    %1617 = vmatprep.subr.bf16.mxu0 0
    %1618 = vmatpush2.bf16.msra.mxu0 0
    %1619 = vmatprep.subr.bf16.mxu0 0
    %1620 = vmatpush2.bf16.msra.mxu0 0
    %1621 = vmatprep.subr.bf16.mxu0 0
    %1622 = vmatpush2.bf16.msra.mxu0 0
    %1623 = vmatprep.subr.bf16.mxu0 0
    %1624 = vmatpush2.bf16.msra.mxu0 0
    %1625 = vmatprep.mubr.bf16.mxu0 0
    %1626 = vmatmul.mubr.bf16.gmra.mxu0 %v1588
    %v1627 = vpop.f32.mrf.mxu0
    %v1628 = vadd.f32 0.0, %v1627
    %v1629 = vpop.f32.mrf.mxu0
    %v1630 = vpop.f32.mrf.mxu0
    %v1631 = vadd.f32 0.0, %v1630
    %v1632 = vpop.f32.mrf.mxu0
    %1633 = vmatprep.mubr.bf16.mxu0 0
    %1634 = vmatmul.mubr.bf16.gmra.mxu0 %v1591
    %v1635 = vpop.f32.mrf.mxu0
    %v1636 = vadd.f32 0.0, %v1635
    %v1637 = vpop.f32.mrf.mxu0
    %v1638 = vpop.f32.mrf.mxu0
    %v1639 = vadd.f32 0.0, %v1638
    %v1640 = vpop.f32.mrf.mxu0
    %1641 = vdwg.mxu0
    %v1642 = vpack.c.bf16 %v1631, %v1628
    %v1643 = vpack.c.bf16 %v1639, %v1636
    %v1648 = vunpack.c.l.b16 %v698
    %v1649 = vunpack.c.l.b16 %v699
    %v1650 = vunpack.c.l.b16 %v700
    %v1651 = vunpack.c.l.b16 %v701
    %v1652 = vpack.c.b16 %v1649, %v1648
    %v1653 = vpack.c.b16 %v1651, %v1650
    %v1657 = vsel %vm702, %v1642, 0
    %v1660 = vsel %vm702, %v1643, 0
    %1662 = vmatprep.subr.bf16.mxu0 0
    %1663 = vmatpush1.bf16.msra.mxu0 0
    %1664 = vmatprep.subr.bf16.mxu0 0
    %1665 = vmatpush1.bf16.msra.mxu0 0
    %1666 = vmatprep.subr.bf16.mxu0 0
    %1667 = vmatpush1.bf16.msra.mxu0 0
    %1668 = vmatprep.subr.bf16.mxu0 0
    %1669 = vmatpush1.bf16.msra.mxu0 0
    %1670 = vmatprep.subr.bf16.mxu0 0
    %1671 = vmatpush1.bf16.msra.mxu0 0
    %1672 = vmatprep.subr.bf16.mxu0 0
    %1673 = vmatpush1.bf16.msra.mxu0 0
    %1674 = vmatprep.subr.bf16.mxu0 0
    %1675 = vmatpush1.bf16.msra.mxu0 %v1653
    %1676 = vmatprep.subr.bf16.mxu0 0
    %1677 = vmatpush1.bf16.msra.mxu0 %v1652
    %1678 = vmatprep.subr.bf16.mxu0 0
    %1679 = vmatpush2.bf16.msra.mxu0 0
    %1680 = vmatprep.subr.bf16.mxu0 0
    %1681 = vmatpush2.bf16.msra.mxu0 0
    %1682 = vmatprep.subr.bf16.mxu0 0
    %1683 = vmatpush2.bf16.msra.mxu0 0
    %1684 = vmatprep.subr.bf16.mxu0 0
    %1685 = vmatpush2.bf16.msra.mxu0 0
    %1686 = vmatprep.subr.bf16.mxu0 0
    %1687 = vmatpush2.bf16.msra.mxu0 0
    %1688 = vmatprep.subr.bf16.mxu0 0
    %1689 = vmatpush2.bf16.msra.mxu0 0
    %1690 = vmatprep.subr.bf16.mxu0 0
    %1691 = vmatpush2.bf16.msra.mxu0 0
    %1692 = vmatprep.subr.bf16.mxu0 0
    %1693 = vmatpush2.bf16.msra.mxu0 0
    %1694 = vmatprep.mubr.bf16.mxu0 0
    %1695 = vmatmul.mubr.bf16.gmra.mxu0 %v1657
    %v1696 = vpop.f32.mrf.mxu0
    %v1697 = vadd.f32 0.0, %v1696
    %v1698 = vpop.f32.mrf.mxu0
    %v1699 = vpop.f32.mrf.mxu0
    %v1700 = vadd.f32 0.0, %v1699
    %v1701 = vpop.f32.mrf.mxu0
    %1702 = vmatprep.mubr.bf16.mxu0 0
    %1703 = vmatmul.mubr.bf16.gmra.mxu0 %v1660
    %v1704 = vpop.f32.mrf.mxu0
    %v1705 = vadd.f32 0.0, %v1704
    %v1706 = vpop.f32.mrf.mxu0
    %v1707 = vpop.f32.mrf.mxu0
    %v1708 = vadd.f32 0.0, %v1707
    %v1709 = vpop.f32.mrf.mxu0
    %1710 = vdwg.mxu0
    %v1711 = vadd.f32 %v1454, %v1697
    %v1712 = vadd.f32 %v1455, %v1700
    %v1713 = vadd.f32 %v1456, %v1705
    %v1714 = vadd.f32 %v1457, %v1708
    %v1715 = vadd.f32 %v171, %v1711
    %v1716 = vadd.f32 %v172, %v1712
    %v1717 = vadd.f32 %v173, %v1713
    %v1718 = vadd.f32 %v174, %v1714
    %v1719 = vmul.f32 %v1715, %v1715
    %v1720 = vmul.f32 %v1716, %v1716
    %v1721 = vmul.f32 %v1717, %v1717
    %v1722 = vmul.f32 %v1718, %v1718
    %1723 = vadd.xlane.f32.xlu0 %v1719
    %v1724 = vpop.xlane.xlu0 %1723
    %1725 = vadd.xlane.f32.xlu0 %v1720
    %v1726 = vpop.xlane.xlu0 %1725
    %1727 = vadd.xlane.f32.xlu0 %v1721
    %v1728 = vpop.xlane.xlu0 %1727
    %1729 = vadd.xlane.f32.xlu0 %v1722
    %v1730 = vpop.xlane.xlu0 %1729
    %v1731 = vmul.f32 %v1724, %v217
    %v1732 = vmul.f32 %v1726, %v217
    %v1733 = vmul.f32 %v1728, %v217
    %v1734 = vmul.f32 %v1730, %v217
    %v1735 = vadd.f32 %v1731, 1e-06
    %v1736 = vadd.f32 %v1732, 1e-06
    %v1737 = vadd.f32 %v1733, 1e-06
    %v1738 = vadd.f32 %v1734, 1e-06
    %v1739 = vrsqrt.pop %v1735
    %v1740 = vrsqrt.pop %v1736
    %v1741 = vrsqrt.pop %v1737
    %v1742 = vrsqrt.pop %v1738
    %v1743 = vmul.f32 %v1715, %v1739
    %v1744 = vmul.f32 %v1716, %v1740
    %v1745 = vmul.f32 %v1717, %v1741
    %v1746 = vmul.f32 %v1718, %v1742
    %v1747 = vlaneseq
    %v1748 = vshrl.u32 %v1747, 7
    %v1749 = vsub.s32 1, %v1748
    %v1750 = vrot.slane %v188, %v1749
    %v1751 = vmul.f32 %v1743, %v1750
    %v1752 = vmul.f32 %v1744, %v1750
    %v1753 = vmul.f32 %v1745, %v1750
    %v1754 = vmul.f32 %v1746, %v1750
    %v1755 = vpack.c.bf16 %v1752, %v1751
    %v1756 = vpack.c.bf16 %v1754, %v1753
    %v1757 = vld [vmem:[#allocation14] sm:$0xff]
    %v1758 = vld [vmem:[#allocation14 + $0x8] sm:$0xff]
    %v1759 = vld [vmem:[#allocation14 + $0x10] sm:$0xff]
    %v1760 = vld [vmem:[#allocation14 + $0x18] sm:$0xff]
    %v1761 = vld [vmem:[#allocation14 + $0x20] sm:$0xff]
    %v1762 = vld [vmem:[#allocation14 + $0x28] sm:$0xff]
    %v1763 = vld [vmem:[#allocation14 + $0x30] sm:$0xff]
    %v1764 = vld [vmem:[#allocation14 + $0x38] sm:$0xff]
    %v1765 = vld [vmem:[#allocation14 + $0x40] sm:$0xff]
    %v1766 = vld [vmem:[#allocation14 + $0x48] sm:$0xff]
    %v1767 = vld [vmem:[#allocation14 + $0x50] sm:$0xff]
    %v1768 = vld [vmem:[#allocation14 + $0x58] sm:$0xff]
    %v1769 = vld [vmem:[#allocation14 + $0x60] sm:$0xff]
    %v1770 = vld [vmem:[#allocation14 + $0x68] sm:$0xff]
    %v1771 = vld [vmem:[#allocation14 + $0x70] sm:$0xff]
    %v1772 = vld [vmem:[#allocation14 + $0x78] sm:$0xff]
    %v1773 = vld [vmem:[#allocation14 + $0x80] sm:$0xff]
    %v1774 = vld [vmem:[#allocation14 + $0x88] sm:$0xff]
    %v1775 = vld [vmem:[#allocation14 + $0x90] sm:$0xff]
    %v1776 = vld [vmem:[#allocation14 + $0x98] sm:$0xff]
    %v1777 = vld [vmem:[#allocation14 + $0xa0] sm:$0xff]
    %v1778 = vld [vmem:[#allocation14 + $0xa8] sm:$0xff]
    %v1779 = vld [vmem:[#allocation14 + $0xb0] sm:$0xff]
    %v1780 = vld [vmem:[#allocation14 + $0xb8] sm:$0xff]
    %v1781 = vld [vmem:[#allocation14 + $0xc0] sm:$0xff]
    %v1782 = vld [vmem:[#allocation14 + $0xc8] sm:$0xff]
    %v1783 = vld [vmem:[#allocation14 + $0xd0] sm:$0xff]
    %v1784 = vld [vmem:[#allocation14 + $0xd8] sm:$0xff]
    %v1785 = vld [vmem:[#allocation14 + $0xe0] sm:$0xff]
    %v1786 = vld [vmem:[#allocation14 + $0xe8] sm:$0xff]
    %v1787 = vld [vmem:[#allocation14 + $0xf0] sm:$0xff]
    %v1788 = vld [vmem:[#allocation14 + $0xf8] sm:$0xff]
    %v1789 = vld [vmem:[#allocation14 + $0x100] sm:$0xff]
    %v1790 = vld [vmem:[#allocation14 + $0x108] sm:$0xff]
    %v1791 = vld [vmem:[#allocation14 + $0x110] sm:$0xff]
    %v1792 = vld [vmem:[#allocation14 + $0x118] sm:$0xff]
    %v1793 = vld [vmem:[#allocation14 + $0x120] sm:$0xff]
    %v1794 = vld [vmem:[#allocation14 + $0x128] sm:$0xff]
    %v1795 = vld [vmem:[#allocation14 + $0x130] sm:$0xff]
    %v1796 = vld [vmem:[#allocation14 + $0x138] sm:$0xff]
    %v1797 = vld [vmem:[#allocation14 + $0x140] sm:$0xff]
    %v1798 = vld [vmem:[#allocation14 + $0x148] sm:$0xff]
    %v1799 = vld [vmem:[#allocation14 + $0x150] sm:$0xff]
    %v1800 = vld [vmem:[#allocation14 + $0x158] sm:$0xff]
    %v1801 = vld [vmem:[#allocation14 + $0x160] sm:$0xff]
    %v1802 = vld [vmem:[#allocation14 + $0x168] sm:$0xff]
    %v1803 = vld [vmem:[#allocation14 + $0x170] sm:$0xff]
    %v1804 = vld [vmem:[#allocation14 + $0x178] sm:$0xff]
    %v1805 = vld [vmem:[#allocation14 + $0x180] sm:$0xff]
    %v1806 = vld [vmem:[#allocation14 + $0x188] sm:$0xff]
    %v1807 = vld [vmem:[#allocation14 + $0x190] sm:$0xff]
    %v1808 = vld [vmem:[#allocation14 + $0x198] sm:$0xff]
    %v1809 = vld [vmem:[#allocation14 + $0x1a0] sm:$0xff]
    %v1810 = vld [vmem:[#allocation14 + $0x1a8] sm:$0xff]
    %v1811 = vld [vmem:[#allocation14 + $0x1b0] sm:$0xff]
    %v1812 = vld [vmem:[#allocation14 + $0x1b8] sm:$0xff]
    %v1813 = vld [vmem:[#allocation14 + $0x1c0] sm:$0xff]
    %v1814 = vld [vmem:[#allocation14 + $0x1c8] sm:$0xff]
    %v1815 = vld [vmem:[#allocation14 + $0x1d0] sm:$0xff]
    %v1816 = vld [vmem:[#allocation14 + $0x1d8] sm:$0xff]
    %v1817 = vld [vmem:[#allocation14 + $0x1e0] sm:$0xff]
    %v1818 = vld [vmem:[#allocation14 + $0x1e8] sm:$0xff]
    %v1819 = vld [vmem:[#allocation14 + $0x1f0] sm:$0xff]
    %v1820 = vld [vmem:[#allocation14 + $0x1f8] sm:$0xff]
    %v1885 = vunpack.c.l.b16 %v1757
    %v1886 = vunpack.c.h.b16 %v1757
    %v1887 = vunpack.c.l.b16 %v1758
    %v1888 = vunpack.c.h.b16 %v1758
    %v1889 = vunpack.c.l.b16 %v1759
    %v1890 = vunpack.c.h.b16 %v1759
    %v1891 = vunpack.c.l.b16 %v1760
    %v1892 = vunpack.c.h.b16 %v1760
    %v1893 = vunpack.c.l.b16 %v1761
    %v1894 = vunpack.c.h.b16 %v1761
    %v1895 = vunpack.c.l.b16 %v1762
    %v1896 = vunpack.c.h.b16 %v1762
    %v1897 = vunpack.c.l.b16 %v1763
    %v1898 = vunpack.c.h.b16 %v1763
    %v1899 = vunpack.c.l.b16 %v1764
    %v1900 = vunpack.c.h.b16 %v1764
    %v1901 = vunpack.c.l.b16 %v1765
    %v1902 = vunpack.c.h.b16 %v1765
    %v1903 = vunpack.c.l.b16 %v1766
    %v1904 = vunpack.c.h.b16 %v1766
    %v1905 = vunpack.c.l.b16 %v1767
    %v1906 = vunpack.c.h.b16 %v1767
    %v1907 = vunpack.c.l.b16 %v1768
    %v1908 = vunpack.c.h.b16 %v1768
    %v1909 = vunpack.c.l.b16 %v1769
    %v1910 = vunpack.c.h.b16 %v1769
    %v1911 = vunpack.c.l.b16 %v1770
    %v1912 = vunpack.c.h.b16 %v1770
    %v1913 = vunpack.c.l.b16 %v1771
    %v1914 = vunpack.c.h.b16 %v1771
    %v1915 = vunpack.c.l.b16 %v1772
    %v1916 = vunpack.c.h.b16 %v1772
    %v1917 = vunpack.c.l.b16 %v1773
    %v1918 = vunpack.c.h.b16 %v1773
    %v1919 = vunpack.c.l.b16 %v1774
    %v1920 = vunpack.c.h.b16 %v1774
    %v1921 = vunpack.c.l.b16 %v1775
    %v1922 = vunpack.c.h.b16 %v1775
    %v1923 = vunpack.c.l.b16 %v1776
    %v1924 = vunpack.c.h.b16 %v1776
    %v1925 = vunpack.c.l.b16 %v1777
    %v1926 = vunpack.c.h.b16 %v1777
    %v1927 = vunpack.c.l.b16 %v1778
    %v1928 = vunpack.c.h.b16 %v1778
    %v1929 = vunpack.c.l.b16 %v1779
    %v1930 = vunpack.c.h.b16 %v1779
    %v1931 = vunpack.c.l.b16 %v1780
    %v1932 = vunpack.c.h.b16 %v1780
    %v1933 = vunpack.c.l.b16 %v1781
    %v1934 = vunpack.c.h.b16 %v1781
    %v1935 = vunpack.c.l.b16 %v1782
    %v1936 = vunpack.c.h.b16 %v1782
    %v1937 = vunpack.c.l.b16 %v1783
    %v1938 = vunpack.c.h.b16 %v1783
    %v1939 = vunpack.c.l.b16 %v1784
    %v1940 = vunpack.c.h.b16 %v1784
    %v1941 = vunpack.c.l.b16 %v1785
    %v1942 = vunpack.c.h.b16 %v1785
    %v1943 = vunpack.c.l.b16 %v1786
    %v1944 = vunpack.c.h.b16 %v1786
    %v1945 = vunpack.c.l.b16 %v1787
    %v1946 = vunpack.c.h.b16 %v1787
    %v1947 = vunpack.c.l.b16 %v1788
    %v1948 = vunpack.c.h.b16 %v1788
    %v1949 = vunpack.c.l.b16 %v1789
    %v1950 = vunpack.c.h.b16 %v1789
    %v1951 = vunpack.c.l.b16 %v1790
    %v1952 = vunpack.c.h.b16 %v1790
    %v1953 = vunpack.c.l.b16 %v1791
    %v1954 = vunpack.c.h.b16 %v1791
    %v1955 = vunpack.c.l.b16 %v1792
    %v1956 = vunpack.c.h.b16 %v1792
    %v1957 = vunpack.c.l.b16 %v1793
    %v1958 = vunpack.c.h.b16 %v1793
    %v1959 = vunpack.c.l.b16 %v1794
    %v1960 = vunpack.c.h.b16 %v1794
    %v1961 = vunpack.c.l.b16 %v1795
    %v1962 = vunpack.c.h.b16 %v1795
    %v1963 = vunpack.c.l.b16 %v1796
    %v1964 = vunpack.c.h.b16 %v1796
    %v1965 = vunpack.c.l.b16 %v1797
    %v1966 = vunpack.c.h.b16 %v1797
    %v1967 = vunpack.c.l.b16 %v1798
    %v1968 = vunpack.c.h.b16 %v1798
    %v1969 = vunpack.c.l.b16 %v1799
    %v1970 = vunpack.c.h.b16 %v1799
    %v1971 = vunpack.c.l.b16 %v1800
    %v1972 = vunpack.c.h.b16 %v1800
    %v1973 = vunpack.c.l.b16 %v1801
    %v1974 = vunpack.c.h.b16 %v1801
    %v1975 = vunpack.c.l.b16 %v1802
    %v1976 = vunpack.c.h.b16 %v1802
    %v1977 = vunpack.c.l.b16 %v1803
    %v1978 = vunpack.c.h.b16 %v1803
    %v1979 = vunpack.c.l.b16 %v1804
    %v1980 = vunpack.c.h.b16 %v1804
    %v1981 = vunpack.c.l.b16 %v1805
    %v1982 = vunpack.c.h.b16 %v1805
    %v1983 = vunpack.c.l.b16 %v1806
    %v1984 = vunpack.c.h.b16 %v1806
    %v1985 = vunpack.c.l.b16 %v1807
    %v1986 = vunpack.c.h.b16 %v1807
    %v1987 = vunpack.c.l.b16 %v1808
    %v1988 = vunpack.c.h.b16 %v1808
    %v1989 = vunpack.c.l.b16 %v1809
    %v1990 = vunpack.c.h.b16 %v1809
    %v1991 = vunpack.c.l.b16 %v1810
    %v1992 = vunpack.c.h.b16 %v1810
    %v1993 = vunpack.c.l.b16 %v1811
    %v1994 = vunpack.c.h.b16 %v1811
    %v1995 = vunpack.c.l.b16 %v1812
    %v1996 = vunpack.c.h.b16 %v1812
    %v1997 = vunpack.c.l.b16 %v1813
    %v1998 = vunpack.c.h.b16 %v1813
    %v1999 = vunpack.c.l.b16 %v1814
    %v2000 = vunpack.c.h.b16 %v1814
    %v2001 = vunpack.c.l.b16 %v1815
    %v2002 = vunpack.c.h.b16 %v1815
    %v2003 = vunpack.c.l.b16 %v1816
    %v2004 = vunpack.c.h.b16 %v1816
    %v2005 = vunpack.c.l.b16 %v1817
    %v2006 = vunpack.c.h.b16 %v1817
    %v2007 = vunpack.c.l.b16 %v1818
    %v2008 = vunpack.c.h.b16 %v1818
    %v2009 = vunpack.c.l.b16 %v1819
    %v2010 = vunpack.c.h.b16 %v1819
    %v2011 = vunpack.c.l.b16 %v1820
    %v2012 = vunpack.c.h.b16 %v1820
    %v2013 = vpack.c.b16 %v1893, %v1885
    %v2014 = vpack.c.b16 %v1894, %v1886
    %v2015 = vpack.c.b16 %v1895, %v1887
    %v2016 = vpack.c.b16 %v1896, %v1888
    %v2017 = vpack.c.b16 %v1897, %v1889
    %v2018 = vpack.c.b16 %v1898, %v1890
    %v2019 = vpack.c.b16 %v1899, %v1891
    %v2020 = vpack.c.b16 %v1900, %v1892
    %v2021 = vpack.c.b16 %v1909, %v1901
    %v2022 = vpack.c.b16 %v1910, %v1902
    %v2023 = vpack.c.b16 %v1911, %v1903
    %v2024 = vpack.c.b16 %v1912, %v1904
    %v2025 = vpack.c.b16 %v1913, %v1905
    %v2026 = vpack.c.b16 %v1914, %v1906
    %v2027 = vpack.c.b16 %v1915, %v1907
    %v2028 = vpack.c.b16 %v1916, %v1908
    %v2029 = vpack.c.b16 %v1925, %v1917
    %v2030 = vpack.c.b16 %v1926, %v1918
    %v2031 = vpack.c.b16 %v1927, %v1919
    %v2032 = vpack.c.b16 %v1928, %v1920
    %v2033 = vpack.c.b16 %v1929, %v1921
    %v2034 = vpack.c.b16 %v1930, %v1922
    %v2035 = vpack.c.b16 %v1931, %v1923
    %v2036 = vpack.c.b16 %v1932, %v1924
    %v2037 = vpack.c.b16 %v1941, %v1933
    %v2038 = vpack.c.b16 %v1942, %v1934
    %v2039 = vpack.c.b16 %v1943, %v1935
    %v2040 = vpack.c.b16 %v1944, %v1936
    %v2041 = vpack.c.b16 %v1945, %v1937
    %v2042 = vpack.c.b16 %v1946, %v1938
    %v2043 = vpack.c.b16 %v1947, %v1939
    %v2044 = vpack.c.b16 %v1948, %v1940
    %v2045 = vpack.c.b16 %v1957, %v1949
    %v2046 = vpack.c.b16 %v1958, %v1950
    %v2047 = vpack.c.b16 %v1959, %v1951
    %v2048 = vpack.c.b16 %v1960, %v1952
    %v2049 = vpack.c.b16 %v1961, %v1953
    %v2050 = vpack.c.b16 %v1962, %v1954
    %v2051 = vpack.c.b16 %v1963, %v1955
    %v2052 = vpack.c.b16 %v1964, %v1956
    %v2053 = vpack.c.b16 %v1973, %v1965
    %v2054 = vpack.c.b16 %v1974, %v1966
    %v2055 = vpack.c.b16 %v1975, %v1967
    %v2056 = vpack.c.b16 %v1976, %v1968
    %v2057 = vpack.c.b16 %v1977, %v1969
    %v2058 = vpack.c.b16 %v1978, %v1970
    %v2059 = vpack.c.b16 %v1979, %v1971
    %v2060 = vpack.c.b16 %v1980, %v1972
    %v2061 = vpack.c.b16 %v1989, %v1981
    %v2062 = vpack.c.b16 %v1990, %v1982
    %v2063 = vpack.c.b16 %v1991, %v1983
    %v2064 = vpack.c.b16 %v1992, %v1984
    %v2065 = vpack.c.b16 %v1993, %v1985
    %v2066 = vpack.c.b16 %v1994, %v1986
    %v2067 = vpack.c.b16 %v1995, %v1987
    %v2068 = vpack.c.b16 %v1996, %v1988
    %v2069 = vpack.c.b16 %v2005, %v1997
    %v2070 = vpack.c.b16 %v2006, %v1998
    %v2071 = vpack.c.b16 %v2007, %v1999
    %v2072 = vpack.c.b16 %v2008, %v2000
    %v2073 = vpack.c.b16 %v2009, %v2001
    %v2074 = vpack.c.b16 %v2010, %v2002
    %v2075 = vpack.c.b16 %v2011, %v2003
    %v2076 = vpack.c.b16 %v2012, %v2004
    %2141 = vmatprep.subr.bf16.mxu0 %v2070
    %2142 = vmatpush1.bf16.msra.mxu0 %v2069
    %2143 = vmatprep.subr.bf16.mxu0 %v2062
    %2144 = vmatpush1.bf16.msra.mxu0 %v2061
    %2145 = vmatprep.subr.bf16.mxu0 %v2054
    %2146 = vmatpush1.bf16.msra.mxu0 %v2053
    %2147 = vmatprep.subr.bf16.mxu0 %v2046
    %2148 = vmatpush1.bf16.msra.mxu0 %v2045
    %2149 = vmatprep.subr.bf16.mxu0 %v2038
    %2150 = vmatpush1.bf16.msra.mxu0 %v2037
    %2151 = vmatprep.subr.bf16.mxu0 %v2030
    %2152 = vmatpush1.bf16.msra.mxu0 %v2029
    %2153 = vmatprep.subr.bf16.mxu0 %v2022
    %2154 = vmatpush1.bf16.msra.mxu0 %v2021
    %2155 = vmatprep.subr.bf16.mxu0 %v2014
    %2156 = vmatpush1.bf16.msra.mxu0 %v2013
    %2157 = vmatprep.subr.bf16.mxu0 0
    %2158 = vmatpush2.bf16.msra.mxu0 0
    %2159 = vmatprep.subr.bf16.mxu0 0
    %2160 = vmatpush2.bf16.msra.mxu0 0
    %2161 = vmatprep.subr.bf16.mxu0 0
    %2162 = vmatpush2.bf16.msra.mxu0 0
    %2163 = vmatprep.subr.bf16.mxu0 0
    %2164 = vmatpush2.bf16.msra.mxu0 0
    %2165 = vmatprep.subr.bf16.mxu0 0
    %2166 = vmatpush2.bf16.msra.mxu0 0
    %2167 = vmatprep.subr.bf16.mxu0 0
    %2168 = vmatpush2.bf16.msra.mxu0 0
    %2169 = vmatprep.subr.bf16.mxu0 0
    %2170 = vmatpush2.bf16.msra.mxu0 0
    %2171 = vmatprep.subr.bf16.mxu0 0
    %2172 = vmatpush2.bf16.msra.mxu0 0
    %2173 = vmatprep.mubr.bf16.mxu0 0
    %2174 = vmatmul.mubr.bf16.gmra.mxu0 %v1755
    %v2175 = vpop.f32.mrf.mxu0
    %v2176 = vadd.f32 0.0, %v2175
    %v2177 = vpop.f32.mrf.mxu0
    %v2178 = vadd.f32 0.0, %v2177
    %v2179 = vpop.f32.mrf.mxu0
    %v2180 = vadd.f32 0.0, %v2179
    %v2181 = vpop.f32.mrf.mxu0
    %v2182 = vadd.f32 0.0, %v2181
    %2183 = vmatprep.mubr.bf16.mxu0 0
    %2184 = vmatmul.mubr.bf16.gmra.mxu0 %v1756
    %v2185 = vpop.f32.mrf.mxu0
    %v2186 = vadd.f32 0.0, %v2185
    %v2187 = vpop.f32.mrf.mxu0
    %v2188 = vadd.f32 0.0, %v2187
    %v2189 = vpop.f32.mrf.mxu0
    %v2190 = vadd.f32 0.0, %v2189
    %v2191 = vpop.f32.mrf.mxu0
    %v2192 = vadd.f32 0.0, %v2191
    %2193 = vdwg.mxu0
    %2194 = vmatprep.subr.bf16.mxu0 %v2072
    %2195 = vmatpush1.bf16.msra.mxu0 %v2071
    %2196 = vmatprep.subr.bf16.mxu0 %v2064
    %2197 = vmatpush1.bf16.msra.mxu0 %v2063
    %2198 = vmatprep.subr.bf16.mxu0 %v2056
    %2199 = vmatpush1.bf16.msra.mxu0 %v2055
    %2200 = vmatprep.subr.bf16.mxu0 %v2048
    %2201 = vmatpush1.bf16.msra.mxu0 %v2047
    %2202 = vmatprep.subr.bf16.mxu0 %v2040
    %2203 = vmatpush1.bf16.msra.mxu0 %v2039
    %2204 = vmatprep.subr.bf16.mxu0 %v2032
    %2205 = vmatpush1.bf16.msra.mxu0 %v2031
    %2206 = vmatprep.subr.bf16.mxu0 %v2024
    %2207 = vmatpush1.bf16.msra.mxu0 %v2023
    %2208 = vmatprep.subr.bf16.mxu0 %v2016
    %2209 = vmatpush1.bf16.msra.mxu0 %v2015
    %2210 = vmatprep.subr.bf16.mxu0 0
    %2211 = vmatpush2.bf16.msra.mxu0 0
    %2212 = vmatprep.subr.bf16.mxu0 0
    %2213 = vmatpush2.bf16.msra.mxu0 0
    %2214 = vmatprep.subr.bf16.mxu0 0
    %2215 = vmatpush2.bf16.msra.mxu0 0
    %2216 = vmatprep.subr.bf16.mxu0 0
    %2217 = vmatpush2.bf16.msra.mxu0 0
    %2218 = vmatprep.subr.bf16.mxu0 0
    %2219 = vmatpush2.bf16.msra.mxu0 0
    %2220 = vmatprep.subr.bf16.mxu0 0
    %2221 = vmatpush2.bf16.msra.mxu0 0
    %2222 = vmatprep.subr.bf16.mxu0 0
    %2223 = vmatpush2.bf16.msra.mxu0 0
    %2224 = vmatprep.subr.bf16.mxu0 0
    %2225 = vmatpush2.bf16.msra.mxu0 0
    %2226 = vmatprep.mubr.bf16.mxu0 0
    %2227 = vmatmul.mubr.bf16.gmra.mxu0 %v1755
    %v2228 = vpop.f32.mrf.mxu0
    %v2229 = vadd.f32 0.0, %v2228
    %v2230 = vpop.f32.mrf.mxu0
    %v2231 = vadd.f32 0.0, %v2230
    %v2232 = vpop.f32.mrf.mxu0
    %v2233 = vadd.f32 0.0, %v2232
    %v2234 = vpop.f32.mrf.mxu0
    %v2235 = vadd.f32 0.0, %v2234
    %2236 = vmatprep.mubr.bf16.mxu0 0
    %2237 = vmatmul.mubr.bf16.gmra.mxu0 %v1756
    %v2238 = vpop.f32.mrf.mxu0
    %v2239 = vadd.f32 0.0, %v2238
    %v2240 = vpop.f32.mrf.mxu0
    %v2241 = vadd.f32 0.0, %v2240
    %v2242 = vpop.f32.mrf.mxu0
    %v2243 = vadd.f32 0.0, %v2242
    %v2244 = vpop.f32.mrf.mxu0
    %v2245 = vadd.f32 0.0, %v2244
    %2246 = vdwg.mxu0
    %2247 = vmatprep.subr.bf16.mxu0 %v2074
    %2248 = vmatpush1.bf16.msra.mxu0 %v2073
    %2249 = vmatprep.subr.bf16.mxu0 %v2066
    %2250 = vmatpush1.bf16.msra.mxu0 %v2065
    %2251 = vmatprep.subr.bf16.mxu0 %v2058
    %2252 = vmatpush1.bf16.msra.mxu0 %v2057
    %2253 = vmatprep.subr.bf16.mxu0 %v2050
    %2254 = vmatpush1.bf16.msra.mxu0 %v2049
    %2255 = vmatprep.subr.bf16.mxu0 %v2042
    %2256 = vmatpush1.bf16.msra.mxu0 %v2041
    %2257 = vmatprep.subr.bf16.mxu0 %v2034
    %2258 = vmatpush1.bf16.msra.mxu0 %v2033
    %2259 = vmatprep.subr.bf16.mxu0 %v2026
    %2260 = vmatpush1.bf16.msra.mxu0 %v2025
    %2261 = vmatprep.subr.bf16.mxu0 %v2018
    %2262 = vmatpush1.bf16.msra.mxu0 %v2017
    %2263 = vmatprep.subr.bf16.mxu0 0
    %2264 = vmatpush2.bf16.msra.mxu0 0
    %2265 = vmatprep.subr.bf16.mxu0 0
    %2266 = vmatpush2.bf16.msra.mxu0 0
    %2267 = vmatprep.subr.bf16.mxu0 0
    %2268 = vmatpush2.bf16.msra.mxu0 0
    %2269 = vmatprep.subr.bf16.mxu0 0
    %2270 = vmatpush2.bf16.msra.mxu0 0
    %2271 = vmatprep.subr.bf16.mxu0 0
    %2272 = vmatpush2.bf16.msra.mxu0 0
    %2273 = vmatprep.subr.bf16.mxu0 0
    %2274 = vmatpush2.bf16.msra.mxu0 0
    %2275 = vmatprep.subr.bf16.mxu0 0
    %2276 = vmatpush2.bf16.msra.mxu0 0
    %2277 = vmatprep.subr.bf16.mxu0 0
    %2278 = vmatpush2.bf16.msra.mxu0 0
    %2279 = vmatprep.mubr.bf16.mxu0 0
    %2280 = vmatmul.mubr.bf16.gmra.mxu0 %v1755
    %v2281 = vpop.f32.mrf.mxu0
    %v2282 = vadd.f32 0.0, %v2281
    %v2283 = vpop.f32.mrf.mxu0
    %v2284 = vadd.f32 0.0, %v2283
    %v2285 = vpop.f32.mrf.mxu0
    %v2286 = vadd.f32 0.0, %v2285
    %v2287 = vpop.f32.mrf.mxu0
    %v2288 = vadd.f32 0.0, %v2287
    %2289 = vmatprep.mubr.bf16.mxu0 0
    %2290 = vmatmul.mubr.bf16.gmra.mxu0 %v1756
    %v2291 = vpop.f32.mrf.mxu0
    %v2292 = vadd.f32 0.0, %v2291
    %v2293 = vpop.f32.mrf.mxu0
    %v2294 = vadd.f32 0.0, %v2293
    %v2295 = vpop.f32.mrf.mxu0
    %v2296 = vadd.f32 0.0, %v2295
    %v2297 = vpop.f32.mrf.mxu0
    %v2298 = vadd.f32 0.0, %v2297
    %2299 = vdwg.mxu0
    %2300 = vmatprep.subr.bf16.mxu0 %v2076
    %2301 = vmatpush1.bf16.msra.mxu0 %v2075
    %2302 = vmatprep.subr.bf16.mxu0 %v2068
    %2303 = vmatpush1.bf16.msra.mxu0 %v2067
    %2304 = vmatprep.subr.bf16.mxu0 %v2060
    %2305 = vmatpush1.bf16.msra.mxu0 %v2059
    %2306 = vmatprep.subr.bf16.mxu0 %v2052
    %2307 = vmatpush1.bf16.msra.mxu0 %v2051
    %2308 = vmatprep.subr.bf16.mxu0 %v2044
    %2309 = vmatpush1.bf16.msra.mxu0 %v2043
    %2310 = vmatprep.subr.bf16.mxu0 %v2036
    %2311 = vmatpush1.bf16.msra.mxu0 %v2035
    %2312 = vmatprep.subr.bf16.mxu0 %v2028
    %2313 = vmatpush1.bf16.msra.mxu0 %v2027
    %2314 = vmatprep.subr.bf16.mxu0 %v2020
    %2315 = vmatpush1.bf16.msra.mxu0 %v2019
    %2316 = vmatprep.subr.bf16.mxu0 0
    %2317 = vmatpush2.bf16.msra.mxu0 0
    %2318 = vmatprep.subr.bf16.mxu0 0
    %2319 = vmatpush2.bf16.msra.mxu0 0
    %2320 = vmatprep.subr.bf16.mxu0 0
    %2321 = vmatpush2.bf16.msra.mxu0 0
    %2322 = vmatprep.subr.bf16.mxu0 0
    %2323 = vmatpush2.bf16.msra.mxu0 0
    %2324 = vmatprep.subr.bf16.mxu0 0
    %2325 = vmatpush2.bf16.msra.mxu0 0
    %2326 = vmatprep.subr.bf16.mxu0 0
    %2327 = vmatpush2.bf16.msra.mxu0 0
    %2328 = vmatprep.subr.bf16.mxu0 0
    %2329 = vmatpush2.bf16.msra.mxu0 0
    %2330 = vmatprep.subr.bf16.mxu0 0
    %2331 = vmatpush2.bf16.msra.mxu0 0
    %2332 = vmatprep.mubr.bf16.mxu0 0
    %2333 = vmatmul.mubr.bf16.gmra.mxu0 %v1755
    %v2334 = vpop.f32.mrf.mxu0
    %v2335 = vadd.f32 0.0, %v2334
    %v2336 = vpop.f32.mrf.mxu0
    %v2337 = vadd.f32 0.0, %v2336
    %v2338 = vpop.f32.mrf.mxu0
    %v2339 = vadd.f32 0.0, %v2338
    %v2340 = vpop.f32.mrf.mxu0
    %v2341 = vadd.f32 0.0, %v2340
    %2342 = vmatprep.mubr.bf16.mxu0 0
    %2343 = vmatmul.mubr.bf16.gmra.mxu0 %v1756
    %v2344 = vpop.f32.mrf.mxu0
    %v2345 = vadd.f32 0.0, %v2344
    %v2346 = vpop.f32.mrf.mxu0
    %v2347 = vadd.f32 0.0, %v2346
    %v2348 = vpop.f32.mrf.mxu0
    %v2349 = vadd.f32 0.0, %v2348
    %v2350 = vpop.f32.mrf.mxu0
    %v2351 = vadd.f32 0.0, %v2350
    %2352 = vdwg.mxu0
    %v2353 = vxor.u32 %v2176, 2147483648
    %v2354 = vxor.u32 %v2178, 2147483648
    %v2355 = vxor.u32 %v2229, 2147483648
    %v2356 = vxor.u32 %v2231, 2147483648
    %v2357 = vxor.u32 %v2180, 2147483648
    %v2358 = vxor.u32 %v2182, 2147483648
    %v2359 = vxor.u32 %v2233, 2147483648
    %v2360 = vxor.u32 %v2235, 2147483648
    %v2361 = vxor.u32 %v2186, 2147483648
    %v2362 = vxor.u32 %v2188, 2147483648
    %v2363 = vxor.u32 %v2239, 2147483648
    %v2364 = vxor.u32 %v2241, 2147483648
    %v2365 = vxor.u32 %v2190, 2147483648
    %v2366 = vxor.u32 %v2192, 2147483648
    %v2367 = vxor.u32 %v2243, 2147483648
    %v2368 = vxor.u32 %v2245, 2147483648
    %v2369 = vmul.f32 %v2353, 1.442695
    %v2370 = vpow.pop %v2369
    %v2371 = vmul.f32 %v2354, 1.442695
    %v2372 = vpow.pop %v2371
    %v2373 = vmul.f32 %v2355, 1.442695
    %v2374 = vpow.pop %v2373
    %v2375 = vmul.f32 %v2356, 1.442695
    %v2376 = vpow.pop %v2375
    %v2377 = vmul.f32 %v2357, 1.442695
    %v2378 = vpow.pop %v2377
    %v2379 = vmul.f32 %v2358, 1.442695
    %v2380 = vpow.pop %v2379
    %v2381 = vmul.f32 %v2359, 1.442695
    %v2382 = vpow.pop %v2381
    %v2383 = vmul.f32 %v2360, 1.442695
    %v2384 = vpow.pop %v2383
    %v2385 = vmul.f32 %v2361, 1.442695
    %v2386 = vpow.pop %v2385
    %v2387 = vmul.f32 %v2362, 1.442695
    %v2388 = vpow.pop %v2387
    %v2389 = vmul.f32 %v2363, 1.442695
    %v2390 = vpow.pop %v2389
    %v2391 = vmul.f32 %v2364, 1.442695
    %v2392 = vpow.pop %v2391
    %v2393 = vmul.f32 %v2365, 1.442695
    %v2394 = vpow.pop %v2393
    %v2395 = vmul.f32 %v2366, 1.442695
    %v2396 = vpow.pop %v2395
    %v2397 = vmul.f32 %v2367, 1.442695
    %v2398 = vpow.pop %v2397
    %v2399 = vmul.f32 %v2368, 1.442695
    %v2400 = vpow.pop %v2399
    %v2401 = vadd.f32 %v2370, 1.0
    %v2402 = vadd.f32 %v2372, 1.0
    %v2403 = vadd.f32 %v2374, 1.0
    %v2404 = vadd.f32 %v2376, 1.0
    %v2405 = vadd.f32 %v2378, 1.0
    %v2406 = vadd.f32 %v2380, 1.0
    %v2407 = vadd.f32 %v2382, 1.0
    %v2408 = vadd.f32 %v2384, 1.0
    %v2409 = vadd.f32 %v2386, 1.0
    %v2410 = vadd.f32 %v2388, 1.0
    %v2411 = vadd.f32 %v2390, 1.0
    %v2412 = vadd.f32 %v2392, 1.0
    %v2413 = vadd.f32 %v2394, 1.0
    %v2414 = vadd.f32 %v2396, 1.0
    %v2415 = vadd.f32 %v2398, 1.0
    %v2416 = vadd.f32 %v2400, 1.0
    %v2417 = vrcp.pop %v2401
    %v2418 = vmul.f32 1.0, %v2417
    %v2419 = vrcp.pop %v2402
    %v2420 = vmul.f32 1.0, %v2419
    %v2421 = vrcp.pop %v2403
    %v2422 = vmul.f32 1.0, %v2421
    %v2423 = vrcp.pop %v2404
    %v2424 = vmul.f32 1.0, %v2423
    %v2425 = vrcp.pop %v2405
    %v2426 = vmul.f32 1.0, %v2425
    %v2427 = vrcp.pop %v2406
    %v2428 = vmul.f32 1.0, %v2427
    %v2429 = vrcp.pop %v2407
    %v2430 = vmul.f32 1.0, %v2429
    %v2431 = vrcp.pop %v2408
    %v2432 = vmul.f32 1.0, %v2431
    %v2433 = vrcp.pop %v2409
    %v2434 = vmul.f32 1.0, %v2433
    %v2435 = vrcp.pop %v2410
    %v2436 = vmul.f32 1.0, %v2435
    %v2437 = vrcp.pop %v2411
    %v2438 = vmul.f32 1.0, %v2437
    %v2439 = vrcp.pop %v2412
    %v2440 = vmul.f32 1.0, %v2439
    %v2441 = vrcp.pop %v2413
    %v2442 = vmul.f32 1.0, %v2441
    %v2443 = vrcp.pop %v2414
    %v2444 = vmul.f32 1.0, %v2443
    %v2445 = vrcp.pop %v2415
    %v2446 = vmul.f32 1.0, %v2445
    %v2447 = vrcp.pop %v2416
    %v2448 = vmul.f32 1.0, %v2447
    %v2449 = vmul.f32 %v2176, %v2418
    %v2450 = vmul.f32 %v2178, %v2420
    %v2451 = vmul.f32 %v2229, %v2422
    %v2452 = vmul.f32 %v2231, %v2424
    %v2453 = vmul.f32 %v2180, %v2426
    %v2454 = vmul.f32 %v2182, %v2428
    %v2455 = vmul.f32 %v2233, %v2430
    %v2456 = vmul.f32 %v2235, %v2432
    %v2457 = vmul.f32 %v2186, %v2434
    %v2458 = vmul.f32 %v2188, %v2436
    %v2459 = vmul.f32 %v2239, %v2438
    %v2460 = vmul.f32 %v2241, %v2440
    %v2461 = vmul.f32 %v2190, %v2442
    %v2462 = vmul.f32 %v2192, %v2444
    %v2463 = vmul.f32 %v2243, %v2446
    %v2464 = vmul.f32 %v2245, %v2448
    %v2465 = vmul.f32 %v2449, %v2282
    %v2466 = vmul.f32 %v2450, %v2284
    %v2467 = vmul.f32 %v2451, %v2335
    %v2468 = vmul.f32 %v2452, %v2337
    %v2469 = vmul.f32 %v2453, %v2286
    %v2470 = vmul.f32 %v2454, %v2288
    %v2471 = vmul.f32 %v2455, %v2339
    %v2472 = vmul.f32 %v2456, %v2341
    %v2473 = vmul.f32 %v2457, %v2292
    %v2474 = vmul.f32 %v2458, %v2294
    %v2475 = vmul.f32 %v2459, %v2345
    %v2476 = vmul.f32 %v2460, %v2347
    %v2477 = vmul.f32 %v2461, %v2296
    %v2478 = vmul.f32 %v2462, %v2298
    %v2479 = vmul.f32 %v2463, %v2349
    %v2480 = vmul.f32 %v2464, %v2351
    %v2481 = vpack.c.bf16 %v2469, %v2465
    %v2482 = vpack.c.bf16 %v2470, %v2466
    %v2483 = vpack.c.bf16 %v2471, %v2467
    %v2484 = vpack.c.bf16 %v2472, %v2468
    %v2485 = vpack.c.bf16 %v2477, %v2473
    %v2486 = vpack.c.bf16 %v2478, %v2474
    %v2487 = vpack.c.bf16 %v2479, %v2475
    %v2488 = vpack.c.bf16 %v2480, %v2476
    %v2489 = vld [vmem:[#allocation16] sm:$0xf]
    %v2490 = vld [vmem:[#allocation16 + $0x4] sm:$0xf]
    %v2491 = vld [vmem:[#allocation16 + $0x8] sm:$0xf]
    %v2492 = vld [vmem:[#allocation16 + $0xc] sm:$0xf]
    %v2493 = vld [vmem:[#allocation16 + $0x10] sm:$0xf]
    %v2494 = vld [vmem:[#allocation16 + $0x14] sm:$0xf]
    %v2495 = vld [vmem:[#allocation16 + $0x18] sm:$0xf]
    %v2496 = vld [vmem:[#allocation16 + $0x1c] sm:$0xf]
    %v2497 = vld [vmem:[#allocation16 + $0x20] sm:$0xf]
    %v2498 = vld [vmem:[#allocation16 + $0x24] sm:$0xf]
    %v2499 = vld [vmem:[#allocation16 + $0x28] sm:$0xf]
    %v2500 = vld [vmem:[#allocation16 + $0x2c] sm:$0xf]
    %v2501 = vld [vmem:[#allocation16 + $0x30] sm:$0xf]
    %v2502 = vld [vmem:[#allocation16 + $0x34] sm:$0xf]
    %v2503 = vld [vmem:[#allocation16 + $0x38] sm:$0xf]
    %v2504 = vld [vmem:[#allocation16 + $0x3c] sm:$0xf]
    %v2505 = vld [vmem:[#allocation16 + $0x40] sm:$0xf]
    %v2506 = vld [vmem:[#allocation16 + $0x44] sm:$0xf]
    %v2507 = vld [vmem:[#allocation16 + $0x48] sm:$0xf]
    %v2508 = vld [vmem:[#allocation16 + $0x4c] sm:$0xf]
    %v2509 = vld [vmem:[#allocation16 + $0x50] sm:$0xf]
    %v2510 = vld [vmem:[#allocation16 + $0x54] sm:$0xf]
    %v2511 = vld [vmem:[#allocation16 + $0x58] sm:$0xf]
    %v2512 = vld [vmem:[#allocation16 + $0x5c] sm:$0xf]
    %v2513 = vld [vmem:[#allocation16 + $0x60] sm:$0xf]
    %v2514 = vld [vmem:[#allocation16 + $0x64] sm:$0xf]
    %v2515 = vld [vmem:[#allocation16 + $0x68] sm:$0xf]
    %v2516 = vld [vmem:[#allocation16 + $0x6c] sm:$0xf]
    %v2517 = vld [vmem:[#allocation16 + $0x70] sm:$0xf]
    %v2518 = vld [vmem:[#allocation16 + $0x74] sm:$0xf]
    %v2519 = vld [vmem:[#allocation16 + $0x78] sm:$0xf]
    %v2520 = vld [vmem:[#allocation16 + $0x7c] sm:$0xf]
    %v2521 = vld [vmem:[#allocation16 + $0x80] sm:$0xf]
    %v2522 = vld [vmem:[#allocation16 + $0x84] sm:$0xf]
    %v2523 = vld [vmem:[#allocation16 + $0x88] sm:$0xf]
    %v2524 = vld [vmem:[#allocation16 + $0x8c] sm:$0xf]
    %v2525 = vld [vmem:[#allocation16 + $0x90] sm:$0xf]
    %v2526 = vld [vmem:[#allocation16 + $0x94] sm:$0xf]
    %v2527 = vld [vmem:[#allocation16 + $0x98] sm:$0xf]
    %v2528 = vld [vmem:[#allocation16 + $0x9c] sm:$0xf]
    %v2529 = vld [vmem:[#allocation16 + $0xa0] sm:$0xf]
    %v2530 = vld [vmem:[#allocation16 + $0xa4] sm:$0xf]
    %v2531 = vld [vmem:[#allocation16 + $0xa8] sm:$0xf]
    %v2532 = vld [vmem:[#allocation16 + $0xac] sm:$0xf]
    %v2533 = vld [vmem:[#allocation16 + $0xb0] sm:$0xf]
    %v2534 = vld [vmem:[#allocation16 + $0xb4] sm:$0xf]
    %v2535 = vld [vmem:[#allocation16 + $0xb8] sm:$0xf]
    %v2536 = vld [vmem:[#allocation16 + $0xbc] sm:$0xf]
    %v2537 = vld [vmem:[#allocation16 + $0xc0] sm:$0xf]
    %v2538 = vld [vmem:[#allocation16 + $0xc4] sm:$0xf]
    %v2539 = vld [vmem:[#allocation16 + $0xc8] sm:$0xf]
    %v2540 = vld [vmem:[#allocation16 + $0xcc] sm:$0xf]
    %v2541 = vld [vmem:[#allocation16 + $0xd0] sm:$0xf]
    %v2542 = vld [vmem:[#allocation16 + $0xd4] sm:$0xf]
    %v2543 = vld [vmem:[#allocation16 + $0xd8] sm:$0xf]
    %v2544 = vld [vmem:[#allocation16 + $0xdc] sm:$0xf]
    %v2545 = vld [vmem:[#allocation16 + $0xe0] sm:$0xf]
    %v2546 = vld [vmem:[#allocation16 + $0xe4] sm:$0xf]
    %v2547 = vld [vmem:[#allocation16 + $0xe8] sm:$0xf]
    %v2548 = vld [vmem:[#allocation16 + $0xec] sm:$0xf]
    %v2549 = vld [vmem:[#allocation16 + $0xf0] sm:$0xf]
    %v2550 = vld [vmem:[#allocation16 + $0xf4] sm:$0xf]
    %v2551 = vld [vmem:[#allocation16 + $0xf8] sm:$0xf]
    %v2552 = vld [vmem:[#allocation16 + $0xfc] sm:$0xf]
    %v2617 = vunpack.c.l.b16 %v2489
    %v2618 = vunpack.c.l.b16 %v2490
    %v2619 = vunpack.c.l.b16 %v2491
    %v2620 = vunpack.c.l.b16 %v2492
    %v2621 = vunpack.c.l.b16 %v2493
    %v2622 = vunpack.c.l.b16 %v2494
    %v2623 = vunpack.c.l.b16 %v2495
    %v2624 = vunpack.c.l.b16 %v2496
    %v2625 = vunpack.c.l.b16 %v2497
    %v2626 = vunpack.c.l.b16 %v2498
    %v2627 = vunpack.c.l.b16 %v2499
    %v2628 = vunpack.c.l.b16 %v2500
    %v2629 = vunpack.c.l.b16 %v2501
    %v2630 = vunpack.c.l.b16 %v2502
    %v2631 = vunpack.c.l.b16 %v2503
    %v2632 = vunpack.c.l.b16 %v2504
    %v2633 = vunpack.c.l.b16 %v2505
    %v2634 = vunpack.c.l.b16 %v2506
    %v2635 = vunpack.c.l.b16 %v2507
    %v2636 = vunpack.c.l.b16 %v2508
    %v2637 = vunpack.c.l.b16 %v2509
    %v2638 = vunpack.c.l.b16 %v2510
    %v2639 = vunpack.c.l.b16 %v2511
    %v2640 = vunpack.c.l.b16 %v2512
    %v2641 = vunpack.c.l.b16 %v2513
    %v2642 = vunpack.c.l.b16 %v2514
    %v2643 = vunpack.c.l.b16 %v2515
    %v2644 = vunpack.c.l.b16 %v2516
    %v2645 = vunpack.c.l.b16 %v2517
    %v2646 = vunpack.c.l.b16 %v2518
    %v2647 = vunpack.c.l.b16 %v2519
    %v2648 = vunpack.c.l.b16 %v2520
    %v2649 = vunpack.c.l.b16 %v2521
    %v2650 = vunpack.c.l.b16 %v2522
    %v2651 = vunpack.c.l.b16 %v2523
    %v2652 = vunpack.c.l.b16 %v2524
    %v2653 = vunpack.c.l.b16 %v2525
    %v2654 = vunpack.c.l.b16 %v2526
    %v2655 = vunpack.c.l.b16 %v2527
    %v2656 = vunpack.c.l.b16 %v2528
    %v2657 = vunpack.c.l.b16 %v2529
    %v2658 = vunpack.c.l.b16 %v2530
    %v2659 = vunpack.c.l.b16 %v2531
    %v2660 = vunpack.c.l.b16 %v2532
    %v2661 = vunpack.c.l.b16 %v2533
    %v2662 = vunpack.c.l.b16 %v2534
    %v2663 = vunpack.c.l.b16 %v2535
    %v2664 = vunpack.c.l.b16 %v2536
    %v2665 = vunpack.c.l.b16 %v2537
    %v2666 = vunpack.c.l.b16 %v2538
    %v2667 = vunpack.c.l.b16 %v2539
    %v2668 = vunpack.c.l.b16 %v2540
    %v2669 = vunpack.c.l.b16 %v2541
    %v2670 = vunpack.c.l.b16 %v2542
    %v2671 = vunpack.c.l.b16 %v2543
    %v2672 = vunpack.c.l.b16 %v2544
    %v2673 = vunpack.c.l.b16 %v2545
    %v2674 = vunpack.c.l.b16 %v2546
    %v2675 = vunpack.c.l.b16 %v2547
    %v2676 = vunpack.c.l.b16 %v2548
    %v2677 = vunpack.c.l.b16 %v2549
    %v2678 = vunpack.c.l.b16 %v2550
    %v2679 = vunpack.c.l.b16 %v2551
    %v2680 = vunpack.c.l.b16 %v2552
    %v2681 = vpack.c.b16 %v2618, %v2617
    %v2682 = vpack.c.b16 %v2620, %v2619
    %v2683 = vpack.c.b16 %v2622, %v2621
    %v2684 = vpack.c.b16 %v2624, %v2623
    %v2685 = vpack.c.b16 %v2626, %v2625
    %v2686 = vpack.c.b16 %v2628, %v2627
    %v2687 = vpack.c.b16 %v2630, %v2629
    %v2688 = vpack.c.b16 %v2632, %v2631
    %v2689 = vpack.c.b16 %v2634, %v2633
    %v2690 = vpack.c.b16 %v2636, %v2635
    %v2691 = vpack.c.b16 %v2638, %v2637
    %v2692 = vpack.c.b16 %v2640, %v2639
    %v2693 = vpack.c.b16 %v2642, %v2641
    %v2694 = vpack.c.b16 %v2644, %v2643
    %v2695 = vpack.c.b16 %v2646, %v2645
    %v2696 = vpack.c.b16 %v2648, %v2647
    %v2697 = vpack.c.b16 %v2650, %v2649
    %v2698 = vpack.c.b16 %v2652, %v2651
    %v2699 = vpack.c.b16 %v2654, %v2653
    %v2700 = vpack.c.b16 %v2656, %v2655
    %v2701 = vpack.c.b16 %v2658, %v2657
    %v2702 = vpack.c.b16 %v2660, %v2659
    %v2703 = vpack.c.b16 %v2662, %v2661
    %v2704 = vpack.c.b16 %v2664, %v2663
    %v2705 = vpack.c.b16 %v2666, %v2665
    %v2706 = vpack.c.b16 %v2668, %v2667
    %v2707 = vpack.c.b16 %v2670, %v2669
    %v2708 = vpack.c.b16 %v2672, %v2671
    %v2709 = vpack.c.b16 %v2674, %v2673
    %v2710 = vpack.c.b16 %v2676, %v2675
    %v2711 = vpack.c.b16 %v2678, %v2677
    %v2712 = vpack.c.b16 %v2680, %v2679
    %2745 = vmatprep.subr.bf16.mxu0 0
    %2746 = vmatpush1.bf16.msra.mxu0 %v2688
    %2747 = vmatprep.subr.bf16.mxu0 0
    %2748 = vmatpush1.bf16.msra.mxu0 %v2687
    %2749 = vmatprep.subr.bf16.mxu0 0
    %2750 = vmatpush1.bf16.msra.mxu0 %v2686
    %2751 = vmatprep.subr.bf16.mxu0 0
    %2752 = vmatpush1.bf16.msra.mxu0 %v2685
    %2753 = vmatprep.subr.bf16.mxu0 0
    %2754 = vmatpush1.bf16.msra.mxu0 %v2684
    %2755 = vmatprep.subr.bf16.mxu0 0
    %2756 = vmatpush1.bf16.msra.mxu0 %v2683
    %2757 = vmatprep.subr.bf16.mxu0 0
    %2758 = vmatpush1.bf16.msra.mxu0 %v2682
    %2759 = vmatprep.subr.bf16.mxu0 0
    %2760 = vmatpush1.bf16.msra.mxu0 %v2681
    %2761 = vmatprep.subr.bf16.mxu0 0
    %2762 = vmatpush2.bf16.msra.mxu0 %v2696
    %2763 = vmatprep.subr.bf16.mxu0 0
    %2764 = vmatpush2.bf16.msra.mxu0 %v2695
    %2765 = vmatprep.subr.bf16.mxu0 0
    %2766 = vmatpush2.bf16.msra.mxu0 %v2694
    %2767 = vmatprep.subr.bf16.mxu0 0
    %2768 = vmatpush2.bf16.msra.mxu0 %v2693
    %2769 = vmatprep.subr.bf16.mxu0 0
    %2770 = vmatpush2.bf16.msra.mxu0 %v2692
    %2771 = vmatprep.subr.bf16.mxu0 0
    %2772 = vmatpush2.bf16.msra.mxu0 %v2691
    %2773 = vmatprep.subr.bf16.mxu0 0
    %2774 = vmatpush2.bf16.msra.mxu0 %v2690
    %2775 = vmatprep.subr.bf16.mxu0 0
    %2776 = vmatpush2.bf16.msra.mxu0 %v2689
    %2777 = vmatprep.mubr.bf16.mxu0 %v2482
    %2778 = vmatmul.mubr.bf16.gmra.mxu0 %v2481
    %v2779 = vpop.f32.mrf.mxu0
    %v2780 = vadd.f32 0.0, %v2779
    %v2781 = vpop.f32.mrf.mxu0
    %v2782 = vpop.f32.mrf.mxu0
    %v2783 = vadd.f32 0.0, %v2782
    %v2784 = vpop.f32.mrf.mxu0
    %2785 = vmatprep.mubr.bf16.mxu0 %v2486
    %2786 = vmatmul.mubr.bf16.gmra.mxu0 %v2485
    %v2787 = vpop.f32.mrf.mxu0
    %v2788 = vadd.f32 0.0, %v2787
    %v2789 = vpop.f32.mrf.mxu0
    %v2790 = vpop.f32.mrf.mxu0
    %v2791 = vadd.f32 0.0, %v2790
    %v2792 = vpop.f32.mrf.mxu0
    %2793 = vdwg.mxu0
    %2794 = vmatprep.subr.bf16.mxu0 0
    %2795 = vmatpush1.bf16.msra.mxu0 %v2704
    %2796 = vmatprep.subr.bf16.mxu0 0
    %2797 = vmatpush1.bf16.msra.mxu0 %v2703
    %2798 = vmatprep.subr.bf16.mxu0 0
    %2799 = vmatpush1.bf16.msra.mxu0 %v2702
    %2800 = vmatprep.subr.bf16.mxu0 0
    %2801 = vmatpush1.bf16.msra.mxu0 %v2701
    %2802 = vmatprep.subr.bf16.mxu0 0
    %2803 = vmatpush1.bf16.msra.mxu0 %v2700
    %2804 = vmatprep.subr.bf16.mxu0 0
    %2805 = vmatpush1.bf16.msra.mxu0 %v2699
    %2806 = vmatprep.subr.bf16.mxu0 0
    %2807 = vmatpush1.bf16.msra.mxu0 %v2698
    %2808 = vmatprep.subr.bf16.mxu0 0
    %2809 = vmatpush1.bf16.msra.mxu0 %v2697
    %2810 = vmatprep.subr.bf16.mxu0 0
    %2811 = vmatpush2.bf16.msra.mxu0 %v2712
    %2812 = vmatprep.subr.bf16.mxu0 0
    %2813 = vmatpush2.bf16.msra.mxu0 %v2711
    %2814 = vmatprep.subr.bf16.mxu0 0
    %2815 = vmatpush2.bf16.msra.mxu0 %v2710
    %2816 = vmatprep.subr.bf16.mxu0 0
    %2817 = vmatpush2.bf16.msra.mxu0 %v2709
    %2818 = vmatprep.subr.bf16.mxu0 0
    %2819 = vmatpush2.bf16.msra.mxu0 %v2708
    %2820 = vmatprep.subr.bf16.mxu0 0
    %2821 = vmatpush2.bf16.msra.mxu0 %v2707
    %2822 = vmatprep.subr.bf16.mxu0 0
    %2823 = vmatpush2.bf16.msra.mxu0 %v2706
    %2824 = vmatprep.subr.bf16.mxu0 0
    %2825 = vmatpush2.bf16.msra.mxu0 %v2705
    %2826 = vmatprep.mubr.bf16.mxu0 %v2484
    %2827 = vmatmul.mubr.bf16.gmra.mxu0 %v2483
    %v2828 = vpop.f32.mrf.mxu0
    %v2829 = vadd.f32 %v2780, %v2828
    %v2830 = vpop.f32.mrf.mxu0
    %v2831 = vpop.f32.mrf.mxu0
    %v2832 = vadd.f32 %v2783, %v2831
    %v2833 = vpop.f32.mrf.mxu0
    %2834 = vmatprep.mubr.bf16.mxu0 %v2488
    %2835 = vmatmul.mubr.bf16.gmra.mxu0 %v2487
    %v2836 = vpop.f32.mrf.mxu0
    %v2837 = vadd.f32 %v2788, %v2836
    %v2838 = vpop.f32.mrf.mxu0
    %v2839 = vpop.f32.mrf.mxu0
    %v2840 = vadd.f32 %v2791, %v2839
    %v2841 = vpop.f32.mrf.mxu0
    %2842 = vdwg.mxu0
    %v2843 = vadd.f32 %v1715, %v2829
    %v2844 = vadd.f32 %v1716, %v2832
    %v2845 = vadd.f32 %v1717, %v2837
    %v2846 = vadd.f32 %v1718, %v2840
    %v2847 = vmul.f32 %v2843, %v2843
    %v2848 = vmul.f32 %v2844, %v2844
    %v2849 = vmul.f32 %v2845, %v2845
    %v2850 = vmul.f32 %v2846, %v2846
    %2851 = vadd.xlane.f32.xlu0 %v2847
    %v2852 = vpop.xlane.xlu0 %2851
    %2853 = vadd.xlane.f32.xlu0 %v2848
    %v2854 = vpop.xlane.xlu0 %2853
    %2855 = vadd.xlane.f32.xlu0 %v2849
    %v2856 = vpop.xlane.xlu0 %2855
    %2857 = vadd.xlane.f32.xlu0 %v2850
    %v2858 = vpop.xlane.xlu0 %2857
    %v2859 = vmul.f32 %v2852, %v217
    %v2860 = vmul.f32 %v2854, %v217
    %v2861 = vmul.f32 %v2856, %v217
    %v2862 = vmul.f32 %v2858, %v217
    %v2863 = vadd.f32 %v2859, 1e-06
    %v2864 = vadd.f32 %v2860, 1e-06
    %v2865 = vadd.f32 %v2861, 1e-06
    %v2866 = vadd.f32 %v2862, 1e-06
    %v2867 = vrsqrt.pop %v2863
    %v2868 = vrsqrt.pop %v2864
    %v2869 = vrsqrt.pop %v2865
    %v2870 = vrsqrt.pop %v2866
    %v2871 = vmul.f32 %v2843, %v2867
    %v2872 = vmul.f32 %v2844, %v2868
    %v2873 = vmul.f32 %v2845, %v2869
    %v2874 = vmul.f32 %v2846, %v2870
    %v2875 = vlaneseq
    %v2876 = vshrl.u32 %v2875, 7
    %v2877 = vsub.s32 2, %v2876
    %v2878 = vrot.slane %v188, %v2877
    %v2879 = vmul.f32 %v2871, %v2878
    %v2880 = vmul.f32 %v2872, %v2878
    %v2881 = vmul.f32 %v2873, %v2878
    %v2882 = vmul.f32 %v2874, %v2878
    %v2883 = vpack.c.bf16 %v2880, %v2879
    %v2884 = vpack.c.bf16 %v2882, %v2881
    %s2885 = scalar_lea.vmem [#allocation11], 192
    %v2886 = vld [vmem:[%s2885] sm:$0xff]
    %v2887 = vld [vmem:[%s2885 + $0x8] sm:$0xf]
    %v2888 = vld [vmem:[%s2885 + $0xc] sm:$0xff]
    %v2889 = vld [vmem:[%s2885 + $0x14] sm:$0xf]
    %v2890 = vld [vmem:[%s2885 + $0x18] sm:$0xff]
    %v2891 = vld [vmem:[%s2885 + $0x20] sm:$0xf]
    %v2892 = vld [vmem:[%s2885 + $0x24] sm:$0xff]
    %v2893 = vld [vmem:[%s2885 + $0x2c] sm:$0xf]
    %v2894 = vld [vmem:[%s2885 + $0x30] sm:$0xff]
    %v2895 = vld [vmem:[%s2885 + $0x38] sm:$0xf]
    %v2896 = vld [vmem:[%s2885 + $0x3c] sm:$0xff]
    %v2897 = vld [vmem:[%s2885 + $0x44] sm:$0xf]
    %v2898 = vld [vmem:[%s2885 + $0x48] sm:$0xff]
    %v2899 = vld [vmem:[%s2885 + $0x50] sm:$0xf]
    %v2900 = vld [vmem:[%s2885 + $0x54] sm:$0xff]
    %v2901 = vld [vmem:[%s2885 + $0x5c] sm:$0xf]
    %v2902 = vld [vmem:[%s2885 + $0x60] sm:$0xff]
    %v2903 = vld [vmem:[%s2885 + $0x68] sm:$0xf]
    %v2904 = vld [vmem:[%s2885 + $0x6c] sm:$0xff]
    %v2905 = vld [vmem:[%s2885 + $0x74] sm:$0xf]
    %v2906 = vld [vmem:[%s2885 + $0x78] sm:$0xff]
    %v2907 = vld [vmem:[%s2885 + $0x80] sm:$0xf]
    %v2908 = vld [vmem:[%s2885 + $0x84] sm:$0xff]
    %v2909 = vld [vmem:[%s2885 + $0x8c] sm:$0xf]
    %v2910 = vld [vmem:[%s2885 + $0x90] sm:$0xff]
    %v2911 = vld [vmem:[%s2885 + $0x98] sm:$0xf]
    %v2912 = vld [vmem:[%s2885 + $0x9c] sm:$0xff]
    %v2913 = vld [vmem:[%s2885 + $0xa4] sm:$0xf]
    %v2914 = vld [vmem:[%s2885 + $0xa8] sm:$0xff]
    %v2915 = vld [vmem:[%s2885 + $0xb0] sm:$0xf]
    %v2916 = vld [vmem:[%s2885 + $0xb4] sm:$0xff]
    %v2917 = vld [vmem:[%s2885 + $0xbc] sm:$0xf]
    %v2950 = vunpack.c.l.b16 %v2886
    %v2951 = vunpack.c.h.b16 %v2886
    %v2952 = vunpack.c.l.b16 %v2887
    %v2953 = vunpack.c.l.b16 %v2888
    %v2954 = vunpack.c.h.b16 %v2888
    %v2955 = vunpack.c.l.b16 %v2889
    %v2956 = vunpack.c.l.b16 %v2890
    %v2957 = vunpack.c.h.b16 %v2890
    %v2958 = vunpack.c.l.b16 %v2891
    %v2959 = vunpack.c.l.b16 %v2892
    %v2960 = vunpack.c.h.b16 %v2892
    %v2961 = vunpack.c.l.b16 %v2893
    %v2962 = vunpack.c.l.b16 %v2894
    %v2963 = vunpack.c.h.b16 %v2894
    %v2964 = vunpack.c.l.b16 %v2895
    %v2965 = vunpack.c.l.b16 %v2896
    %v2966 = vunpack.c.h.b16 %v2896
    %v2967 = vunpack.c.l.b16 %v2897
    %v2968 = vunpack.c.l.b16 %v2898
    %v2969 = vunpack.c.h.b16 %v2898
    %v2970 = vunpack.c.l.b16 %v2899
    %v2971 = vunpack.c.l.b16 %v2900
    %v2972 = vunpack.c.h.b16 %v2900
    %v2973 = vunpack.c.l.b16 %v2901
    %v2974 = vunpack.c.l.b16 %v2902
    %v2975 = vunpack.c.h.b16 %v2902
    %v2976 = vunpack.c.l.b16 %v2903
    %v2977 = vunpack.c.l.b16 %v2904
    %v2978 = vunpack.c.h.b16 %v2904
    %v2979 = vunpack.c.l.b16 %v2905
    %v2980 = vunpack.c.l.b16 %v2906
    %v2981 = vunpack.c.h.b16 %v2906
    %v2982 = vunpack.c.l.b16 %v2907
    %v2983 = vunpack.c.l.b16 %v2908
    %v2984 = vunpack.c.h.b16 %v2908
    %v2985 = vunpack.c.l.b16 %v2909
    %v2986 = vunpack.c.l.b16 %v2910
    %v2987 = vunpack.c.h.b16 %v2910
    %v2988 = vunpack.c.l.b16 %v2911
    %v2989 = vunpack.c.l.b16 %v2912
    %v2990 = vunpack.c.h.b16 %v2912
    %v2991 = vunpack.c.l.b16 %v2913
    %v2992 = vunpack.c.l.b16 %v2914
    %v2993 = vunpack.c.h.b16 %v2914
    %v2994 = vunpack.c.l.b16 %v2915
    %v2995 = vunpack.c.l.b16 %v2916
    %v2996 = vunpack.c.h.b16 %v2916
    %v2997 = vunpack.c.l.b16 %v2917
    %v2998 = vpack.c.b16 %v2953, %v2950
    %v2999 = vpack.c.b16 %v2954, %v2951
    %v3000 = vpack.c.b16 %v2955, %v2952
    %v3001 = vpack.c.b16 %v2959, %v2956
    %v3002 = vpack.c.b16 %v2960, %v2957
    %v3003 = vpack.c.b16 %v2961, %v2958
    %v3004 = vpack.c.b16 %v2965, %v2962
    %v3005 = vpack.c.b16 %v2966, %v2963
    %v3006 = vpack.c.b16 %v2967, %v2964
    %v3007 = vpack.c.b16 %v2971, %v2968
    %v3008 = vpack.c.b16 %v2972, %v2969
    %v3009 = vpack.c.b16 %v2973, %v2970
    %v3010 = vpack.c.b16 %v2977, %v2974
    %v3011 = vpack.c.b16 %v2978, %v2975
    %v3012 = vpack.c.b16 %v2979, %v2976
    %v3013 = vpack.c.b16 %v2983, %v2980
    %v3014 = vpack.c.b16 %v2984, %v2981
    %v3015 = vpack.c.b16 %v2985, %v2982
    %v3016 = vpack.c.b16 %v2989, %v2986
    %v3017 = vpack.c.b16 %v2990, %v2987
    %v3018 = vpack.c.b16 %v2991, %v2988
    %v3019 = vpack.c.b16 %v2995, %v2992
    %v3020 = vpack.c.b16 %v2996, %v2993
    %v3021 = vpack.c.b16 %v2997, %v2994
    %3046 = vmatprep.subr.bf16.mxu0 %v3020
    %3047 = vmatpush1.bf16.msra.mxu0 %v3019
    %3048 = vmatprep.subr.bf16.mxu0 %v3017
    %3049 = vmatpush1.bf16.msra.mxu0 %v3016
    %3050 = vmatprep.subr.bf16.mxu0 %v3014
    %3051 = vmatpush1.bf16.msra.mxu0 %v3013
    %3052 = vmatprep.subr.bf16.mxu0 %v3011
    %3053 = vmatpush1.bf16.msra.mxu0 %v3010
    %3054 = vmatprep.subr.bf16.mxu0 %v3008
    %3055 = vmatpush1.bf16.msra.mxu0 %v3007
    %3056 = vmatprep.subr.bf16.mxu0 %v3005
    %3057 = vmatpush1.bf16.msra.mxu0 %v3004
    %3058 = vmatprep.subr.bf16.mxu0 %v3002
    %3059 = vmatpush1.bf16.msra.mxu0 %v3001
    %3060 = vmatprep.subr.bf16.mxu0 %v2999
    %3061 = vmatpush1.bf16.msra.mxu0 %v2998
    %3062 = vmatprep.subr.bf16.mxu0 0
    %3063 = vmatpush2.bf16.msra.mxu0 0
    %3064 = vmatprep.subr.bf16.mxu0 0
    %3065 = vmatpush2.bf16.msra.mxu0 0
    %3066 = vmatprep.subr.bf16.mxu0 0
    %3067 = vmatpush2.bf16.msra.mxu0 0
    %3068 = vmatprep.subr.bf16.mxu0 0
    %3069 = vmatpush2.bf16.msra.mxu0 0
    %3070 = vmatprep.subr.bf16.mxu0 0
    %3071 = vmatpush2.bf16.msra.mxu0 0
    %3072 = vmatprep.subr.bf16.mxu0 0
    %3073 = vmatpush2.bf16.msra.mxu0 0
    %3074 = vmatprep.subr.bf16.mxu0 0
    %3075 = vmatpush2.bf16.msra.mxu0 0
    %3076 = vmatprep.subr.bf16.mxu0 0
    %3077 = vmatpush2.bf16.msra.mxu0 0
    %3078 = vmatprep.mubr.bf16.mxu0 0
    %3079 = vmatmul.mubr.bf16.gmra.mxu0 %v2883
    %v3080 = vpop.f32.mrf.mxu0
    %v3081 = vadd.f32 0.0, %v3080
    %v3082 = vpop.f32.mrf.mxu0
    %v3083 = vadd.f32 0.0, %v3082
    %v3084 = vpop.f32.mrf.mxu0
    %v3085 = vadd.f32 0.0, %v3084
    %v3086 = vpop.f32.mrf.mxu0
    %v3087 = vadd.f32 0.0, %v3086
    %3088 = vmatprep.mubr.bf16.mxu0 0
    %3089 = vmatmul.mubr.bf16.gmra.mxu0 %v2884
    %v3090 = vpop.f32.mrf.mxu0
    %v3091 = vadd.f32 0.0, %v3090
    %v3092 = vpop.f32.mrf.mxu0
    %v3093 = vadd.f32 0.0, %v3092
    %v3094 = vpop.f32.mrf.mxu0
    %v3095 = vadd.f32 0.0, %v3094
    %v3096 = vpop.f32.mrf.mxu0
    %v3097 = vadd.f32 0.0, %v3096
    %3098 = vdwg.mxu0
    %3099 = vmatprep.subr.bf16.mxu0 0
    %3100 = vmatpush1.bf16.msra.mxu0 %v3021
    %3101 = vmatprep.subr.bf16.mxu0 0
    %3102 = vmatpush1.bf16.msra.mxu0 %v3018
    %3103 = vmatprep.subr.bf16.mxu0 0
    %3104 = vmatpush1.bf16.msra.mxu0 %v3015
    %3105 = vmatprep.subr.bf16.mxu0 0
    %3106 = vmatpush1.bf16.msra.mxu0 %v3012
    %3107 = vmatprep.subr.bf16.mxu0 0
    %3108 = vmatpush1.bf16.msra.mxu0 %v3009
    %3109 = vmatprep.subr.bf16.mxu0 0
    %3110 = vmatpush1.bf16.msra.mxu0 %v3006
    %3111 = vmatprep.subr.bf16.mxu0 0
    %3112 = vmatpush1.bf16.msra.mxu0 %v3003
    %3113 = vmatprep.subr.bf16.mxu0 0
    %3114 = vmatpush1.bf16.msra.mxu0 %v3000
    %3115 = vmatprep.subr.bf16.mxu0 0
    %3116 = vmatpush2.bf16.msra.mxu0 0
    %3117 = vmatprep.subr.bf16.mxu0 0
    %3118 = vmatpush2.bf16.msra.mxu0 0
    %3119 = vmatprep.subr.bf16.mxu0 0
    %3120 = vmatpush2.bf16.msra.mxu0 0
    %3121 = vmatprep.subr.bf16.mxu0 0
    %3122 = vmatpush2.bf16.msra.mxu0 0
    %3123 = vmatprep.subr.bf16.mxu0 0
    %3124 = vmatpush2.bf16.msra.mxu0 0
    %3125 = vmatprep.subr.bf16.mxu0 0
    %3126 = vmatpush2.bf16.msra.mxu0 0
    %3127 = vmatprep.subr.bf16.mxu0 0
    %3128 = vmatpush2.bf16.msra.mxu0 0
    %3129 = vmatprep.subr.bf16.mxu0 0
    %3130 = vmatpush2.bf16.msra.mxu0 0
    %3131 = vmatprep.mubr.bf16.mxu0 0
    %3132 = vmatmul.mubr.bf16.gmra.mxu0 %v2883
    %v3133 = vpop.f32.mrf.mxu0
    %v3134 = vadd.f32 0.0, %v3133
    %v3135 = vpop.f32.mrf.mxu0
    %v3136 = vpop.f32.mrf.mxu0
    %v3137 = vadd.f32 0.0, %v3136
    %v3138 = vpop.f32.mrf.mxu0
    %3139 = vmatprep.mubr.bf16.mxu0 0
    %3140 = vmatmul.mubr.bf16.gmra.mxu0 %v2884
    %v3141 = vpop.f32.mrf.mxu0
    %v3142 = vadd.f32 0.0, %v3141
    %v3143 = vpop.f32.mrf.mxu0
    %v3144 = vpop.f32.mrf.mxu0
    %v3145 = vadd.f32 0.0, %v3144
    %v3146 = vpop.f32.mrf.mxu0
    %3147 = vdwg.mxu0
    %v3148 = vpack.c.bf16 %v3085, %v3081
    %v3149 = vpack.c.bf16 %v3095, %v3091
    %3150 = vmatprep.subr.bf16.mxu0 0
    %3151 = vmatpush1.bf16.msra.mxu0 %v547
    %3152 = vmatprep.subr.bf16.mxu0 0
    %3153 = vmatpush1.bf16.msra.mxu0 %v546
    %3154 = vmatprep.subr.bf16.mxu0 0
    %3155 = vmatpush1.bf16.msra.mxu0 %v545
    %3156 = vmatprep.subr.bf16.mxu0 0
    %3157 = vmatpush1.bf16.msra.mxu0 %v544
    %3158 = vmatprep.subr.bf16.mxu0 0
    %3159 = vmatpush1.bf16.msra.mxu0 %v543
    %3160 = vmatprep.subr.bf16.mxu0 0
    %3161 = vmatpush1.bf16.msra.mxu0 %v542
    %3162 = vmatprep.subr.bf16.mxu0 0
    %3163 = vmatpush1.bf16.msra.mxu0 %v541
    %3164 = vmatprep.subr.bf16.mxu0 0
    %3165 = vmatpush1.bf16.msra.mxu0 %v540
    %3166 = vmatprep.subr.bf16.mxu0 0
    %3167 = vmatpush2.bf16.msra.mxu0 0
    %3168 = vmatprep.subr.bf16.mxu0 0
    %3169 = vmatpush2.bf16.msra.mxu0 0
    %3170 = vmatprep.subr.bf16.mxu0 0
    %3171 = vmatpush2.bf16.msra.mxu0 0
    %3172 = vmatprep.subr.bf16.mxu0 0
    %3173 = vmatpush2.bf16.msra.mxu0 0
    %3174 = vmatprep.subr.bf16.mxu0 0
    %3175 = vmatpush2.bf16.msra.mxu0 0
    %3176 = vmatprep.subr.bf16.mxu0 0
    %3177 = vmatpush2.bf16.msra.mxu0 0
    %3178 = vmatprep.subr.bf16.mxu0 0
    %3179 = vmatpush2.bf16.msra.mxu0 0
    %3180 = vmatprep.subr.bf16.mxu0 0
    %3181 = vmatpush2.bf16.msra.mxu0 0
    %3182 = vmatprep.mubr.bf16.mxu0 0
    %3183 = vmatmul.mubr.bf16.gmra.mxu0 %v3148
    %v3184 = vpop.f32.mrf.mxu0
    %v3185 = vadd.f32 0.0, %v3184
    %v3186 = vpop.f32.mrf.mxu0
    %v3187 = vpop.f32.mrf.mxu0
    %v3188 = vadd.f32 0.0, %v3187
    %v3189 = vpop.f32.mrf.mxu0
    %3190 = vmatprep.mubr.bf16.mxu0 0
    %3191 = vmatmul.mubr.bf16.gmra.mxu0 %v3149
    %v3192 = vpop.f32.mrf.mxu0
    %v3193 = vadd.f32 0.0, %v3192
    %v3194 = vpop.f32.mrf.mxu0
    %v3195 = vpop.f32.mrf.mxu0
    %v3196 = vadd.f32 0.0, %v3195
    %v3197 = vpop.f32.mrf.mxu0
    %3198 = vdwg.mxu0
    %v3199 = vmul.f32 %v3081, %v175
    %v3200 = vmul.f32 %v3085, %v176
    %v3201 = vmul.f32 %v3091, %v177
    %v3202 = vmul.f32 %v3095, %v178
    %v3203 = vmul.f32 %v3185, %v180
    %v3204 = vmul.f32 %v3188, %v181
    %v3205 = vmul.f32 %v3193, %v182
    %v3206 = vmul.f32 %v3196, %v183
    %v3207 = vadd.f32 %v3199, %v3203
    %v3208 = vadd.f32 %v3200, %v3204
    %v3209 = vadd.f32 %v3201, %v3205
    %v3210 = vadd.f32 %v3202, %v3206
    %v3211 = vpack.c.bf16 %v3208, %v3207
    %v3212 = vpack.c.bf16 %v3210, %v3209
    %v3213 = vpack.c.bf16 %v3087, %v3083
    %v3214 = vpack.c.bf16 %v3097, %v3093
    %3215 = vmatprep.subr.bf16.mxu0 0
    %3216 = vmatpush1.bf16.msra.mxu0 %v547
    %3217 = vmatprep.subr.bf16.mxu0 0
    %3218 = vmatpush1.bf16.msra.mxu0 %v546
    %3219 = vmatprep.subr.bf16.mxu0 0
    %3220 = vmatpush1.bf16.msra.mxu0 %v545
    %3221 = vmatprep.subr.bf16.mxu0 0
    %3222 = vmatpush1.bf16.msra.mxu0 %v544
    %3223 = vmatprep.subr.bf16.mxu0 0
    %3224 = vmatpush1.bf16.msra.mxu0 %v543
    %3225 = vmatprep.subr.bf16.mxu0 0
    %3226 = vmatpush1.bf16.msra.mxu0 %v542
    %3227 = vmatprep.subr.bf16.mxu0 0
    %3228 = vmatpush1.bf16.msra.mxu0 %v541
    %3229 = vmatprep.subr.bf16.mxu0 0
    %3230 = vmatpush1.bf16.msra.mxu0 %v540
    %3231 = vmatprep.subr.bf16.mxu0 0
    %3232 = vmatpush2.bf16.msra.mxu0 0
    %3233 = vmatprep.subr.bf16.mxu0 0
    %3234 = vmatpush2.bf16.msra.mxu0 0
    %3235 = vmatprep.subr.bf16.mxu0 0
    %3236 = vmatpush2.bf16.msra.mxu0 0
    %3237 = vmatprep.subr.bf16.mxu0 0
    %3238 = vmatpush2.bf16.msra.mxu0 0
    %3239 = vmatprep.subr.bf16.mxu0 0
    %3240 = vmatpush2.bf16.msra.mxu0 0
    %3241 = vmatprep.subr.bf16.mxu0 0
    %3242 = vmatpush2.bf16.msra.mxu0 0
    %3243 = vmatprep.subr.bf16.mxu0 0
    %3244 = vmatpush2.bf16.msra.mxu0 0
    %3245 = vmatprep.subr.bf16.mxu0 0
    %3246 = vmatpush2.bf16.msra.mxu0 0
    %3247 = vmatprep.mubr.bf16.mxu0 0
    %3248 = vmatmul.mubr.bf16.gmra.mxu0 %v3213
    %v3249 = vpop.f32.mrf.mxu0
    %v3250 = vadd.f32 0.0, %v3249
    %v3251 = vpop.f32.mrf.mxu0
    %v3252 = vpop.f32.mrf.mxu0
    %v3253 = vadd.f32 0.0, %v3252
    %v3254 = vpop.f32.mrf.mxu0
    %3255 = vmatprep.mubr.bf16.mxu0 0
    %3256 = vmatmul.mubr.bf16.gmra.mxu0 %v3214
    %v3257 = vpop.f32.mrf.mxu0
    %v3258 = vadd.f32 0.0, %v3257
    %v3259 = vpop.f32.mrf.mxu0
    %v3260 = vpop.f32.mrf.mxu0
    %v3261 = vadd.f32 0.0, %v3260
    %v3262 = vpop.f32.mrf.mxu0
    %3263 = vdwg.mxu0
    %v3264 = vmul.f32 %v3083, %v175
    %v3265 = vmul.f32 %v3087, %v176
    %v3266 = vmul.f32 %v3093, %v177
    %v3267 = vmul.f32 %v3097, %v178
    %v3268 = vmul.f32 %v3250, %v180
    %v3269 = vmul.f32 %v3253, %v181
    %v3270 = vmul.f32 %v3258, %v182
    %v3271 = vmul.f32 %v3261, %v183
    %v3272 = vadd.f32 %v3264, %v3268
    %v3273 = vadd.f32 %v3265, %v3269
    %v3274 = vadd.f32 %v3266, %v3270
    %v3275 = vadd.f32 %v3267, %v3271
    %v3276 = vpack.c.bf16 %v3273, %v3272
    %v3277 = vpack.c.bf16 %v3275, %v3274
    %v3278 = vpack.c.bf16 %v3137, %v3134
    %v3279 = vpack.c.bf16 %v3145, %v3142
    %s3280 = scalar_lea.vmem [#allocation13], 64
    %v3281 = vld [vmem:[%s3280] sm:$0xf]
    %v3282 = vld [vmem:[%s3280 + $0x4] sm:$0xf]
    %v3283 = vld [vmem:[%s3280 + $0x8] sm:$0xf]
    %v3284 = vld [vmem:[%s3280 + $0xc] sm:$0xf]
    %v3285 = vld [vmem:[%s3280 + $0x10] sm:$0xf]
    %v3286 = vld [vmem:[%s3280 + $0x14] sm:$0xf]
    %v3287 = vld [vmem:[%s3280 + $0x18] sm:$0xf]
    %v3288 = vld [vmem:[%s3280 + $0x1c] sm:$0xf]
    %v3289 = vld [vmem:[%s3280 + $0x20] sm:$0xf]
    %v3290 = vld [vmem:[%s3280 + $0x24] sm:$0xf]
    %v3291 = vld [vmem:[%s3280 + $0x28] sm:$0xf]
    %v3292 = vld [vmem:[%s3280 + $0x2c] sm:$0xf]
    %v3293 = vld [vmem:[%s3280 + $0x30] sm:$0xf]
    %v3294 = vld [vmem:[%s3280 + $0x34] sm:$0xf]
    %v3295 = vld [vmem:[%s3280 + $0x38] sm:$0xf]
    %v3296 = vld [vmem:[%s3280 + $0x3c] sm:$0xf]
    %v3298 = vsel %vm702, %v3211, 0
    %v3301 = vsel %vm702, %v3212, 0
    %v3304 = vsel %vm702, %v3276, 0
    %v3307 = vsel %vm702, %v3277, 0
    %3309 = vmatprep.subr.bf16.mxu0 0
    %3310 = vmatpush1.bf16.xpose.msra.mxu0 0
    %3311 = vmatprep.subr.bf16.mxu0 0
    %3312 = vmatpush1.bf16.xpose.msra.mxu0 0
    %3313 = vmatprep.subr.bf16.mxu0 0
    %3314 = vmatpush1.bf16.xpose.msra.mxu0 0
    %3315 = vmatprep.subr.bf16.mxu0 0
    %3316 = vmatpush1.bf16.xpose.msra.mxu0 0
    %3317 = vmatprep.subr.bf16.mxu0 0
    %3318 = vmatpush1.bf16.xpose.msra.mxu0 0
    %3319 = vmatprep.subr.bf16.mxu0 0
    %3320 = vmatpush1.bf16.xpose.msra.mxu0 0
    %3321 = vmatprep.subr.bf16.mxu0 0
    %3322 = vmatpush1.bf16.xpose.msra.mxu0 %v3307
    %3323 = vmatprep.subr.bf16.mxu0 0
    %3324 = vmatpush1.bf16.xpose.msra.mxu0 %v3304
    %3325 = vmatprep.subr.bf16.mxu0 0
    %3326 = vmatpush2.bf16.xpose.msra.mxu0 0
    %3327 = vmatprep.subr.bf16.mxu0 0
    %3328 = vmatpush2.bf16.xpose.msra.mxu0 0
    %3329 = vmatprep.subr.bf16.mxu0 0
    %3330 = vmatpush2.bf16.xpose.msra.mxu0 0
    %3331 = vmatprep.subr.bf16.mxu0 0
    %3332 = vmatpush2.bf16.xpose.msra.mxu0 0
    %3333 = vmatprep.subr.bf16.mxu0 0
    %3334 = vmatpush2.bf16.xpose.msra.mxu0 0
    %3335 = vmatprep.subr.bf16.mxu0 0
    %3336 = vmatpush2.bf16.xpose.msra.mxu0 0
    %3337 = vmatprep.subr.bf16.mxu0 0
    %3338 = vmatpush2.bf16.xpose.msra.mxu0 0
    %3339 = vmatprep.subr.bf16.mxu0 0
    %3340 = vmatpush2.bf16.xpose.msra.mxu0 0
    %3341 = vmatprep.mubr.bf16.mxu0 0
    %3342 = vmatmul.mubr.bf16.gmra.mxu0 %v3298
    %v3343 = vpop.f32.mrf.mxu0
    %v3344 = vadd.f32 0.0, %v3343
    %v3345 = vpop.f32.mrf.mxu0
    %v3346 = vpop.f32.mrf.mxu0
    %v3347 = vadd.f32 0.0, %v3346
    %v3348 = vpop.f32.mrf.mxu0
    %3349 = vmatprep.mubr.bf16.mxu0 0
    %3350 = vmatmul.mubr.bf16.gmra.mxu0 %v3301
    %v3351 = vpop.f32.mrf.mxu0
    %v3352 = vadd.f32 0.0, %v3351
    %v3353 = vpop.f32.mrf.mxu0
    %v3354 = vpop.f32.mrf.mxu0
    %v3355 = vadd.f32 0.0, %v3354
    %v3356 = vpop.f32.mrf.mxu0
    %3357 = vdwg.mxu0
    %v3358 = vmul.f32 %v3344, 0.17677669
    %v3359 = vmul.f32 %v3347, 0.17677669
    %v3360 = vmul.f32 %v3352, 0.17677669
    %v3361 = vmul.f32 %v3355, 0.17677669
    %v3362 = vadd.f32 %v3358, %v184
    %v3363 = vadd.f32 %v3359, %v185
    %v3364 = vadd.f32 %v3360, %v186
    %v3365 = vadd.f32 %v3361, %v187
    %v3366 = vsel %vm702, %v3362, -inf
    %3367 = vmax.xlane.f32.xlu0 %v3366
    %v3368 = vpop.xlane.xlu0 %3367
    %v3369 = vsel %vm702, %v3363, -inf
    %3370 = vmax.xlane.f32.xlu0 %v3369
    %v3371 = vpop.xlane.xlu0 %3370
    %v3372 = vsel %vm702, %v3364, -inf
    %3373 = vmax.xlane.f32.xlu0 %v3372
    %v3374 = vpop.xlane.xlu0 %3373
    %v3375 = vsel %vm702, %v3365, -inf
    %3376 = vmax.xlane.f32.xlu0 %v3375
    %v3377 = vpop.xlane.xlu0 %3376
    %v3378 = vsub.f32 %v3362, %v3368
    %v3379 = vsub.f32 %v3363, %v3371
    %v3380 = vsub.f32 %v3364, %v3374
    %v3381 = vsub.f32 %v3365, %v3377
    %v3382 = vmul.f32 %v3378, 1.442695
    %v3383 = vpow.pop %v3382
    %v3384 = vmul.f32 %v3379, 1.442695
    %v3385 = vpow.pop %v3384
    %v3386 = vmul.f32 %v3380, 1.442695
    %v3387 = vpow.pop %v3386
    %v3388 = vmul.f32 %v3381, 1.442695
    %v3389 = vpow.pop %v3388
    %v3390 = vsel %vm702, %v3383, 0.0
    %3391 = vadd.xlane.f32.xlu0 %v3390
    %v3392 = vpop.xlane.xlu0 %3391
    %v3393 = vsel %vm702, %v3385, 0.0
    %3394 = vadd.xlane.f32.xlu0 %v3393
    %v3395 = vpop.xlane.xlu0 %3394
    %v3396 = vsel %vm702, %v3387, 0.0
    %3397 = vadd.xlane.f32.xlu0 %v3396
    %v3398 = vpop.xlane.xlu0 %3397
    %v3399 = vsel %vm702, %v3389, 0.0
    %3400 = vadd.xlane.f32.xlu0 %v3399
    %v3401 = vpop.xlane.xlu0 %3400
    %v3402 = vrcp.pop %v3392
    %v3403 = vrcp.pop %v3395
    %v3404 = vrcp.pop %v3398
    %v3405 = vrcp.pop %v3401
    %v3406 = vmul.f32 %v3383, %v3402
    %v3407 = vmul.f32 %v3385, %v3403
    %v3408 = vmul.f32 %v3387, %v3404
    %v3409 = vmul.f32 %v3389, %v3405
    %v3410 = vpack.c.bf16 %v3407, %v3406
    %v3411 = vpack.c.bf16 %v3409, %v3408
    %v3413 = vsel %vm702, %v3410, 0
    %v3416 = vsel %vm702, %v3411, 0
    %3418 = vmatprep.subr.bf16.mxu0 0
    %3419 = vmatpush1.bf16.msra.mxu0 0
    %3420 = vmatprep.subr.bf16.mxu0 0
    %3421 = vmatpush1.bf16.msra.mxu0 0
    %3422 = vmatprep.subr.bf16.mxu0 0
    %3423 = vmatpush1.bf16.msra.mxu0 0
    %3424 = vmatprep.subr.bf16.mxu0 0
    %3425 = vmatpush1.bf16.msra.mxu0 0
    %3426 = vmatprep.subr.bf16.mxu0 0
    %3427 = vmatpush1.bf16.msra.mxu0 0
    %3428 = vmatprep.subr.bf16.mxu0 0
    %3429 = vmatpush1.bf16.msra.mxu0 0
    %3430 = vmatprep.subr.bf16.mxu0 0
    %3431 = vmatpush1.bf16.msra.mxu0 %v3279
    %3432 = vmatprep.subr.bf16.mxu0 0
    %3433 = vmatpush1.bf16.msra.mxu0 %v3278
    %3434 = vmatprep.subr.bf16.mxu0 0
    %3435 = vmatpush2.bf16.msra.mxu0 0
    %3436 = vmatprep.subr.bf16.mxu0 0
    %3437 = vmatpush2.bf16.msra.mxu0 0
    %3438 = vmatprep.subr.bf16.mxu0 0
    %3439 = vmatpush2.bf16.msra.mxu0 0
    %3440 = vmatprep.subr.bf16.mxu0 0
    %3441 = vmatpush2.bf16.msra.mxu0 0
    %3442 = vmatprep.subr.bf16.mxu0 0
    %3443 = vmatpush2.bf16.msra.mxu0 0
    %3444 = vmatprep.subr.bf16.mxu0 0
    %3445 = vmatpush2.bf16.msra.mxu0 0
    %3446 = vmatprep.subr.bf16.mxu0 0
    %3447 = vmatpush2.bf16.msra.mxu0 0
    %3448 = vmatprep.subr.bf16.mxu0 0
    %3449 = vmatpush2.bf16.msra.mxu0 0
    %3450 = vmatprep.mubr.bf16.mxu0 0
    %3451 = vmatmul.mubr.bf16.gmra.mxu0 %v3413
    %v3452 = vpop.f32.mrf.mxu0
    %v3453 = vadd.f32 0.0, %v3452
    %v3454 = vpop.f32.mrf.mxu0
    %v3455 = vpop.f32.mrf.mxu0
    %v3456 = vadd.f32 0.0, %v3455
    %v3457 = vpop.f32.mrf.mxu0
    %3458 = vmatprep.mubr.bf16.mxu0 0
    %3459 = vmatmul.mubr.bf16.gmra.mxu0 %v3416
    %v3460 = vpop.f32.mrf.mxu0
    %v3461 = vadd.f32 0.0, %v3460
    %v3462 = vpop.f32.mrf.mxu0
    %v3463 = vpop.f32.mrf.mxu0
    %v3464 = vadd.f32 0.0, %v3463
    %v3465 = vpop.f32.mrf.mxu0
    %3466 = vdwg.mxu0
    %v3467 = vpack.c.bf16 %v3456, %v3453
    %v3468 = vpack.c.bf16 %v3464, %v3461
    %3471 = vrot.lane.b32.xlu0 %v3211, 96
    %v3472 = vpop.permute.xlu0 %3471
    %3473 = vrot.lane.b32.xlu0 %v3212, 96
    %v3474 = vpop.permute.xlu0 %3473
    %3477 = vrot.lane.b32.xlu0 %v3276, 96
    %v3478 = vpop.permute.xlu0 %3477
    %3479 = vrot.lane.b32.xlu0 %v3277, 96
    %v3480 = vpop.permute.xlu0 %3479
    %v3482 = vsel %vm702, %v3472, 0
    %v3485 = vsel %vm702, %v3474, 0
    %v3488 = vsel %vm702, %v3478, 0
    %v3491 = vsel %vm702, %v3480, 0
    %3493 = vmatprep.subr.bf16.mxu0 0
    %3494 = vmatpush1.bf16.xpose.msra.mxu0 0
    %3495 = vmatprep.subr.bf16.mxu0 0
    %3496 = vmatpush1.bf16.xpose.msra.mxu0 0
    %3497 = vmatprep.subr.bf16.mxu0 0
    %3498 = vmatpush1.bf16.xpose.msra.mxu0 0
    %3499 = vmatprep.subr.bf16.mxu0 0
    %3500 = vmatpush1.bf16.xpose.msra.mxu0 0
    %3501 = vmatprep.subr.bf16.mxu0 0
    %3502 = vmatpush1.bf16.xpose.msra.mxu0 0
    %3503 = vmatprep.subr.bf16.mxu0 0
    %3504 = vmatpush1.bf16.xpose.msra.mxu0 0
    %3505 = vmatprep.subr.bf16.mxu0 0
    %3506 = vmatpush1.bf16.xpose.msra.mxu0 %v3491
    %3507 = vmatprep.subr.bf16.mxu0 0
    %3508 = vmatpush1.bf16.xpose.msra.mxu0 %v3488
    %3509 = vmatprep.subr.bf16.mxu0 0
    %3510 = vmatpush2.bf16.xpose.msra.mxu0 0
    %3511 = vmatprep.subr.bf16.mxu0 0
    %3512 = vmatpush2.bf16.xpose.msra.mxu0 0
    %3513 = vmatprep.subr.bf16.mxu0 0
    %3514 = vmatpush2.bf16.xpose.msra.mxu0 0
    %3515 = vmatprep.subr.bf16.mxu0 0
    %3516 = vmatpush2.bf16.xpose.msra.mxu0 0
    %3517 = vmatprep.subr.bf16.mxu0 0
    %3518 = vmatpush2.bf16.xpose.msra.mxu0 0
    %3519 = vmatprep.subr.bf16.mxu0 0
    %3520 = vmatpush2.bf16.xpose.msra.mxu0 0
    %3521 = vmatprep.subr.bf16.mxu0 0
    %3522 = vmatpush2.bf16.xpose.msra.mxu0 0
    %3523 = vmatprep.subr.bf16.mxu0 0
    %3524 = vmatpush2.bf16.xpose.msra.mxu0 0
    %3525 = vmatprep.mubr.bf16.mxu0 0
    %3526 = vmatmul.mubr.bf16.gmra.mxu0 %v3482
    %v3527 = vpop.f32.mrf.mxu0
    %v3528 = vadd.f32 0.0, %v3527
    %v3529 = vpop.f32.mrf.mxu0
    %v3530 = vpop.f32.mrf.mxu0
    %v3531 = vadd.f32 0.0, %v3530
    %v3532 = vpop.f32.mrf.mxu0
    %3533 = vmatprep.mubr.bf16.mxu0 0
    %3534 = vmatmul.mubr.bf16.gmra.mxu0 %v3485
    %v3535 = vpop.f32.mrf.mxu0
    %v3536 = vadd.f32 0.0, %v3535
    %v3537 = vpop.f32.mrf.mxu0
    %v3538 = vpop.f32.mrf.mxu0
    %v3539 = vadd.f32 0.0, %v3538
    %v3540 = vpop.f32.mrf.mxu0
    %3541 = vdwg.mxu0
    %v3542 = vmul.f32 %v3528, 0.17677669
    %v3543 = vmul.f32 %v3531, 0.17677669
    %v3544 = vmul.f32 %v3536, 0.17677669
    %v3545 = vmul.f32 %v3539, 0.17677669
    %v3546 = vadd.f32 %v3542, %v184
    %v3547 = vadd.f32 %v3543, %v185
    %v3548 = vadd.f32 %v3544, %v186
    %v3549 = vadd.f32 %v3545, %v187
    %v3550 = vsel %vm702, %v3546, -inf
    %3551 = vmax.xlane.f32.xlu0 %v3550
    %v3552 = vpop.xlane.xlu0 %3551
    %v3553 = vsel %vm702, %v3547, -inf
    %3554 = vmax.xlane.f32.xlu0 %v3553
    %v3555 = vpop.xlane.xlu0 %3554
    %v3556 = vsel %vm702, %v3548, -inf
    %3557 = vmax.xlane.f32.xlu0 %v3556
    %v3558 = vpop.xlane.xlu0 %3557
    %v3559 = vsel %vm702, %v3549, -inf
    %3560 = vmax.xlane.f32.xlu0 %v3559
    %v3561 = vpop.xlane.xlu0 %3560
    %v3562 = vsub.f32 %v3546, %v3552
    %v3563 = vsub.f32 %v3547, %v3555
    %v3564 = vsub.f32 %v3548, %v3558
    %v3565 = vsub.f32 %v3549, %v3561
    %v3566 = vmul.f32 %v3562, 1.442695
    %v3567 = vpow.pop %v3566
    %v3568 = vmul.f32 %v3563, 1.442695
    %v3569 = vpow.pop %v3568
    %v3570 = vmul.f32 %v3564, 1.442695
    %v3571 = vpow.pop %v3570
    %v3572 = vmul.f32 %v3565, 1.442695
    %v3573 = vpow.pop %v3572
    %v3574 = vsel %vm702, %v3567, 0.0
    %3575 = vadd.xlane.f32.xlu0 %v3574
    %v3576 = vpop.xlane.xlu0 %3575
    %v3577 = vsel %vm702, %v3569, 0.0
    %3578 = vadd.xlane.f32.xlu0 %v3577
    %v3579 = vpop.xlane.xlu0 %3578
    %v3580 = vsel %vm702, %v3571, 0.0
    %3581 = vadd.xlane.f32.xlu0 %v3580
    %v3582 = vpop.xlane.xlu0 %3581
    %v3583 = vsel %vm702, %v3573, 0.0
    %3584 = vadd.xlane.f32.xlu0 %v3583
    %v3585 = vpop.xlane.xlu0 %3584
    %v3586 = vrcp.pop %v3576
    %v3587 = vrcp.pop %v3579
    %v3588 = vrcp.pop %v3582
    %v3589 = vrcp.pop %v3585
    %v3590 = vmul.f32 %v3567, %v3586
    %v3591 = vmul.f32 %v3569, %v3587
    %v3592 = vmul.f32 %v3571, %v3588
    %v3593 = vmul.f32 %v3573, %v3589
    %v3594 = vpack.c.bf16 %v3591, %v3590
    %v3595 = vpack.c.bf16 %v3593, %v3592
    %3598 = vrot.lane.b32.xlu0 %v3278, 96
    %v3599 = vpop.permute.xlu0 %3598
    %3600 = vrot.lane.b32.xlu0 %v3279, 96
    %v3601 = vpop.permute.xlu0 %3600
    %v3605 = vsel %vm702, %v3594, 0
    %v3608 = vsel %vm702, %v3595, 0
    %3610 = vmatprep.subr.bf16.mxu0 0
    %3611 = vmatpush1.bf16.msra.mxu0 0
    %3612 = vmatprep.subr.bf16.mxu0 0
    %3613 = vmatpush1.bf16.msra.mxu0 0
    %3614 = vmatprep.subr.bf16.mxu0 0
    %3615 = vmatpush1.bf16.msra.mxu0 0
    %3616 = vmatprep.subr.bf16.mxu0 0
    %3617 = vmatpush1.bf16.msra.mxu0 0
    %3618 = vmatprep.subr.bf16.mxu0 0
    %3619 = vmatpush1.bf16.msra.mxu0 0
    %3620 = vmatprep.subr.bf16.mxu0 0
    %3621 = vmatpush1.bf16.msra.mxu0 0
    %3622 = vmatprep.subr.bf16.mxu0 0
    %3623 = vmatpush1.bf16.msra.mxu0 %v3601
    %3624 = vmatprep.subr.bf16.mxu0 0
    %3625 = vmatpush1.bf16.msra.mxu0 %v3599
    %3626 = vmatprep.subr.bf16.mxu0 0
    %3627 = vmatpush2.bf16.msra.mxu0 0
    %3628 = vmatprep.subr.bf16.mxu0 0
    %3629 = vmatpush2.bf16.msra.mxu0 0
    %3630 = vmatprep.subr.bf16.mxu0 0
    %3631 = vmatpush2.bf16.msra.mxu0 0
    %3632 = vmatprep.subr.bf16.mxu0 0
    %3633 = vmatpush2.bf16.msra.mxu0 0
    %3634 = vmatprep.subr.bf16.mxu0 0
    %3635 = vmatpush2.bf16.msra.mxu0 0
    %3636 = vmatprep.subr.bf16.mxu0 0
    %3637 = vmatpush2.bf16.msra.mxu0 0
    %3638 = vmatprep.subr.bf16.mxu0 0
    %3639 = vmatpush2.bf16.msra.mxu0 0
    %3640 = vmatprep.subr.bf16.mxu0 0
    %3641 = vmatpush2.bf16.msra.mxu0 0
    %3642 = vmatprep.mubr.bf16.mxu0 0
    %3643 = vmatmul.mubr.bf16.gmra.mxu0 %v3605
    %v3644 = vpop.f32.mrf.mxu0
    %v3645 = vadd.f32 0.0, %v3644
    %v3646 = vpop.f32.mrf.mxu0
    %v3647 = vpop.f32.mrf.mxu0
    %v3648 = vadd.f32 0.0, %v3647
    %v3649 = vpop.f32.mrf.mxu0
    %3650 = vmatprep.mubr.bf16.mxu0 0
    %3651 = vmatmul.mubr.bf16.gmra.mxu0 %v3608
    %v3652 = vpop.f32.mrf.mxu0
    %v3653 = vadd.f32 0.0, %v3652
    %v3654 = vpop.f32.mrf.mxu0
    %v3655 = vpop.f32.mrf.mxu0
    %v3656 = vadd.f32 0.0, %v3655
    %v3657 = vpop.f32.mrf.mxu0
    %3658 = vdwg.mxu0
    %v3659 = vpack.c.bf16 %v3648, %v3645
    %v3660 = vpack.c.bf16 %v3656, %v3653
    %v3665 = vunpack.c.l.b16 %v3285
    %v3666 = vunpack.c.l.b16 %v3286
    %v3667 = vunpack.c.l.b16 %v3287
    %v3668 = vunpack.c.l.b16 %v3288
    %v3669 = vpack.c.b16 %v3666, %v3665
    %v3670 = vpack.c.b16 %v3668, %v3667
    %v3674 = vsel %vm702, %v3659, 0
    %v3677 = vsel %vm702, %v3660, 0
    %3679 = vmatprep.subr.bf16.mxu0 0
    %3680 = vmatpush1.bf16.msra.mxu0 0
    %3681 = vmatprep.subr.bf16.mxu0 0
    %3682 = vmatpush1.bf16.msra.mxu0 0
    %3683 = vmatprep.subr.bf16.mxu0 0
    %3684 = vmatpush1.bf16.msra.mxu0 0
    %3685 = vmatprep.subr.bf16.mxu0 0
    %3686 = vmatpush1.bf16.msra.mxu0 0
    %3687 = vmatprep.subr.bf16.mxu0 0
    %3688 = vmatpush1.bf16.msra.mxu0 0
    %3689 = vmatprep.subr.bf16.mxu0 0
    %3690 = vmatpush1.bf16.msra.mxu0 0
    %3691 = vmatprep.subr.bf16.mxu0 0
    %3692 = vmatpush1.bf16.msra.mxu0 %v3670
    %3693 = vmatprep.subr.bf16.mxu0 0
    %3694 = vmatpush1.bf16.msra.mxu0 %v3669
    %3695 = vmatprep.subr.bf16.mxu0 0
    %3696 = vmatpush2.bf16.msra.mxu0 0
    %3697 = vmatprep.subr.bf16.mxu0 0
    %3698 = vmatpush2.bf16.msra.mxu0 0
    %3699 = vmatprep.subr.bf16.mxu0 0
    %3700 = vmatpush2.bf16.msra.mxu0 0
    %3701 = vmatprep.subr.bf16.mxu0 0
    %3702 = vmatpush2.bf16.msra.mxu0 0
    %3703 = vmatprep.subr.bf16.mxu0 0
    %3704 = vmatpush2.bf16.msra.mxu0 0
    %3705 = vmatprep.subr.bf16.mxu0 0
    %3706 = vmatpush2.bf16.msra.mxu0 0
    %3707 = vmatprep.subr.bf16.mxu0 0
    %3708 = vmatpush2.bf16.msra.mxu0 0
    %3709 = vmatprep.subr.bf16.mxu0 0
    %3710 = vmatpush2.bf16.msra.mxu0 0
    %3711 = vmatprep.mubr.bf16.mxu0 0
    %3712 = vmatmul.mubr.bf16.gmra.mxu0 %v3674
    %v3713 = vpop.f32.mrf.mxu0
    %v3714 = vadd.f32 0.0, %v3713
    %v3715 = vpop.f32.mrf.mxu0
    %v3716 = vpop.f32.mrf.mxu0
    %v3717 = vadd.f32 0.0, %v3716
    %v3718 = vpop.f32.mrf.mxu0
    %3719 = vmatprep.mubr.bf16.mxu0 0
    %3720 = vmatmul.mubr.bf16.gmra.mxu0 %v3677
    %v3721 = vpop.f32.mrf.mxu0
    %v3722 = vadd.f32 0.0, %v3721
    %v3723 = vpop.f32.mrf.mxu0
    %v3724 = vpop.f32.mrf.mxu0
    %v3725 = vadd.f32 0.0, %v3724
    %v3726 = vpop.f32.mrf.mxu0
    %3727 = vdwg.mxu0
    %v3732 = vunpack.c.l.b16 %v3281
    %v3733 = vunpack.c.l.b16 %v3282
    %v3734 = vunpack.c.l.b16 %v3283
    %v3735 = vunpack.c.l.b16 %v3284
    %v3736 = vpack.c.b16 %v3733, %v3732
    %v3737 = vpack.c.b16 %v3735, %v3734
    %v3741 = vsel %vm702, %v3467, 0
    %v3744 = vsel %vm702, %v3468, 0
    %3746 = vmatprep.subr.bf16.mxu0 0
    %3747 = vmatpush1.bf16.msra.mxu0 0
    %3748 = vmatprep.subr.bf16.mxu0 0
    %3749 = vmatpush1.bf16.msra.mxu0 0
    %3750 = vmatprep.subr.bf16.mxu0 0
    %3751 = vmatpush1.bf16.msra.mxu0 0
    %3752 = vmatprep.subr.bf16.mxu0 0
    %3753 = vmatpush1.bf16.msra.mxu0 0
    %3754 = vmatprep.subr.bf16.mxu0 0
    %3755 = vmatpush1.bf16.msra.mxu0 0
    %3756 = vmatprep.subr.bf16.mxu0 0
    %3757 = vmatpush1.bf16.msra.mxu0 0
    %3758 = vmatprep.subr.bf16.mxu0 0
    %3759 = vmatpush1.bf16.msra.mxu0 %v3737
    %3760 = vmatprep.subr.bf16.mxu0 0
    %3761 = vmatpush1.bf16.msra.mxu0 %v3736
    %3762 = vmatprep.subr.bf16.mxu0 0
    %3763 = vmatpush2.bf16.msra.mxu0 0
    %3764 = vmatprep.subr.bf16.mxu0 0
    %3765 = vmatpush2.bf16.msra.mxu0 0
    %3766 = vmatprep.subr.bf16.mxu0 0
    %3767 = vmatpush2.bf16.msra.mxu0 0
    %3768 = vmatprep.subr.bf16.mxu0 0
    %3769 = vmatpush2.bf16.msra.mxu0 0
    %3770 = vmatprep.subr.bf16.mxu0 0
    %3771 = vmatpush2.bf16.msra.mxu0 0
    %3772 = vmatprep.subr.bf16.mxu0 0
    %3773 = vmatpush2.bf16.msra.mxu0 0
    %3774 = vmatprep.subr.bf16.mxu0 0
    %3775 = vmatpush2.bf16.msra.mxu0 0
    %3776 = vmatprep.subr.bf16.mxu0 0
    %3777 = vmatpush2.bf16.msra.mxu0 0
    %3778 = vmatprep.mubr.bf16.mxu0 0
    %3779 = vmatmul.mubr.bf16.gmra.mxu0 %v3741
    %v3780 = vpop.f32.mrf.mxu0
    %v3781 = vadd.f32 %v3714, %v3780
    %v3782 = vpop.f32.mrf.mxu0
    %v3783 = vpop.f32.mrf.mxu0
    %v3784 = vadd.f32 %v3717, %v3783
    %v3785 = vpop.f32.mrf.mxu0
    %3786 = vmatprep.mubr.bf16.mxu0 0
    %3787 = vmatmul.mubr.bf16.gmra.mxu0 %v3744
    %v3788 = vpop.f32.mrf.mxu0
    %v3789 = vadd.f32 %v3722, %v3788
    %v3790 = vpop.f32.mrf.mxu0
    %v3791 = vpop.f32.mrf.mxu0
    %v3792 = vadd.f32 %v3725, %v3791
    %v3793 = vpop.f32.mrf.mxu0
    %3794 = vdwg.mxu0
    %3795 = vrot.lane.b32.xlu0 %v3211, 64
    %v3796 = vpop.permute.xlu0 %3795
    %3797 = vrot.lane.b32.xlu0 %v3212, 64
    %v3798 = vpop.permute.xlu0 %3797
    %3799 = vrot.lane.b32.xlu0 %v3276, 64
    %v3800 = vpop.permute.xlu0 %3799
    %3801 = vrot.lane.b32.xlu0 %v3277, 64
    %v3802 = vpop.permute.xlu0 %3801
    %v3804 = vsel %vm702, %v3796, 0
    %v3807 = vsel %vm702, %v3798, 0
    %v3810 = vsel %vm702, %v3800, 0
    %v3813 = vsel %vm702, %v3802, 0
    %3815 = vmatprep.subr.bf16.mxu0 0
    %3816 = vmatpush1.bf16.xpose.msra.mxu0 0
    %3817 = vmatprep.subr.bf16.mxu0 0
    %3818 = vmatpush1.bf16.xpose.msra.mxu0 0
    %3819 = vmatprep.subr.bf16.mxu0 0
    %3820 = vmatpush1.bf16.xpose.msra.mxu0 0
    %3821 = vmatprep.subr.bf16.mxu0 0
    %3822 = vmatpush1.bf16.xpose.msra.mxu0 0
    %3823 = vmatprep.subr.bf16.mxu0 0
    %3824 = vmatpush1.bf16.xpose.msra.mxu0 0
    %3825 = vmatprep.subr.bf16.mxu0 0
    %3826 = vmatpush1.bf16.xpose.msra.mxu0 0
    %3827 = vmatprep.subr.bf16.mxu0 0
    %3828 = vmatpush1.bf16.xpose.msra.mxu0 %v3813
    %3829 = vmatprep.subr.bf16.mxu0 0
    %3830 = vmatpush1.bf16.xpose.msra.mxu0 %v3810
    %3831 = vmatprep.subr.bf16.mxu0 0
    %3832 = vmatpush2.bf16.xpose.msra.mxu0 0
    %3833 = vmatprep.subr.bf16.mxu0 0
    %3834 = vmatpush2.bf16.xpose.msra.mxu0 0
    %3835 = vmatprep.subr.bf16.mxu0 0
    %3836 = vmatpush2.bf16.xpose.msra.mxu0 0
    %3837 = vmatprep.subr.bf16.mxu0 0
    %3838 = vmatpush2.bf16.xpose.msra.mxu0 0
    %3839 = vmatprep.subr.bf16.mxu0 0
    %3840 = vmatpush2.bf16.xpose.msra.mxu0 0
    %3841 = vmatprep.subr.bf16.mxu0 0
    %3842 = vmatpush2.bf16.xpose.msra.mxu0 0
    %3843 = vmatprep.subr.bf16.mxu0 0
    %3844 = vmatpush2.bf16.xpose.msra.mxu0 0
    %3845 = vmatprep.subr.bf16.mxu0 0
    %3846 = vmatpush2.bf16.xpose.msra.mxu0 0
    %3847 = vmatprep.mubr.bf16.mxu0 0
    %3848 = vmatmul.mubr.bf16.gmra.mxu0 %v3804
    %v3849 = vpop.f32.mrf.mxu0
    %v3850 = vadd.f32 0.0, %v3849
    %v3851 = vpop.f32.mrf.mxu0
    %v3852 = vpop.f32.mrf.mxu0
    %v3853 = vadd.f32 0.0, %v3852
    %v3854 = vpop.f32.mrf.mxu0
    %3855 = vmatprep.mubr.bf16.mxu0 0
    %3856 = vmatmul.mubr.bf16.gmra.mxu0 %v3807
    %v3857 = vpop.f32.mrf.mxu0
    %v3858 = vadd.f32 0.0, %v3857
    %v3859 = vpop.f32.mrf.mxu0
    %v3860 = vpop.f32.mrf.mxu0
    %v3861 = vadd.f32 0.0, %v3860
    %v3862 = vpop.f32.mrf.mxu0
    %3863 = vdwg.mxu0
    %v3864 = vmul.f32 %v3850, 0.17677669
    %v3865 = vmul.f32 %v3853, 0.17677669
    %v3866 = vmul.f32 %v3858, 0.17677669
    %v3867 = vmul.f32 %v3861, 0.17677669
    %v3868 = vadd.f32 %v3864, %v184
    %v3869 = vadd.f32 %v3865, %v185
    %v3870 = vadd.f32 %v3866, %v186
    %v3871 = vadd.f32 %v3867, %v187
    %v3872 = vsel %vm702, %v3868, -inf
    %3873 = vmax.xlane.f32.xlu0 %v3872
    %v3874 = vpop.xlane.xlu0 %3873
    %v3875 = vsel %vm702, %v3869, -inf
    %3876 = vmax.xlane.f32.xlu0 %v3875
    %v3877 = vpop.xlane.xlu0 %3876
    %v3878 = vsel %vm702, %v3870, -inf
    %3879 = vmax.xlane.f32.xlu0 %v3878
    %v3880 = vpop.xlane.xlu0 %3879
    %v3881 = vsel %vm702, %v3871, -inf
    %3882 = vmax.xlane.f32.xlu0 %v3881
    %v3883 = vpop.xlane.xlu0 %3882
    %v3884 = vsub.f32 %v3868, %v3874
    %v3885 = vsub.f32 %v3869, %v3877
    %v3886 = vsub.f32 %v3870, %v3880
    %v3887 = vsub.f32 %v3871, %v3883
    %v3888 = vmul.f32 %v3884, 1.442695
    %v3889 = vpow.pop %v3888
    %v3890 = vmul.f32 %v3885, 1.442695
    %v3891 = vpow.pop %v3890
    %v3892 = vmul.f32 %v3886, 1.442695
    %v3893 = vpow.pop %v3892
    %v3894 = vmul.f32 %v3887, 1.442695
    %v3895 = vpow.pop %v3894
    %v3896 = vsel %vm702, %v3889, 0.0
    %3897 = vadd.xlane.f32.xlu0 %v3896
    %v3898 = vpop.xlane.xlu0 %3897
    %v3899 = vsel %vm702, %v3891, 0.0
    %3900 = vadd.xlane.f32.xlu0 %v3899
    %v3901 = vpop.xlane.xlu0 %3900
    %v3902 = vsel %vm702, %v3893, 0.0
    %3903 = vadd.xlane.f32.xlu0 %v3902
    %v3904 = vpop.xlane.xlu0 %3903
    %v3905 = vsel %vm702, %v3895, 0.0
    %3906 = vadd.xlane.f32.xlu0 %v3905
    %v3907 = vpop.xlane.xlu0 %3906
    %v3908 = vrcp.pop %v3898
    %v3909 = vrcp.pop %v3901
    %v3910 = vrcp.pop %v3904
    %v3911 = vrcp.pop %v3907
    %v3912 = vmul.f32 %v3889, %v3908
    %v3913 = vmul.f32 %v3891, %v3909
    %v3914 = vmul.f32 %v3893, %v3910
    %v3915 = vmul.f32 %v3895, %v3911
    %v3916 = vpack.c.bf16 %v3913, %v3912
    %v3917 = vpack.c.bf16 %v3915, %v3914
    %3918 = vrot.lane.b32.xlu0 %v3278, 64
    %v3919 = vpop.permute.xlu0 %3918
    %3920 = vrot.lane.b32.xlu0 %v3279, 64
    %v3921 = vpop.permute.xlu0 %3920
    %v3925 = vsel %vm702, %v3916, 0
    %v3928 = vsel %vm702, %v3917, 0
    %3930 = vmatprep.subr.bf16.mxu0 0
    %3931 = vmatpush1.bf16.msra.mxu0 0
    %3932 = vmatprep.subr.bf16.mxu0 0
    %3933 = vmatpush1.bf16.msra.mxu0 0
    %3934 = vmatprep.subr.bf16.mxu0 0
    %3935 = vmatpush1.bf16.msra.mxu0 0
    %3936 = vmatprep.subr.bf16.mxu0 0
    %3937 = vmatpush1.bf16.msra.mxu0 0
    %3938 = vmatprep.subr.bf16.mxu0 0
    %3939 = vmatpush1.bf16.msra.mxu0 0
    %3940 = vmatprep.subr.bf16.mxu0 0
    %3941 = vmatpush1.bf16.msra.mxu0 0
    %3942 = vmatprep.subr.bf16.mxu0 0
    %3943 = vmatpush1.bf16.msra.mxu0 %v3921
    %3944 = vmatprep.subr.bf16.mxu0 0
    %3945 = vmatpush1.bf16.msra.mxu0 %v3919
    %3946 = vmatprep.subr.bf16.mxu0 0
    %3947 = vmatpush2.bf16.msra.mxu0 0
    %3948 = vmatprep.subr.bf16.mxu0 0
    %3949 = vmatpush2.bf16.msra.mxu0 0
    %3950 = vmatprep.subr.bf16.mxu0 0
    %3951 = vmatpush2.bf16.msra.mxu0 0
    %3952 = vmatprep.subr.bf16.mxu0 0
    %3953 = vmatpush2.bf16.msra.mxu0 0
    %3954 = vmatprep.subr.bf16.mxu0 0
    %3955 = vmatpush2.bf16.msra.mxu0 0
    %3956 = vmatprep.subr.bf16.mxu0 0
    %3957 = vmatpush2.bf16.msra.mxu0 0
    %3958 = vmatprep.subr.bf16.mxu0 0
    %3959 = vmatpush2.bf16.msra.mxu0 0
    %3960 = vmatprep.subr.bf16.mxu0 0
    %3961 = vmatpush2.bf16.msra.mxu0 0
    %3962 = vmatprep.mubr.bf16.mxu0 0
    %3963 = vmatmul.mubr.bf16.gmra.mxu0 %v3925
    %v3964 = vpop.f32.mrf.mxu0
    %v3965 = vadd.f32 0.0, %v3964
    %v3966 = vpop.f32.mrf.mxu0
    %v3967 = vpop.f32.mrf.mxu0
    %v3968 = vadd.f32 0.0, %v3967
    %v3969 = vpop.f32.mrf.mxu0
    %3970 = vmatprep.mubr.bf16.mxu0 0
    %3971 = vmatmul.mubr.bf16.gmra.mxu0 %v3928
    %v3972 = vpop.f32.mrf.mxu0
    %v3973 = vadd.f32 0.0, %v3972
    %v3974 = vpop.f32.mrf.mxu0
    %v3975 = vpop.f32.mrf.mxu0
    %v3976 = vadd.f32 0.0, %v3975
    %v3977 = vpop.f32.mrf.mxu0
    %3978 = vdwg.mxu0
    %v3979 = vpack.c.bf16 %v3968, %v3965
    %v3980 = vpack.c.bf16 %v3976, %v3973
    %v3985 = vunpack.c.l.b16 %v3289
    %v3986 = vunpack.c.l.b16 %v3290
    %v3987 = vunpack.c.l.b16 %v3291
    %v3988 = vunpack.c.l.b16 %v3292
    %v3989 = vpack.c.b16 %v3986, %v3985
    %v3990 = vpack.c.b16 %v3988, %v3987
    %v3994 = vsel %vm702, %v3979, 0
    %v3997 = vsel %vm702, %v3980, 0
    %3999 = vmatprep.subr.bf16.mxu0 0
    %4000 = vmatpush1.bf16.msra.mxu0 0
    %4001 = vmatprep.subr.bf16.mxu0 0
    %4002 = vmatpush1.bf16.msra.mxu0 0
    %4003 = vmatprep.subr.bf16.mxu0 0
    %4004 = vmatpush1.bf16.msra.mxu0 0
    %4005 = vmatprep.subr.bf16.mxu0 0
    %4006 = vmatpush1.bf16.msra.mxu0 0
    %4007 = vmatprep.subr.bf16.mxu0 0
    %4008 = vmatpush1.bf16.msra.mxu0 0
    %4009 = vmatprep.subr.bf16.mxu0 0
    %4010 = vmatpush1.bf16.msra.mxu0 0
    %4011 = vmatprep.subr.bf16.mxu0 0
    %4012 = vmatpush1.bf16.msra.mxu0 %v3990
    %4013 = vmatprep.subr.bf16.mxu0 0
    %4014 = vmatpush1.bf16.msra.mxu0 %v3989
    %4015 = vmatprep.subr.bf16.mxu0 0
    %4016 = vmatpush2.bf16.msra.mxu0 0
    %4017 = vmatprep.subr.bf16.mxu0 0
    %4018 = vmatpush2.bf16.msra.mxu0 0
    %4019 = vmatprep.subr.bf16.mxu0 0
    %4020 = vmatpush2.bf16.msra.mxu0 0
    %4021 = vmatprep.subr.bf16.mxu0 0
    %4022 = vmatpush2.bf16.msra.mxu0 0
    %4023 = vmatprep.subr.bf16.mxu0 0
    %4024 = vmatpush2.bf16.msra.mxu0 0
    %4025 = vmatprep.subr.bf16.mxu0 0
    %4026 = vmatpush2.bf16.msra.mxu0 0
    %4027 = vmatprep.subr.bf16.mxu0 0
    %4028 = vmatpush2.bf16.msra.mxu0 0
    %4029 = vmatprep.subr.bf16.mxu0 0
    %4030 = vmatpush2.bf16.msra.mxu0 0
    %4031 = vmatprep.mubr.bf16.mxu0 0
    %4032 = vmatmul.mubr.bf16.gmra.mxu0 %v3994
    %v4033 = vpop.f32.mrf.mxu0
    %v4034 = vadd.f32 0.0, %v4033
    %v4035 = vpop.f32.mrf.mxu0
    %v4036 = vpop.f32.mrf.mxu0
    %v4037 = vadd.f32 0.0, %v4036
    %v4038 = vpop.f32.mrf.mxu0
    %4039 = vmatprep.mubr.bf16.mxu0 0
    %4040 = vmatmul.mubr.bf16.gmra.mxu0 %v3997
    %v4041 = vpop.f32.mrf.mxu0
    %v4042 = vadd.f32 0.0, %v4041
    %v4043 = vpop.f32.mrf.mxu0
    %v4044 = vpop.f32.mrf.mxu0
    %v4045 = vadd.f32 0.0, %v4044
    %v4046 = vpop.f32.mrf.mxu0
    %4047 = vdwg.mxu0
    %v4048 = vadd.f32 %v3781, %v4034
    %v4049 = vadd.f32 %v3784, %v4037
    %v4050 = vadd.f32 %v3789, %v4042
    %v4051 = vadd.f32 %v3792, %v4045
    %4052 = vrot.lane.b32.xlu0 %v3211, 32
    %v4053 = vpop.permute.xlu0 %4052
    %4054 = vrot.lane.b32.xlu0 %v3212, 32
    %v4055 = vpop.permute.xlu0 %4054
    %4056 = vrot.lane.b32.xlu0 %v3276, 32
    %v4057 = vpop.permute.xlu0 %4056
    %4058 = vrot.lane.b32.xlu0 %v3277, 32
    %v4059 = vpop.permute.xlu0 %4058
    %v4061 = vsel %vm702, %v4053, 0
    %v4064 = vsel %vm702, %v4055, 0
    %v4067 = vsel %vm702, %v4057, 0
    %v4070 = vsel %vm702, %v4059, 0
    %4072 = vmatprep.subr.bf16.mxu0 0
    %4073 = vmatpush1.bf16.xpose.msra.mxu0 0
    %4074 = vmatprep.subr.bf16.mxu0 0
    %4075 = vmatpush1.bf16.xpose.msra.mxu0 0
    %4076 = vmatprep.subr.bf16.mxu0 0
    %4077 = vmatpush1.bf16.xpose.msra.mxu0 0
    %4078 = vmatprep.subr.bf16.mxu0 0
    %4079 = vmatpush1.bf16.xpose.msra.mxu0 0
    %4080 = vmatprep.subr.bf16.mxu0 0
    %4081 = vmatpush1.bf16.xpose.msra.mxu0 0
    %4082 = vmatprep.subr.bf16.mxu0 0
    %4083 = vmatpush1.bf16.xpose.msra.mxu0 0
    %4084 = vmatprep.subr.bf16.mxu0 0
    %4085 = vmatpush1.bf16.xpose.msra.mxu0 %v4070
    %4086 = vmatprep.subr.bf16.mxu0 0
    %4087 = vmatpush1.bf16.xpose.msra.mxu0 %v4067
    %4088 = vmatprep.subr.bf16.mxu0 0
    %4089 = vmatpush2.bf16.xpose.msra.mxu0 0
    %4090 = vmatprep.subr.bf16.mxu0 0
    %4091 = vmatpush2.bf16.xpose.msra.mxu0 0
    %4092 = vmatprep.subr.bf16.mxu0 0
    %4093 = vmatpush2.bf16.xpose.msra.mxu0 0
    %4094 = vmatprep.subr.bf16.mxu0 0
    %4095 = vmatpush2.bf16.xpose.msra.mxu0 0
    %4096 = vmatprep.subr.bf16.mxu0 0
    %4097 = vmatpush2.bf16.xpose.msra.mxu0 0
    %4098 = vmatprep.subr.bf16.mxu0 0
    %4099 = vmatpush2.bf16.xpose.msra.mxu0 0
    %4100 = vmatprep.subr.bf16.mxu0 0
    %4101 = vmatpush2.bf16.xpose.msra.mxu0 0
    %4102 = vmatprep.subr.bf16.mxu0 0
    %4103 = vmatpush2.bf16.xpose.msra.mxu0 0
    %4104 = vmatprep.mubr.bf16.mxu0 0
    %4105 = vmatmul.mubr.bf16.gmra.mxu0 %v4061
    %v4106 = vpop.f32.mrf.mxu0
    %v4107 = vadd.f32 0.0, %v4106
    %v4108 = vpop.f32.mrf.mxu0
    %v4109 = vpop.f32.mrf.mxu0
    %v4110 = vadd.f32 0.0, %v4109
    %v4111 = vpop.f32.mrf.mxu0
    %4112 = vmatprep.mubr.bf16.mxu0 0
    %4113 = vmatmul.mubr.bf16.gmra.mxu0 %v4064
    %v4114 = vpop.f32.mrf.mxu0
    %v4115 = vadd.f32 0.0, %v4114
    %v4116 = vpop.f32.mrf.mxu0
    %v4117 = vpop.f32.mrf.mxu0
    %v4118 = vadd.f32 0.0, %v4117
    %v4119 = vpop.f32.mrf.mxu0
    %4120 = vdwg.mxu0
    %v4121 = vmul.f32 %v4107, 0.17677669
    %v4122 = vmul.f32 %v4110, 0.17677669
    %v4123 = vmul.f32 %v4115, 0.17677669
    %v4124 = vmul.f32 %v4118, 0.17677669
    %v4125 = vadd.f32 %v4121, %v184
    %v4126 = vadd.f32 %v4122, %v185
    %v4127 = vadd.f32 %v4123, %v186
    %v4128 = vadd.f32 %v4124, %v187
    %v4129 = vsel %vm702, %v4125, -inf
    %4130 = vmax.xlane.f32.xlu0 %v4129
    %v4131 = vpop.xlane.xlu0 %4130
    %v4132 = vsel %vm702, %v4126, -inf
    %4133 = vmax.xlane.f32.xlu0 %v4132
    %v4134 = vpop.xlane.xlu0 %4133
    %v4135 = vsel %vm702, %v4127, -inf
    %4136 = vmax.xlane.f32.xlu0 %v4135
    %v4137 = vpop.xlane.xlu0 %4136
    %v4138 = vsel %vm702, %v4128, -inf
    %4139 = vmax.xlane.f32.xlu0 %v4138
    %v4140 = vpop.xlane.xlu0 %4139
    %v4141 = vsub.f32 %v4125, %v4131
    %v4142 = vsub.f32 %v4126, %v4134
    %v4143 = vsub.f32 %v4127, %v4137
    %v4144 = vsub.f32 %v4128, %v4140
    %v4145 = vmul.f32 %v4141, 1.442695
    %v4146 = vpow.pop %v4145
    %v4147 = vmul.f32 %v4142, 1.442695
    %v4148 = vpow.pop %v4147
    %v4149 = vmul.f32 %v4143, 1.442695
    %v4150 = vpow.pop %v4149
    %v4151 = vmul.f32 %v4144, 1.442695
    %v4152 = vpow.pop %v4151
    %v4153 = vsel %vm702, %v4146, 0.0
    %4154 = vadd.xlane.f32.xlu0 %v4153
    %v4155 = vpop.xlane.xlu0 %4154
    %v4156 = vsel %vm702, %v4148, 0.0
    %4157 = vadd.xlane.f32.xlu0 %v4156
    %v4158 = vpop.xlane.xlu0 %4157
    %v4159 = vsel %vm702, %v4150, 0.0
    %4160 = vadd.xlane.f32.xlu0 %v4159
    %v4161 = vpop.xlane.xlu0 %4160
    %v4162 = vsel %vm702, %v4152, 0.0
    %4163 = vadd.xlane.f32.xlu0 %v4162
    %v4164 = vpop.xlane.xlu0 %4163
    %v4165 = vrcp.pop %v4155
    %v4166 = vrcp.pop %v4158
    %v4167 = vrcp.pop %v4161
    %v4168 = vrcp.pop %v4164
    %v4169 = vmul.f32 %v4146, %v4165
    %v4170 = vmul.f32 %v4148, %v4166
    %v4171 = vmul.f32 %v4150, %v4167
    %v4172 = vmul.f32 %v4152, %v4168
    %v4173 = vpack.c.bf16 %v4170, %v4169
    %v4174 = vpack.c.bf16 %v4172, %v4171
    %4175 = vrot.lane.b32.xlu0 %v3278, 32
    %v4176 = vpop.permute.xlu0 %4175
    %4177 = vrot.lane.b32.xlu0 %v3279, 32
    %v4178 = vpop.permute.xlu0 %4177
    %v4182 = vsel %vm702, %v4173, 0
    %v4185 = vsel %vm702, %v4174, 0
    %4187 = vmatprep.subr.bf16.mxu0 0
    %4188 = vmatpush1.bf16.msra.mxu0 0
    %4189 = vmatprep.subr.bf16.mxu0 0
    %4190 = vmatpush1.bf16.msra.mxu0 0
    %4191 = vmatprep.subr.bf16.mxu0 0
    %4192 = vmatpush1.bf16.msra.mxu0 0
    %4193 = vmatprep.subr.bf16.mxu0 0
    %4194 = vmatpush1.bf16.msra.mxu0 0
    %4195 = vmatprep.subr.bf16.mxu0 0
    %4196 = vmatpush1.bf16.msra.mxu0 0
    %4197 = vmatprep.subr.bf16.mxu0 0
    %4198 = vmatpush1.bf16.msra.mxu0 0
    %4199 = vmatprep.subr.bf16.mxu0 0
    %4200 = vmatpush1.bf16.msra.mxu0 %v4178
    %4201 = vmatprep.subr.bf16.mxu0 0
    %4202 = vmatpush1.bf16.msra.mxu0 %v4176
    %4203 = vmatprep.subr.bf16.mxu0 0
    %4204 = vmatpush2.bf16.msra.mxu0 0
    %4205 = vmatprep.subr.bf16.mxu0 0
    %4206 = vmatpush2.bf16.msra.mxu0 0
    %4207 = vmatprep.subr.bf16.mxu0 0
    %4208 = vmatpush2.bf16.msra.mxu0 0
    %4209 = vmatprep.subr.bf16.mxu0 0
    %4210 = vmatpush2.bf16.msra.mxu0 0
    %4211 = vmatprep.subr.bf16.mxu0 0
    %4212 = vmatpush2.bf16.msra.mxu0 0
    %4213 = vmatprep.subr.bf16.mxu0 0
    %4214 = vmatpush2.bf16.msra.mxu0 0
    %4215 = vmatprep.subr.bf16.mxu0 0
    %4216 = vmatpush2.bf16.msra.mxu0 0
    %4217 = vmatprep.subr.bf16.mxu0 0
    %4218 = vmatpush2.bf16.msra.mxu0 0
    %4219 = vmatprep.mubr.bf16.mxu0 0
    %4220 = vmatmul.mubr.bf16.gmra.mxu0 %v4182
    %v4221 = vpop.f32.mrf.mxu0
    %v4222 = vadd.f32 0.0, %v4221
    %v4223 = vpop.f32.mrf.mxu0
    %v4224 = vpop.f32.mrf.mxu0
    %v4225 = vadd.f32 0.0, %v4224
    %v4226 = vpop.f32.mrf.mxu0
    %4227 = vmatprep.mubr.bf16.mxu0 0
    %4228 = vmatmul.mubr.bf16.gmra.mxu0 %v4185
    %v4229 = vpop.f32.mrf.mxu0
    %v4230 = vadd.f32 0.0, %v4229
    %v4231 = vpop.f32.mrf.mxu0
    %v4232 = vpop.f32.mrf.mxu0
    %v4233 = vadd.f32 0.0, %v4232
    %v4234 = vpop.f32.mrf.mxu0
    %4235 = vdwg.mxu0
    %v4236 = vpack.c.bf16 %v4225, %v4222
    %v4237 = vpack.c.bf16 %v4233, %v4230
    %v4242 = vunpack.c.l.b16 %v3293
    %v4243 = vunpack.c.l.b16 %v3294
    %v4244 = vunpack.c.l.b16 %v3295
    %v4245 = vunpack.c.l.b16 %v3296
    %v4246 = vpack.c.b16 %v4243, %v4242
    %v4247 = vpack.c.b16 %v4245, %v4244
    %v4251 = vsel %vm702, %v4236, 0
    %v4254 = vsel %vm702, %v4237, 0
    %4256 = vmatprep.subr.bf16.mxu0 0
    %4257 = vmatpush1.bf16.msra.mxu0 0
    %4258 = vmatprep.subr.bf16.mxu0 0
    %4259 = vmatpush1.bf16.msra.mxu0 0
    %4260 = vmatprep.subr.bf16.mxu0 0
    %4261 = vmatpush1.bf16.msra.mxu0 0
    %4262 = vmatprep.subr.bf16.mxu0 0
    %4263 = vmatpush1.bf16.msra.mxu0 0
    %4264 = vmatprep.subr.bf16.mxu0 0
    %4265 = vmatpush1.bf16.msra.mxu0 0
    %4266 = vmatprep.subr.bf16.mxu0 0
    %4267 = vmatpush1.bf16.msra.mxu0 0
    %4268 = vmatprep.subr.bf16.mxu0 0
    %4269 = vmatpush1.bf16.msra.mxu0 %v4247
    %4270 = vmatprep.subr.bf16.mxu0 0
    %4271 = vmatpush1.bf16.msra.mxu0 %v4246
    %4272 = vmatprep.subr.bf16.mxu0 0
    %4273 = vmatpush2.bf16.msra.mxu0 0
    %4274 = vmatprep.subr.bf16.mxu0 0
    %4275 = vmatpush2.bf16.msra.mxu0 0
    %4276 = vmatprep.subr.bf16.mxu0 0
    %4277 = vmatpush2.bf16.msra.mxu0 0
    %4278 = vmatprep.subr.bf16.mxu0 0
    %4279 = vmatpush2.bf16.msra.mxu0 0
    %4280 = vmatprep.subr.bf16.mxu0 0
    %4281 = vmatpush2.bf16.msra.mxu0 0
    %4282 = vmatprep.subr.bf16.mxu0 0
    %4283 = vmatpush2.bf16.msra.mxu0 0
    %4284 = vmatprep.subr.bf16.mxu0 0
    %4285 = vmatpush2.bf16.msra.mxu0 0
    %4286 = vmatprep.subr.bf16.mxu0 0
    %4287 = vmatpush2.bf16.msra.mxu0 0
    %4288 = vmatprep.mubr.bf16.mxu0 0
    %4289 = vmatmul.mubr.bf16.gmra.mxu0 %v4251
    %v4290 = vpop.f32.mrf.mxu0
    %v4291 = vadd.f32 0.0, %v4290
    %v4292 = vpop.f32.mrf.mxu0
    %v4293 = vpop.f32.mrf.mxu0
    %v4294 = vadd.f32 0.0, %v4293
    %v4295 = vpop.f32.mrf.mxu0
    %4296 = vmatprep.mubr.bf16.mxu0 0
    %4297 = vmatmul.mubr.bf16.gmra.mxu0 %v4254
    %v4298 = vpop.f32.mrf.mxu0
    %v4299 = vadd.f32 0.0, %v4298
    %v4300 = vpop.f32.mrf.mxu0
    %v4301 = vpop.f32.mrf.mxu0
    %v4302 = vadd.f32 0.0, %v4301
    %v4303 = vpop.f32.mrf.mxu0
    %4304 = vdwg.mxu0
    %v4305 = vadd.f32 %v4048, %v4291
    %v4306 = vadd.f32 %v4049, %v4294
    %v4307 = vadd.f32 %v4050, %v4299
    %v4308 = vadd.f32 %v4051, %v4302
    %v4309 = vadd.f32 %v2843, %v4305
    %v4310 = vadd.f32 %v2844, %v4306
    %v4311 = vadd.f32 %v2845, %v4307
    %v4312 = vadd.f32 %v2846, %v4308
    %v4313 = vmul.f32 %v4309, %v4309
    %v4314 = vmul.f32 %v4310, %v4310
    %v4315 = vmul.f32 %v4311, %v4311
    %v4316 = vmul.f32 %v4312, %v4312
    %4317 = vadd.xlane.f32.xlu0 %v4313
    %v4318 = vpop.xlane.xlu0 %4317
    %4319 = vadd.xlane.f32.xlu0 %v4314
    %v4320 = vpop.xlane.xlu0 %4319
    %4321 = vadd.xlane.f32.xlu0 %v4315
    %v4322 = vpop.xlane.xlu0 %4321
    %4323 = vadd.xlane.f32.xlu0 %v4316
    %v4324 = vpop.xlane.xlu0 %4323
    %v4325 = vmul.f32 %v4318, %v217
    %v4326 = vmul.f32 %v4320, %v217
    %v4327 = vmul.f32 %v4322, %v217
    %v4328 = vmul.f32 %v4324, %v217
    %v4329 = vadd.f32 %v4325, 1e-06
    %v4330 = vadd.f32 %v4326, 1e-06
    %v4331 = vadd.f32 %v4327, 1e-06
    %v4332 = vadd.f32 %v4328, 1e-06
    %v4333 = vrsqrt.pop %v4329
    %v4334 = vrsqrt.pop %v4330
    %v4335 = vrsqrt.pop %v4331
    %v4336 = vrsqrt.pop %v4332
    %v4337 = vmul.f32 %v4309, %v4333
    %v4338 = vmul.f32 %v4310, %v4334
    %v4339 = vmul.f32 %v4311, %v4335
    %v4340 = vmul.f32 %v4312, %v4336
    %v4341 = vlaneseq
    %v4342 = vshrl.u32 %v4341, 7
    %v4343 = vsub.s32 3, %v4342
    %v4344 = vrot.slane %v188, %v4343
    %v4345 = vmul.f32 %v4337, %v4344
    %v4346 = vmul.f32 %v4338, %v4344
    %v4347 = vmul.f32 %v4339, %v4344
    %v4348 = vmul.f32 %v4340, %v4344
    %v4349 = vpack.c.bf16 %v4346, %v4345
    %v4350 = vpack.c.bf16 %v4348, %v4347
    %s4351 = scalar_lea.vmem [#allocation14], 512
    %v4352 = vld [vmem:[%s4351] sm:$0xff]
    %v4353 = vld [vmem:[%s4351 + $0x8] sm:$0xff]
    %v4354 = vld [vmem:[%s4351 + $0x10] sm:$0xff]
    %v4355 = vld [vmem:[%s4351 + $0x18] sm:$0xff]
    %v4356 = vld [vmem:[%s4351 + $0x20] sm:$0xff]
    %v4357 = vld [vmem:[%s4351 + $0x28] sm:$0xff]
    %v4358 = vld [vmem:[%s4351 + $0x30] sm:$0xff]
    %v4359 = vld [vmem:[%s4351 + $0x38] sm:$0xff]
    %v4360 = vld [vmem:[%s4351 + $0x40] sm:$0xff]
    %v4361 = vld [vmem:[%s4351 + $0x48] sm:$0xff]
    %v4362 = vld [vmem:[%s4351 + $0x50] sm:$0xff]
    %v4363 = vld [vmem:[%s4351 + $0x58] sm:$0xff]
    %v4364 = vld [vmem:[%s4351 + $0x60] sm:$0xff]
    %v4365 = vld [vmem:[%s4351 + $0x68] sm:$0xff]
    %v4366 = vld [vmem:[%s4351 + $0x70] sm:$0xff]
    %v4367 = vld [vmem:[%s4351 + $0x78] sm:$0xff]
    %v4368 = vld [vmem:[%s4351 + $0x80] sm:$0xff]
    %v4369 = vld [vmem:[%s4351 + $0x88] sm:$0xff]
    %v4370 = vld [vmem:[%s4351 + $0x90] sm:$0xff]
    %v4371 = vld [vmem:[%s4351 + $0x98] sm:$0xff]
    %v4372 = vld [vmem:[%s4351 + $0xa0] sm:$0xff]
    %v4373 = vld [vmem:[%s4351 + $0xa8] sm:$0xff]
    %v4374 = vld [vmem:[%s4351 + $0xb0] sm:$0xff]
    %v4375 = vld [vmem:[%s4351 + $0xb8] sm:$0xff]
    %v4376 = vld [vmem:[%s4351 + $0xc0] sm:$0xff]
    %v4377 = vld [vmem:[%s4351 + $0xc8] sm:$0xff]
    %v4378 = vld [vmem:[%s4351 + $0xd0] sm:$0xff]
    %v4379 = vld [vmem:[%s4351 + $0xd8] sm:$0xff]
    %v4380 = vld [vmem:[%s4351 + $0xe0] sm:$0xff]
    %v4381 = vld [vmem:[%s4351 + $0xe8] sm:$0xff]
    %v4382 = vld [vmem:[%s4351 + $0xf0] sm:$0xff]
    %v4383 = vld [vmem:[%s4351 + $0xf8] sm:$0xff]
    %v4384 = vld [vmem:[%s4351 + $0x100] sm:$0xff]
    %v4385 = vld [vmem:[%s4351 + $0x108] sm:$0xff]
    %v4386 = vld [vmem:[%s4351 + $0x110] sm:$0xff]
    %v4387 = vld [vmem:[%s4351 + $0x118] sm:$0xff]
    %v4388 = vld [vmem:[%s4351 + $0x120] sm:$0xff]
    %v4389 = vld [vmem:[%s4351 + $0x128] sm:$0xff]
    %v4390 = vld [vmem:[%s4351 + $0x130] sm:$0xff]
    %v4391 = vld [vmem:[%s4351 + $0x138] sm:$0xff]
    %v4392 = vld [vmem:[%s4351 + $0x140] sm:$0xff]
    %v4393 = vld [vmem:[%s4351 + $0x148] sm:$0xff]
    %v4394 = vld [vmem:[%s4351 + $0x150] sm:$0xff]
    %v4395 = vld [vmem:[%s4351 + $0x158] sm:$0xff]
    %v4396 = vld [vmem:[%s4351 + $0x160] sm:$0xff]
    %v4397 = vld [vmem:[%s4351 + $0x168] sm:$0xff]
    %v4398 = vld [vmem:[%s4351 + $0x170] sm:$0xff]
    %v4399 = vld [vmem:[%s4351 + $0x178] sm:$0xff]
    %v4400 = vld [vmem:[%s4351 + $0x180] sm:$0xff]
    %v4401 = vld [vmem:[%s4351 + $0x188] sm:$0xff]
    %v4402 = vld [vmem:[%s4351 + $0x190] sm:$0xff]
    %v4403 = vld [vmem:[%s4351 + $0x198] sm:$0xff]
    %v4404 = vld [vmem:[%s4351 + $0x1a0] sm:$0xff]
    %v4405 = vld [vmem:[%s4351 + $0x1a8] sm:$0xff]
    %v4406 = vld [vmem:[%s4351 + $0x1b0] sm:$0xff]
    %v4407 = vld [vmem:[%s4351 + $0x1b8] sm:$0xff]
    %v4408 = vld [vmem:[%s4351 + $0x1c0] sm:$0xff]
    %v4409 = vld [vmem:[%s4351 + $0x1c8] sm:$0xff]
    %v4410 = vld [vmem:[%s4351 + $0x1d0] sm:$0xff]
    %v4411 = vld [vmem:[%s4351 + $0x1d8] sm:$0xff]
    %v4412 = vld [vmem:[%s4351 + $0x1e0] sm:$0xff]
    %v4413 = vld [vmem:[%s4351 + $0x1e8] sm:$0xff]
    %v4414 = vld [vmem:[%s4351 + $0x1f0] sm:$0xff]
    %v4415 = vld [vmem:[%s4351 + $0x1f8] sm:$0xff]
    %v4480 = vunpack.c.l.b16 %v4352
    %v4481 = vunpack.c.h.b16 %v4352
    %v4482 = vunpack.c.l.b16 %v4353
    %v4483 = vunpack.c.h.b16 %v4353
    %v4484 = vunpack.c.l.b16 %v4354
    %v4485 = vunpack.c.h.b16 %v4354
    %v4486 = vunpack.c.l.b16 %v4355
    %v4487 = vunpack.c.h.b16 %v4355
    %v4488 = vunpack.c.l.b16 %v4356
    %v4489 = vunpack.c.h.b16 %v4356
    %v4490 = vunpack.c.l.b16 %v4357
    %v4491 = vunpack.c.h.b16 %v4357
    %v4492 = vunpack.c.l.b16 %v4358
    %v4493 = vunpack.c.h.b16 %v4358
    %v4494 = vunpack.c.l.b16 %v4359
    %v4495 = vunpack.c.h.b16 %v4359
    %v4496 = vunpack.c.l.b16 %v4360
    %v4497 = vunpack.c.h.b16 %v4360
    %v4498 = vunpack.c.l.b16 %v4361
    %v4499 = vunpack.c.h.b16 %v4361
    %v4500 = vunpack.c.l.b16 %v4362
    %v4501 = vunpack.c.h.b16 %v4362
    %v4502 = vunpack.c.l.b16 %v4363
    %v4503 = vunpack.c.h.b16 %v4363
    %v4504 = vunpack.c.l.b16 %v4364
    %v4505 = vunpack.c.h.b16 %v4364
    %v4506 = vunpack.c.l.b16 %v4365
    %v4507 = vunpack.c.h.b16 %v4365
    %v4508 = vunpack.c.l.b16 %v4366
    %v4509 = vunpack.c.h.b16 %v4366
    %v4510 = vunpack.c.l.b16 %v4367
    %v4511 = vunpack.c.h.b16 %v4367
    %v4512 = vunpack.c.l.b16 %v4368
    %v4513 = vunpack.c.h.b16 %v4368
    %v4514 = vunpack.c.l.b16 %v4369
    %v4515 = vunpack.c.h.b16 %v4369
    %v4516 = vunpack.c.l.b16 %v4370
    %v4517 = vunpack.c.h.b16 %v4370
    %v4518 = vunpack.c.l.b16 %v4371
    %v4519 = vunpack.c.h.b16 %v4371
    %v4520 = vunpack.c.l.b16 %v4372
    %v4521 = vunpack.c.h.b16 %v4372
    %v4522 = vunpack.c.l.b16 %v4373
    %v4523 = vunpack.c.h.b16 %v4373
    %v4524 = vunpack.c.l.b16 %v4374
    %v4525 = vunpack.c.h.b16 %v4374
    %v4526 = vunpack.c.l.b16 %v4375
    %v4527 = vunpack.c.h.b16 %v4375
    %v4528 = vunpack.c.l.b16 %v4376
    %v4529 = vunpack.c.h.b16 %v4376
    %v4530 = vunpack.c.l.b16 %v4377
    %v4531 = vunpack.c.h.b16 %v4377
    %v4532 = vunpack.c.l.b16 %v4378
    %v4533 = vunpack.c.h.b16 %v4378
    %v4534 = vunpack.c.l.b16 %v4379
    %v4535 = vunpack.c.h.b16 %v4379
    %v4536 = vunpack.c.l.b16 %v4380
    %v4537 = vunpack.c.h.b16 %v4380
    %v4538 = vunpack.c.l.b16 %v4381
    %v4539 = vunpack.c.h.b16 %v4381
    %v4540 = vunpack.c.l.b16 %v4382
    %v4541 = vunpack.c.h.b16 %v4382
    %v4542 = vunpack.c.l.b16 %v4383
    %v4543 = vunpack.c.h.b16 %v4383
    %v4544 = vunpack.c.l.b16 %v4384
    %v4545 = vunpack.c.h.b16 %v4384
    %v4546 = vunpack.c.l.b16 %v4385
    %v4547 = vunpack.c.h.b16 %v4385
    %v4548 = vunpack.c.l.b16 %v4386
    %v4549 = vunpack.c.h.b16 %v4386
    %v4550 = vunpack.c.l.b16 %v4387
    %v4551 = vunpack.c.h.b16 %v4387
    %v4552 = vunpack.c.l.b16 %v4388
    %v4553 = vunpack.c.h.b16 %v4388
    %v4554 = vunpack.c.l.b16 %v4389
    %v4555 = vunpack.c.h.b16 %v4389
    %v4556 = vunpack.c.l.b16 %v4390
    %v4557 = vunpack.c.h.b16 %v4390
    %v4558 = vunpack.c.l.b16 %v4391
    %v4559 = vunpack.c.h.b16 %v4391
    %v4560 = vunpack.c.l.b16 %v4392
    %v4561 = vunpack.c.h.b16 %v4392
    %v4562 = vunpack.c.l.b16 %v4393
    %v4563 = vunpack.c.h.b16 %v4393
    %v4564 = vunpack.c.l.b16 %v4394
    %v4565 = vunpack.c.h.b16 %v4394
    %v4566 = vunpack.c.l.b16 %v4395
    %v4567 = vunpack.c.h.b16 %v4395
    %v4568 = vunpack.c.l.b16 %v4396
    %v4569 = vunpack.c.h.b16 %v4396
    %v4570 = vunpack.c.l.b16 %v4397
    %v4571 = vunpack.c.h.b16 %v4397
    %v4572 = vunpack.c.l.b16 %v4398
    %v4573 = vunpack.c.h.b16 %v4398
    %v4574 = vunpack.c.l.b16 %v4399
    %v4575 = vunpack.c.h.b16 %v4399
    %v4576 = vunpack.c.l.b16 %v4400
    %v4577 = vunpack.c.h.b16 %v4400
    %v4578 = vunpack.c.l.b16 %v4401
    %v4579 = vunpack.c.h.b16 %v4401
    %v4580 = vunpack.c.l.b16 %v4402
    %v4581 = vunpack.c.h.b16 %v4402
    %v4582 = vunpack.c.l.b16 %v4403
    %v4583 = vunpack.c.h.b16 %v4403
    %v4584 = vunpack.c.l.b16 %v4404
    %v4585 = vunpack.c.h.b16 %v4404
    %v4586 = vunpack.c.l.b16 %v4405
    %v4587 = vunpack.c.h.b16 %v4405
    %v4588 = vunpack.c.l.b16 %v4406
    %v4589 = vunpack.c.h.b16 %v4406
    %v4590 = vunpack.c.l.b16 %v4407
    %v4591 = vunpack.c.h.b16 %v4407
    %v4592 = vunpack.c.l.b16 %v4408
    %v4593 = vunpack.c.h.b16 %v4408
    %v4594 = vunpack.c.l.b16 %v4409
    %v4595 = vunpack.c.h.b16 %v4409
    %v4596 = vunpack.c.l.b16 %v4410
    %v4597 = vunpack.c.h.b16 %v4410
    %v4598 = vunpack.c.l.b16 %v4411
    %v4599 = vunpack.c.h.b16 %v4411
    %v4600 = vunpack.c.l.b16 %v4412
    %v4601 = vunpack.c.h.b16 %v4412
    %v4602 = vunpack.c.l.b16 %v4413
    %v4603 = vunpack.c.h.b16 %v4413
    %v4604 = vunpack.c.l.b16 %v4414
    %v4605 = vunpack.c.h.b16 %v4414
    %v4606 = vunpack.c.l.b16 %v4415
    %v4607 = vunpack.c.h.b16 %v4415
    %v4608 = vpack.c.b16 %v4488, %v4480
    %v4609 = vpack.c.b16 %v4489, %v4481
    %v4610 = vpack.c.b16 %v4490, %v4482
    %v4611 = vpack.c.b16 %v4491, %v4483
    %v4612 = vpack.c.b16 %v4492, %v4484
    %v4613 = vpack.c.b16 %v4493, %v4485
    %v4614 = vpack.c.b16 %v4494, %v4486
    %v4615 = vpack.c.b16 %v4495, %v4487
    %v4616 = vpack.c.b16 %v4504, %v4496
    %v4617 = vpack.c.b16 %v4505, %v4497
    %v4618 = vpack.c.b16 %v4506, %v4498
    %v4619 = vpack.c.b16 %v4507, %v4499
    %v4620 = vpack.c.b16 %v4508, %v4500
    %v4621 = vpack.c.b16 %v4509, %v4501
    %v4622 = vpack.c.b16 %v4510, %v4502
    %v4623 = vpack.c.b16 %v4511, %v4503
    %v4624 = vpack.c.b16 %v4520, %v4512
    %v4625 = vpack.c.b16 %v4521, %v4513
    %v4626 = vpack.c.b16 %v4522, %v4514
    %v4627 = vpack.c.b16 %v4523, %v4515
    %v4628 = vpack.c.b16 %v4524, %v4516
    %v4629 = vpack.c.b16 %v4525, %v4517
    %v4630 = vpack.c.b16 %v4526, %v4518
    %v4631 = vpack.c.b16 %v4527, %v4519
    %v4632 = vpack.c.b16 %v4536, %v4528
    %v4633 = vpack.c.b16 %v4537, %v4529
    %v4634 = vpack.c.b16 %v4538, %v4530
    %v4635 = vpack.c.b16 %v4539, %v4531
    %v4636 = vpack.c.b16 %v4540, %v4532
    %v4637 = vpack.c.b16 %v4541, %v4533
    %v4638 = vpack.c.b16 %v4542, %v4534
    %v4639 = vpack.c.b16 %v4543, %v4535
    %v4640 = vpack.c.b16 %v4552, %v4544
    %v4641 = vpack.c.b16 %v4553, %v4545
    %v4642 = vpack.c.b16 %v4554, %v4546
    %v4643 = vpack.c.b16 %v4555, %v4547
    %v4644 = vpack.c.b16 %v4556, %v4548
    %v4645 = vpack.c.b16 %v4557, %v4549
    %v4646 = vpack.c.b16 %v4558, %v4550
    %v4647 = vpack.c.b16 %v4559, %v4551
    %v4648 = vpack.c.b16 %v4568, %v4560
    %v4649 = vpack.c.b16 %v4569, %v4561
    %v4650 = vpack.c.b16 %v4570, %v4562
    %v4651 = vpack.c.b16 %v4571, %v4563
    %v4652 = vpack.c.b16 %v4572, %v4564
    %v4653 = vpack.c.b16 %v4573, %v4565
    %v4654 = vpack.c.b16 %v4574, %v4566
    %v4655 = vpack.c.b16 %v4575, %v4567
    %v4656 = vpack.c.b16 %v4584, %v4576
    %v4657 = vpack.c.b16 %v4585, %v4577
    %v4658 = vpack.c.b16 %v4586, %v4578
    %v4659 = vpack.c.b16 %v4587, %v4579
    %v4660 = vpack.c.b16 %v4588, %v4580
    %v4661 = vpack.c.b16 %v4589, %v4581
    %v4662 = vpack.c.b16 %v4590, %v4582
    %v4663 = vpack.c.b16 %v4591, %v4583
    %v4664 = vpack.c.b16 %v4600, %v4592
    %v4665 = vpack.c.b16 %v4601, %v4593
    %v4666 = vpack.c.b16 %v4602, %v4594
    %v4667 = vpack.c.b16 %v4603, %v4595
    %v4668 = vpack.c.b16 %v4604, %v4596
    %v4669 = vpack.c.b16 %v4605, %v4597
    %v4670 = vpack.c.b16 %v4606, %v4598
    %v4671 = vpack.c.b16 %v4607, %v4599
    %4736 = vmatprep.subr.bf16.mxu0 %v4665
    %4737 = vmatpush1.bf16.msra.mxu0 %v4664
    %4738 = vmatprep.subr.bf16.mxu0 %v4657
    %4739 = vmatpush1.bf16.msra.mxu0 %v4656
    %4740 = vmatprep.subr.bf16.mxu0 %v4649
    %4741 = vmatpush1.bf16.msra.mxu0 %v4648
    %4742 = vmatprep.subr.bf16.mxu0 %v4641
    %4743 = vmatpush1.bf16.msra.mxu0 %v4640
    %4744 = vmatprep.subr.bf16.mxu0 %v4633
    %4745 = vmatpush1.bf16.msra.mxu0 %v4632
    %4746 = vmatprep.subr.bf16.mxu0 %v4625
    %4747 = vmatpush1.bf16.msra.mxu0 %v4624
    %4748 = vmatprep.subr.bf16.mxu0 %v4617
    %4749 = vmatpush1.bf16.msra.mxu0 %v4616
    %4750 = vmatprep.subr.bf16.mxu0 %v4609
    %4751 = vmatpush1.bf16.msra.mxu0 %v4608
    %4752 = vmatprep.subr.bf16.mxu0 0
    %4753 = vmatpush2.bf16.msra.mxu0 0
    %4754 = vmatprep.subr.bf16.mxu0 0
    %4755 = vmatpush2.bf16.msra.mxu0 0
    %4756 = vmatprep.subr.bf16.mxu0 0
    %4757 = vmatpush2.bf16.msra.mxu0 0
    %4758 = vmatprep.subr.bf16.mxu0 0
    %4759 = vmatpush2.bf16.msra.mxu0 0
    %4760 = vmatprep.subr.bf16.mxu0 0
    %4761 = vmatpush2.bf16.msra.mxu0 0
    %4762 = vmatprep.subr.bf16.mxu0 0
    %4763 = vmatpush2.bf16.msra.mxu0 0
    %4764 = vmatprep.subr.bf16.mxu0 0
    %4765 = vmatpush2.bf16.msra.mxu0 0
    %4766 = vmatprep.subr.bf16.mxu0 0
    %4767 = vmatpush2.bf16.msra.mxu0 0
    %4768 = vmatprep.mubr.bf16.mxu0 0
    %4769 = vmatmul.mubr.bf16.gmra.mxu0 %v4349
    %v4770 = vpop.f32.mrf.mxu0
    %v4771 = vadd.f32 0.0, %v4770
    %v4772 = vpop.f32.mrf.mxu0
    %v4773 = vadd.f32 0.0, %v4772
    %v4774 = vpop.f32.mrf.mxu0
    %v4775 = vadd.f32 0.0, %v4774
    %v4776 = vpop.f32.mrf.mxu0
    %v4777 = vadd.f32 0.0, %v4776
    %4778 = vmatprep.mubr.bf16.mxu0 0
    %4779 = vmatmul.mubr.bf16.gmra.mxu0 %v4350
    %v4780 = vpop.f32.mrf.mxu0
    %v4781 = vadd.f32 0.0, %v4780
    %v4782 = vpop.f32.mrf.mxu0
    %v4783 = vadd.f32 0.0, %v4782
    %v4784 = vpop.f32.mrf.mxu0
    %v4785 = vadd.f32 0.0, %v4784
    %v4786 = vpop.f32.mrf.mxu0
    %v4787 = vadd.f32 0.0, %v4786
    %4788 = vdwg.mxu0
    %4789 = vmatprep.subr.bf16.mxu0 %v4667
    %4790 = vmatpush1.bf16.msra.mxu0 %v4666
    %4791 = vmatprep.subr.bf16.mxu0 %v4659
    %4792 = vmatpush1.bf16.msra.mxu0 %v4658
    %4793 = vmatprep.subr.bf16.mxu0 %v4651
    %4794 = vmatpush1.bf16.msra.mxu0 %v4650
    %4795 = vmatprep.subr.bf16.mxu0 %v4643
    %4796 = vmatpush1.bf16.msra.mxu0 %v4642
    %4797 = vmatprep.subr.bf16.mxu0 %v4635
    %4798 = vmatpush1.bf16.msra.mxu0 %v4634
    %4799 = vmatprep.subr.bf16.mxu0 %v4627
    %4800 = vmatpush1.bf16.msra.mxu0 %v4626
    %4801 = vmatprep.subr.bf16.mxu0 %v4619
    %4802 = vmatpush1.bf16.msra.mxu0 %v4618
    %4803 = vmatprep.subr.bf16.mxu0 %v4611
    %4804 = vmatpush1.bf16.msra.mxu0 %v4610
    %4805 = vmatprep.subr.bf16.mxu0 0
    %4806 = vmatpush2.bf16.msra.mxu0 0
    %4807 = vmatprep.subr.bf16.mxu0 0
    %4808 = vmatpush2.bf16.msra.mxu0 0
    %4809 = vmatprep.subr.bf16.mxu0 0
    %4810 = vmatpush2.bf16.msra.mxu0 0
    %4811 = vmatprep.subr.bf16.mxu0 0
    %4812 = vmatpush2.bf16.msra.mxu0 0
    %4813 = vmatprep.subr.bf16.mxu0 0
    %4814 = vmatpush2.bf16.msra.mxu0 0
    %4815 = vmatprep.subr.bf16.mxu0 0
    %4816 = vmatpush2.bf16.msra.mxu0 0
    %4817 = vmatprep.subr.bf16.mxu0 0
    %4818 = vmatpush2.bf16.msra.mxu0 0
    %4819 = vmatprep.subr.bf16.mxu0 0
    %4820 = vmatpush2.bf16.msra.mxu0 0
    %4821 = vmatprep.mubr.bf16.mxu0 0
    %4822 = vmatmul.mubr.bf16.gmra.mxu0 %v4349
    %v4823 = vpop.f32.mrf.mxu0
    %v4824 = vadd.f32 0.0, %v4823
    %v4825 = vpop.f32.mrf.mxu0
    %v4826 = vadd.f32 0.0, %v4825
    %v4827 = vpop.f32.mrf.mxu0
    %v4828 = vadd.f32 0.0, %v4827
    %v4829 = vpop.f32.mrf.mxu0
    %v4830 = vadd.f32 0.0, %v4829
    %4831 = vmatprep.mubr.bf16.mxu0 0
    %4832 = vmatmul.mubr.bf16.gmra.mxu0 %v4350
    %v4833 = vpop.f32.mrf.mxu0
    %v4834 = vadd.f32 0.0, %v4833
    %v4835 = vpop.f32.mrf.mxu0
    %v4836 = vadd.f32 0.0, %v4835
    %v4837 = vpop.f32.mrf.mxu0
    %v4838 = vadd.f32 0.0, %v4837
    %v4839 = vpop.f32.mrf.mxu0
    %v4840 = vadd.f32 0.0, %v4839
    %4841 = vdwg.mxu0
    %4842 = vmatprep.subr.bf16.mxu0 %v4669
    %4843 = vmatpush1.bf16.msra.mxu0 %v4668
    %4844 = vmatprep.subr.bf16.mxu0 %v4661
    %4845 = vmatpush1.bf16.msra.mxu0 %v4660
    %4846 = vmatprep.subr.bf16.mxu0 %v4653
    %4847 = vmatpush1.bf16.msra.mxu0 %v4652
    %4848 = vmatprep.subr.bf16.mxu0 %v4645
    %4849 = vmatpush1.bf16.msra.mxu0 %v4644
    %4850 = vmatprep.subr.bf16.mxu0 %v4637
    %4851 = vmatpush1.bf16.msra.mxu0 %v4636
    %4852 = vmatprep.subr.bf16.mxu0 %v4629
    %4853 = vmatpush1.bf16.msra.mxu0 %v4628
    %4854 = vmatprep.subr.bf16.mxu0 %v4621
    %4855 = vmatpush1.bf16.msra.mxu0 %v4620
    %4856 = vmatprep.subr.bf16.mxu0 %v4613
    %4857 = vmatpush1.bf16.msra.mxu0 %v4612
    %4858 = vmatprep.subr.bf16.mxu0 0
    %4859 = vmatpush2.bf16.msra.mxu0 0
    %4860 = vmatprep.subr.bf16.mxu0 0
    %4861 = vmatpush2.bf16.msra.mxu0 0
    %4862 = vmatprep.subr.bf16.mxu0 0
    %4863 = vmatpush2.bf16.msra.mxu0 0
    %4864 = vmatprep.subr.bf16.mxu0 0
    %4865 = vmatpush2.bf16.msra.mxu0 0
    %4866 = vmatprep.subr.bf16.mxu0 0
    %4867 = vmatpush2.bf16.msra.mxu0 0
    %4868 = vmatprep.subr.bf16.mxu0 0
    %4869 = vmatpush2.bf16.msra.mxu0 0
    %4870 = vmatprep.subr.bf16.mxu0 0
    %4871 = vmatpush2.bf16.msra.mxu0 0
    %4872 = vmatprep.subr.bf16.mxu0 0
    %4873 = vmatpush2.bf16.msra.mxu0 0
    %4874 = vmatprep.mubr.bf16.mxu0 0
    %4875 = vmatmul.mubr.bf16.gmra.mxu0 %v4349
    %v4876 = vpop.f32.mrf.mxu0
    %v4877 = vadd.f32 0.0, %v4876
    %v4878 = vpop.f32.mrf.mxu0
    %v4879 = vadd.f32 0.0, %v4878
    %v4880 = vpop.f32.mrf.mxu0
    %v4881 = vadd.f32 0.0, %v4880
    %v4882 = vpop.f32.mrf.mxu0
    %v4883 = vadd.f32 0.0, %v4882
    %4884 = vmatprep.mubr.bf16.mxu0 0
    %4885 = vmatmul.mubr.bf16.gmra.mxu0 %v4350
    %v4886 = vpop.f32.mrf.mxu0
    %v4887 = vadd.f32 0.0, %v4886
    %v4888 = vpop.f32.mrf.mxu0
    %v4889 = vadd.f32 0.0, %v4888
    %v4890 = vpop.f32.mrf.mxu0
    %v4891 = vadd.f32 0.0, %v4890
    %v4892 = vpop.f32.mrf.mxu0
    %v4893 = vadd.f32 0.0, %v4892
    %4894 = vdwg.mxu0
    %4895 = vmatprep.subr.bf16.mxu0 %v4671
    %4896 = vmatpush1.bf16.msra.mxu0 %v4670
    %4897 = vmatprep.subr.bf16.mxu0 %v4663
    %4898 = vmatpush1.bf16.msra.mxu0 %v4662
    %4899 = vmatprep.subr.bf16.mxu0 %v4655
    %4900 = vmatpush1.bf16.msra.mxu0 %v4654
    %4901 = vmatprep.subr.bf16.mxu0 %v4647
    %4902 = vmatpush1.bf16.msra.mxu0 %v4646
    %4903 = vmatprep.subr.bf16.mxu0 %v4639
    %4904 = vmatpush1.bf16.msra.mxu0 %v4638
    %4905 = vmatprep.subr.bf16.mxu0 %v4631
    %4906 = vmatpush1.bf16.msra.mxu0 %v4630
    %4907 = vmatprep.subr.bf16.mxu0 %v4623
    %4908 = vmatpush1.bf16.msra.mxu0 %v4622
    %4909 = vmatprep.subr.bf16.mxu0 %v4615
    %4910 = vmatpush1.bf16.msra.mxu0 %v4614
    %4911 = vmatprep.subr.bf16.mxu0 0
    %4912 = vmatpush2.bf16.msra.mxu0 0
    %4913 = vmatprep.subr.bf16.mxu0 0
    %4914 = vmatpush2.bf16.msra.mxu0 0
    %4915 = vmatprep.subr.bf16.mxu0 0
    %4916 = vmatpush2.bf16.msra.mxu0 0
    %4917 = vmatprep.subr.bf16.mxu0 0
    %4918 = vmatpush2.bf16.msra.mxu0 0
    %4919 = vmatprep.subr.bf16.mxu0 0
    %4920 = vmatpush2.bf16.msra.mxu0 0
    %4921 = vmatprep.subr.bf16.mxu0 0
    %4922 = vmatpush2.bf16.msra.mxu0 0
    %4923 = vmatprep.subr.bf16.mxu0 0
    %4924 = vmatpush2.bf16.msra.mxu0 0
    %4925 = vmatprep.subr.bf16.mxu0 0
    %4926 = vmatpush2.bf16.msra.mxu0 0
    %4927 = vmatprep.mubr.bf16.mxu0 0
    %4928 = vmatmul.mubr.bf16.gmra.mxu0 %v4349
    %v4929 = vpop.f32.mrf.mxu0
    %v4930 = vadd.f32 0.0, %v4929
    %v4931 = vpop.f32.mrf.mxu0
    %v4932 = vadd.f32 0.0, %v4931
    %v4933 = vpop.f32.mrf.mxu0
    %v4934 = vadd.f32 0.0, %v4933
    %v4935 = vpop.f32.mrf.mxu0
    %v4936 = vadd.f32 0.0, %v4935
    %4937 = vmatprep.mubr.bf16.mxu0 0
    %4938 = vmatmul.mubr.bf16.gmra.mxu0 %v4350
    %v4939 = vpop.f32.mrf.mxu0
    %v4940 = vadd.f32 0.0, %v4939
    %v4941 = vpop.f32.mrf.mxu0
    %v4942 = vadd.f32 0.0, %v4941
    %v4943 = vpop.f32.mrf.mxu0
    %v4944 = vadd.f32 0.0, %v4943
    %v4945 = vpop.f32.mrf.mxu0
    %v4946 = vadd.f32 0.0, %v4945
    %4947 = vdwg.mxu0
    %v4948 = vxor.u32 %v4771, 2147483648
    %v4949 = vxor.u32 %v4773, 2147483648
    %v4950 = vxor.u32 %v4824, 2147483648
    %v4951 = vxor.u32 %v4826, 2147483648
    %v4952 = vxor.u32 %v4775, 2147483648
    %v4953 = vxor.u32 %v4777, 2147483648
    %v4954 = vxor.u32 %v4828, 2147483648
    %v4955 = vxor.u32 %v4830, 2147483648
    %v4956 = vxor.u32 %v4781, 2147483648
    %v4957 = vxor.u32 %v4783, 2147483648
    %v4958 = vxor.u32 %v4834, 2147483648
    %v4959 = vxor.u32 %v4836, 2147483648
    %v4960 = vxor.u32 %v4785, 2147483648
    %v4961 = vxor.u32 %v4787, 2147483648
    %v4962 = vxor.u32 %v4838, 2147483648
    %v4963 = vxor.u32 %v4840, 2147483648
    %v4964 = vmul.f32 %v4948, 1.442695
    %v4965 = vpow.pop %v4964
    %v4966 = vmul.f32 %v4949, 1.442695
    %v4967 = vpow.pop %v4966
    %v4968 = vmul.f32 %v4950, 1.442695
    %v4969 = vpow.pop %v4968
    %v4970 = vmul.f32 %v4951, 1.442695
    %v4971 = vpow.pop %v4970
    %v4972 = vmul.f32 %v4952, 1.442695
    %v4973 = vpow.pop %v4972
    %v4974 = vmul.f32 %v4953, 1.442695
    %v4975 = vpow.pop %v4974
    %v4976 = vmul.f32 %v4954, 1.442695
    %v4977 = vpow.pop %v4976
    %v4978 = vmul.f32 %v4955, 1.442695
    %v4979 = vpow.pop %v4978
    %v4980 = vmul.f32 %v4956, 1.442695
    %v4981 = vpow.pop %v4980
    %v4982 = vmul.f32 %v4957, 1.442695
    %v4983 = vpow.pop %v4982
    %v4984 = vmul.f32 %v4958, 1.442695
    %v4985 = vpow.pop %v4984
    %v4986 = vmul.f32 %v4959, 1.442695
    %v4987 = vpow.pop %v4986
    %v4988 = vmul.f32 %v4960, 1.442695
    %v4989 = vpow.pop %v4988
    %v4990 = vmul.f32 %v4961, 1.442695
    %v4991 = vpow.pop %v4990
    %v4992 = vmul.f32 %v4962, 1.442695
    %v4993 = vpow.pop %v4992
    %v4994 = vmul.f32 %v4963, 1.442695
    %v4995 = vpow.pop %v4994
    %v4996 = vadd.f32 %v4965, 1.0
    %v4997 = vadd.f32 %v4967, 1.0
    %v4998 = vadd.f32 %v4969, 1.0
    %v4999 = vadd.f32 %v4971, 1.0
    %v5000 = vadd.f32 %v4973, 1.0
    %v5001 = vadd.f32 %v4975, 1.0
    %v5002 = vadd.f32 %v4977, 1.0
    %v5003 = vadd.f32 %v4979, 1.0
    %v5004 = vadd.f32 %v4981, 1.0
    %v5005 = vadd.f32 %v4983, 1.0
    %v5006 = vadd.f32 %v4985, 1.0
    %v5007 = vadd.f32 %v4987, 1.0
    %v5008 = vadd.f32 %v4989, 1.0
    %v5009 = vadd.f32 %v4991, 1.0
    %v5010 = vadd.f32 %v4993, 1.0
    %v5011 = vadd.f32 %v4995, 1.0
    %v5012 = vrcp.pop %v4996
    %v5013 = vmul.f32 1.0, %v5012
    %v5014 = vrcp.pop %v4997
    %v5015 = vmul.f32 1.0, %v5014
    %v5016 = vrcp.pop %v4998
    %v5017 = vmul.f32 1.0, %v5016
    %v5018 = vrcp.pop %v4999
    %v5019 = vmul.f32 1.0, %v5018
    %v5020 = vrcp.pop %v5000
    %v5021 = vmul.f32 1.0, %v5020
    %v5022 = vrcp.pop %v5001
    %v5023 = vmul.f32 1.0, %v5022
    %v5024 = vrcp.pop %v5002
    %v5025 = vmul.f32 1.0, %v5024
    %v5026 = vrcp.pop %v5003
    %v5027 = vmul.f32 1.0, %v5026
    %v5028 = vrcp.pop %v5004
    %v5029 = vmul.f32 1.0, %v5028
    %v5030 = vrcp.pop %v5005
    %v5031 = vmul.f32 1.0, %v5030
    %v5032 = vrcp.pop %v5006
    %v5033 = vmul.f32 1.0, %v5032
    %v5034 = vrcp.pop %v5007
    %v5035 = vmul.f32 1.0, %v5034
    %v5036 = vrcp.pop %v5008
    %v5037 = vmul.f32 1.0, %v5036
    %v5038 = vrcp.pop %v5009
    %v5039 = vmul.f32 1.0, %v5038
    %v5040 = vrcp.pop %v5010
    %v5041 = vmul.f32 1.0, %v5040
    %v5042 = vrcp.pop %v5011
    %v5043 = vmul.f32 1.0, %v5042
    %v5044 = vmul.f32 %v4771, %v5013
    %v5045 = vmul.f32 %v4773, %v5015
    %v5046 = vmul.f32 %v4824, %v5017
    %v5047 = vmul.f32 %v4826, %v5019
    %v5048 = vmul.f32 %v4775, %v5021
    %v5049 = vmul.f32 %v4777, %v5023
    %v5050 = vmul.f32 %v4828, %v5025
    %v5051 = vmul.f32 %v4830, %v5027
    %v5052 = vmul.f32 %v4781, %v5029
    %v5053 = vmul.f32 %v4783, %v5031
    %v5054 = vmul.f32 %v4834, %v5033
    %v5055 = vmul.f32 %v4836, %v5035
    %v5056 = vmul.f32 %v4785, %v5037
    %v5057 = vmul.f32 %v4787, %v5039
    %v5058 = vmul.f32 %v4838, %v5041
    %v5059 = vmul.f32 %v4840, %v5043
    %v5060 = vmul.f32 %v5044, %v4877
    %v5061 = vmul.f32 %v5045, %v4879
    %v5062 = vmul.f32 %v5046, %v4930
    %v5063 = vmul.f32 %v5047, %v4932
    %v5064 = vmul.f32 %v5048, %v4881
    %v5065 = vmul.f32 %v5049, %v4883
    %v5066 = vmul.f32 %v5050, %v4934
    %v5067 = vmul.f32 %v5051, %v4936
    %v5068 = vmul.f32 %v5052, %v4887
    %v5069 = vmul.f32 %v5053, %v4889
    %v5070 = vmul.f32 %v5054, %v4940
    %v5071 = vmul.f32 %v5055, %v4942
    %v5072 = vmul.f32 %v5056, %v4891
    %v5073 = vmul.f32 %v5057, %v4893
    %v5074 = vmul.f32 %v5058, %v4944
    %v5075 = vmul.f32 %v5059, %v4946
    %v5076 = vpack.c.bf16 %v5064, %v5060
    %v5077 = vpack.c.bf16 %v5065, %v5061
    %v5078 = vpack.c.bf16 %v5066, %v5062
    %v5079 = vpack.c.bf16 %v5067, %v5063
    %v5080 = vpack.c.bf16 %v5072, %v5068
    %v5081 = vpack.c.bf16 %v5073, %v5069
    %v5082 = vpack.c.bf16 %v5074, %v5070
    %v5083 = vpack.c.bf16 %v5075, %v5071
    %s5084 = scalar_lea.vmem [#allocation16], 256
    %v5085 = vld [vmem:[%s5084] sm:$0xf]
    %v5086 = vld [vmem:[%s5084 + $0x4] sm:$0xf]
    %v5087 = vld [vmem:[%s5084 + $0x8] sm:$0xf]
    %v5088 = vld [vmem:[%s5084 + $0xc] sm:$0xf]
    %v5089 = vld [vmem:[%s5084 + $0x10] sm:$0xf]
    %v5090 = vld [vmem:[%s5084 + $0x14] sm:$0xf]
    %v5091 = vld [vmem:[%s5084 + $0x18] sm:$0xf]
    %v5092 = vld [vmem:[%s5084 + $0x1c] sm:$0xf]
    %v5093 = vld [vmem:[%s5084 + $0x20] sm:$0xf]
    %v5094 = vld [vmem:[%s5084 + $0x24] sm:$0xf]
    %v5095 = vld [vmem:[%s5084 + $0x28] sm:$0xf]
    %v5096 = vld [vmem:[%s5084 + $0x2c] sm:$0xf]
    %v5097 = vld [vmem:[%s5084 + $0x30] sm:$0xf]
    %v5098 = vld [vmem:[%s5084 + $0x34] sm:$0xf]
    %v5099 = vld [vmem:[%s5084 + $0x38] sm:$0xf]
    %v5100 = vld [vmem:[%s5084 + $0x3c] sm:$0xf]
    %v5101 = vld [vmem:[%s5084 + $0x40] sm:$0xf]
    %v5102 = vld [vmem:[%s5084 + $0x44] sm:$0xf]
    %v5103 = vld [vmem:[%s5084 + $0x48] sm:$0xf]
    %v5104 = vld [vmem:[%s5084 + $0x4c] sm:$0xf]
    %v5105 = vld [vmem:[%s5084 + $0x50] sm:$0xf]
    %v5106 = vld [vmem:[%s5084 + $0x54] sm:$0xf]
    %v5107 = vld [vmem:[%s5084 + $0x58] sm:$0xf]
    %v5108 = vld [vmem:[%s5084 + $0x5c] sm:$0xf]
    %v5109 = vld [vmem:[%s5084 + $0x60] sm:$0xf]
    %v5110 = vld [vmem:[%s5084 + $0x64] sm:$0xf]
    %v5111 = vld [vmem:[%s5084 + $0x68] sm:$0xf]
    %v5112 = vld [vmem:[%s5084 + $0x6c] sm:$0xf]
    %v5113 = vld [vmem:[%s5084 + $0x70] sm:$0xf]
    %v5114 = vld [vmem:[%s5084 + $0x74] sm:$0xf]
    %v5115 = vld [vmem:[%s5084 + $0x78] sm:$0xf]
    %v5116 = vld [vmem:[%s5084 + $0x7c] sm:$0xf]
    %v5117 = vld [vmem:[%s5084 + $0x80] sm:$0xf]
    %v5118 = vld [vmem:[%s5084 + $0x84] sm:$0xf]
    %v5119 = vld [vmem:[%s5084 + $0x88] sm:$0xf]
    %v5120 = vld [vmem:[%s5084 + $0x8c] sm:$0xf]
    %v5121 = vld [vmem:[%s5084 + $0x90] sm:$0xf]
    %v5122 = vld [vmem:[%s5084 + $0x94] sm:$0xf]
    %v5123 = vld [vmem:[%s5084 + $0x98] sm:$0xf]
    %v5124 = vld [vmem:[%s5084 + $0x9c] sm:$0xf]
    %v5125 = vld [vmem:[%s5084 + $0xa0] sm:$0xf]
    %v5126 = vld [vmem:[%s5084 + $0xa4] sm:$0xf]
    %v5127 = vld [vmem:[%s5084 + $0xa8] sm:$0xf]
    %v5128 = vld [vmem:[%s5084 + $0xac] sm:$0xf]
    %v5129 = vld [vmem:[%s5084 + $0xb0] sm:$0xf]
    %v5130 = vld [vmem:[%s5084 + $0xb4] sm:$0xf]
    %v5131 = vld [vmem:[%s5084 + $0xb8] sm:$0xf]
    %v5132 = vld [vmem:[%s5084 + $0xbc] sm:$0xf]
    %v5133 = vld [vmem:[%s5084 + $0xc0] sm:$0xf]
    %v5134 = vld [vmem:[%s5084 + $0xc4] sm:$0xf]
    %v5135 = vld [vmem:[%s5084 + $0xc8] sm:$0xf]
    %v5136 = vld [vmem:[%s5084 + $0xcc] sm:$0xf]
    %v5137 = vld [vmem:[%s5084 + $0xd0] sm:$0xf]
    %v5138 = vld [vmem:[%s5084 + $0xd4] sm:$0xf]
    %v5139 = vld [vmem:[%s5084 + $0xd8] sm:$0xf]
    %v5140 = vld [vmem:[%s5084 + $0xdc] sm:$0xf]
    %v5141 = vld [vmem:[%s5084 + $0xe0] sm:$0xf]
    %v5142 = vld [vmem:[%s5084 + $0xe4] sm:$0xf]
    %v5143 = vld [vmem:[%s5084 + $0xe8] sm:$0xf]
    %v5144 = vld [vmem:[%s5084 + $0xec] sm:$0xf]
    %v5145 = vld [vmem:[%s5084 + $0xf0] sm:$0xf]
    %v5146 = vld [vmem:[%s5084 + $0xf4] sm:$0xf]
    %v5147 = vld [vmem:[%s5084 + $0xf8] sm:$0xf]
    %v5148 = vld [vmem:[%s5084 + $0xfc] sm:$0xf]
    %v5213 = vunpack.c.l.b16 %v5085
    %v5214 = vunpack.c.l.b16 %v5086
    %v5215 = vunpack.c.l.b16 %v5087
    %v5216 = vunpack.c.l.b16 %v5088
    %v5217 = vunpack.c.l.b16 %v5089
    %v5218 = vunpack.c.l.b16 %v5090
    %v5219 = vunpack.c.l.b16 %v5091
    %v5220 = vunpack.c.l.b16 %v5092
    %v5221 = vunpack.c.l.b16 %v5093
    %v5222 = vunpack.c.l.b16 %v5094
    %v5223 = vunpack.c.l.b16 %v5095
    %v5224 = vunpack.c.l.b16 %v5096
    %v5225 = vunpack.c.l.b16 %v5097
    %v5226 = vunpack.c.l.b16 %v5098
    %v5227 = vunpack.c.l.b16 %v5099
    %v5228 = vunpack.c.l.b16 %v5100
    %v5229 = vunpack.c.l.b16 %v5101
    %v5230 = vunpack.c.l.b16 %v5102
    %v5231 = vunpack.c.l.b16 %v5103
    %v5232 = vunpack.c.l.b16 %v5104
    %v5233 = vunpack.c.l.b16 %v5105
    %v5234 = vunpack.c.l.b16 %v5106
    %v5235 = vunpack.c.l.b16 %v5107
    %v5236 = vunpack.c.l.b16 %v5108
    %v5237 = vunpack.c.l.b16 %v5109
    %v5238 = vunpack.c.l.b16 %v5110
    %v5239 = vunpack.c.l.b16 %v5111
    %v5240 = vunpack.c.l.b16 %v5112
    %v5241 = vunpack.c.l.b16 %v5113
    %v5242 = vunpack.c.l.b16 %v5114
    %v5243 = vunpack.c.l.b16 %v5115
    %v5244 = vunpack.c.l.b16 %v5116
    %v5245 = vunpack.c.l.b16 %v5117
    %v5246 = vunpack.c.l.b16 %v5118
    %v5247 = vunpack.c.l.b16 %v5119
    %v5248 = vunpack.c.l.b16 %v5120
    %v5249 = vunpack.c.l.b16 %v5121
    %v5250 = vunpack.c.l.b16 %v5122
    %v5251 = vunpack.c.l.b16 %v5123
    %v5252 = vunpack.c.l.b16 %v5124
    %v5253 = vunpack.c.l.b16 %v5125
    %v5254 = vunpack.c.l.b16 %v5126
    %v5255 = vunpack.c.l.b16 %v5127
    %v5256 = vunpack.c.l.b16 %v5128
    %v5257 = vunpack.c.l.b16 %v5129
    %v5258 = vunpack.c.l.b16 %v5130
    %v5259 = vunpack.c.l.b16 %v5131
    %v5260 = vunpack.c.l.b16 %v5132
    %v5261 = vunpack.c.l.b16 %v5133
    %v5262 = vunpack.c.l.b16 %v5134
    %v5263 = vunpack.c.l.b16 %v5135
    %v5264 = vunpack.c.l.b16 %v5136
    %v5265 = vunpack.c.l.b16 %v5137
    %v5266 = vunpack.c.l.b16 %v5138
    %v5267 = vunpack.c.l.b16 %v5139
    %v5268 = vunpack.c.l.b16 %v5140
    %v5269 = vunpack.c.l.b16 %v5141
    %v5270 = vunpack.c.l.b16 %v5142
    %v5271 = vunpack.c.l.b16 %v5143
    %v5272 = vunpack.c.l.b16 %v5144
    %v5273 = vunpack.c.l.b16 %v5145
    %v5274 = vunpack.c.l.b16 %v5146
    %v5275 = vunpack.c.l.b16 %v5147
    %v5276 = vunpack.c.l.b16 %v5148
    %v5277 = vpack.c.b16 %v5214, %v5213
    %v5278 = vpack.c.b16 %v5216, %v5215
    %v5279 = vpack.c.b16 %v5218, %v5217
    %v5280 = vpack.c.b16 %v5220, %v5219
    %v5281 = vpack.c.b16 %v5222, %v5221
    %v5282 = vpack.c.b16 %v5224, %v5223
    %v5283 = vpack.c.b16 %v5226, %v5225
    %v5284 = vpack.c.b16 %v5228, %v5227
    %v5285 = vpack.c.b16 %v5230, %v5229
    %v5286 = vpack.c.b16 %v5232, %v5231
    %v5287 = vpack.c.b16 %v5234, %v5233
    %v5288 = vpack.c.b16 %v5236, %v5235
    %v5289 = vpack.c.b16 %v5238, %v5237
    %v5290 = vpack.c.b16 %v5240, %v5239
    %v5291 = vpack.c.b16 %v5242, %v5241
    %v5292 = vpack.c.b16 %v5244, %v5243
    %v5293 = vpack.c.b16 %v5246, %v5245
    %v5294 = vpack.c.b16 %v5248, %v5247
    %v5295 = vpack.c.b16 %v5250, %v5249
    %v5296 = vpack.c.b16 %v5252, %v5251
    %v5297 = vpack.c.b16 %v5254, %v5253
    %v5298 = vpack.c.b16 %v5256, %v5255
    %v5299 = vpack.c.b16 %v5258, %v5257
    %v5300 = vpack.c.b16 %v5260, %v5259
    %v5301 = vpack.c.b16 %v5262, %v5261
    %v5302 = vpack.c.b16 %v5264, %v5263
    %v5303 = vpack.c.b16 %v5266, %v5265
    %v5304 = vpack.c.b16 %v5268, %v5267
    %v5305 = vpack.c.b16 %v5270, %v5269
    %v5306 = vpack.c.b16 %v5272, %v5271
    %v5307 = vpack.c.b16 %v5274, %v5273
    %v5308 = vpack.c.b16 %v5276, %v5275
    %5341 = vmatprep.subr.bf16.mxu0 0
    %5342 = vmatpush1.bf16.msra.mxu0 %v5284
    %5343 = vmatprep.subr.bf16.mxu0 0
    %5344 = vmatpush1.bf16.msra.mxu0 %v5283
    %5345 = vmatprep.subr.bf16.mxu0 0
    %5346 = vmatpush1.bf16.msra.mxu0 %v5282
    %5347 = vmatprep.subr.bf16.mxu0 0
    %5348 = vmatpush1.bf16.msra.mxu0 %v5281
    %5349 = vmatprep.subr.bf16.mxu0 0
    %5350 = vmatpush1.bf16.msra.mxu0 %v5280
    %5351 = vmatprep.subr.bf16.mxu0 0
    %5352 = vmatpush1.bf16.msra.mxu0 %v5279
    %5353 = vmatprep.subr.bf16.mxu0 0
    %5354 = vmatpush1.bf16.msra.mxu0 %v5278
    %5355 = vmatprep.subr.bf16.mxu0 0
    %5356 = vmatpush1.bf16.msra.mxu0 %v5277
    %5357 = vmatprep.subr.bf16.mxu0 0
    %5358 = vmatpush2.bf16.msra.mxu0 %v5292
    %5359 = vmatprep.subr.bf16.mxu0 0
    %5360 = vmatpush2.bf16.msra.mxu0 %v5291
    %5361 = vmatprep.subr.bf16.mxu0 0
    %5362 = vmatpush2.bf16.msra.mxu0 %v5290
    %5363 = vmatprep.subr.bf16.mxu0 0
    %5364 = vmatpush2.bf16.msra.mxu0 %v5289
    %5365 = vmatprep.subr.bf16.mxu0 0
    %5366 = vmatpush2.bf16.msra.mxu0 %v5288
    %5367 = vmatprep.subr.bf16.mxu0 0
    %5368 = vmatpush2.bf16.msra.mxu0 %v5287
    %5369 = vmatprep.subr.bf16.mxu0 0
    %5370 = vmatpush2.bf16.msra.mxu0 %v5286
    %5371 = vmatprep.subr.bf16.mxu0 0
    %5372 = vmatpush2.bf16.msra.mxu0 %v5285
    %5373 = vmatprep.mubr.bf16.mxu0 %v5077
    %5374 = vmatmul.mubr.bf16.gmra.mxu0 %v5076
    %v5375 = vpop.f32.mrf.mxu0
    %v5376 = vadd.f32 0.0, %v5375
    %v5377 = vpop.f32.mrf.mxu0
    %v5378 = vpop.f32.mrf.mxu0
    %v5379 = vadd.f32 0.0, %v5378
    %v5380 = vpop.f32.mrf.mxu0
    %5381 = vmatprep.mubr.bf16.mxu0 %v5081
    %5382 = vmatmul.mubr.bf16.gmra.mxu0 %v5080
    %v5383 = vpop.f32.mrf.mxu0
    %v5384 = vadd.f32 0.0, %v5383
    %v5385 = vpop.f32.mrf.mxu0
    %v5386 = vpop.f32.mrf.mxu0
    %v5387 = vadd.f32 0.0, %v5386
    %v5388 = vpop.f32.mrf.mxu0
    %5389 = vdwg.mxu0
    %5390 = vmatprep.subr.bf16.mxu0 0
    %5391 = vmatpush1.bf16.msra.mxu0 %v5300
    %5392 = vmatprep.subr.bf16.mxu0 0
    %5393 = vmatpush1.bf16.msra.mxu0 %v5299
    %5394 = vmatprep.subr.bf16.mxu0 0
    %5395 = vmatpush1.bf16.msra.mxu0 %v5298
    %5396 = vmatprep.subr.bf16.mxu0 0
    %5397 = vmatpush1.bf16.msra.mxu0 %v5297
    %5398 = vmatprep.subr.bf16.mxu0 0
    %5399 = vmatpush1.bf16.msra.mxu0 %v5296
    %5400 = vmatprep.subr.bf16.mxu0 0
    %5401 = vmatpush1.bf16.msra.mxu0 %v5295
    %5402 = vmatprep.subr.bf16.mxu0 0
    %5403 = vmatpush1.bf16.msra.mxu0 %v5294
    %5404 = vmatprep.subr.bf16.mxu0 0
    %5405 = vmatpush1.bf16.msra.mxu0 %v5293
    %5406 = vmatprep.subr.bf16.mxu0 0
    %5407 = vmatpush2.bf16.msra.mxu0 %v5308
    %5408 = vmatprep.subr.bf16.mxu0 0
    %5409 = vmatpush2.bf16.msra.mxu0 %v5307
    %5410 = vmatprep.subr.bf16.mxu0 0
    %5411 = vmatpush2.bf16.msra.mxu0 %v5306
    %5412 = vmatprep.subr.bf16.mxu0 0
    %5413 = vmatpush2.bf16.msra.mxu0 %v5305
    %5414 = vmatprep.subr.bf16.mxu0 0
    %5415 = vmatpush2.bf16.msra.mxu0 %v5304
    %5416 = vmatprep.subr.bf16.mxu0 0
    %5417 = vmatpush2.bf16.msra.mxu0 %v5303
    %5418 = vmatprep.subr.bf16.mxu0 0
    %5419 = vmatpush2.bf16.msra.mxu0 %v5302
    %5420 = vmatprep.subr.bf16.mxu0 0
    %5421 = vmatpush2.bf16.msra.mxu0 %v5301
    %5422 = vmatprep.mubr.bf16.mxu0 %v5079
    %5423 = vmatmul.mubr.bf16.gmra.mxu0 %v5078
    %v5424 = vpop.f32.mrf.mxu0
    %v5425 = vadd.f32 %v5376, %v5424
    %v5426 = vpop.f32.mrf.mxu0
    %v5427 = vpop.f32.mrf.mxu0
    %v5428 = vadd.f32 %v5379, %v5427
    %v5429 = vpop.f32.mrf.mxu0
    %5430 = vmatprep.mubr.bf16.mxu0 %v5083
    %5431 = vmatmul.mubr.bf16.gmra.mxu0 %v5082
    %v5432 = vpop.f32.mrf.mxu0
    %v5433 = vadd.f32 %v5384, %v5432
    %v5434 = vpop.f32.mrf.mxu0
    %v5435 = vpop.f32.mrf.mxu0
    %v5436 = vadd.f32 %v5387, %v5435
    %v5437 = vpop.f32.mrf.mxu0
    %5438 = vdwg.mxu0
    %v5439 = vadd.f32 %v4309, %v5425
    %v5440 = vadd.f32 %v4310, %v5428
    %v5441 = vadd.f32 %v4311, %v5433
    %v5442 = vadd.f32 %v4312, %v5436
    %v5443 = vmul.f32 %v5439, %v5439
    %v5444 = vmul.f32 %v5440, %v5440
    %v5445 = vmul.f32 %v5441, %v5441
    %v5446 = vmul.f32 %v5442, %v5442
    %5447 = vadd.xlane.f32.xlu0 %v5443
    %v5448 = vpop.xlane.xlu0 %5447
    %5449 = vadd.xlane.f32.xlu0 %v5444
    %v5450 = vpop.xlane.xlu0 %5449
    %5451 = vadd.xlane.f32.xlu0 %v5445
    %v5452 = vpop.xlane.xlu0 %5451
    %5453 = vadd.xlane.f32.xlu0 %v5446
    %v5454 = vpop.xlane.xlu0 %5453
    %v5455 = vmul.f32 %v5448, %v217
    %v5456 = vmul.f32 %v5450, %v217
    %v5457 = vmul.f32 %v5452, %v217
    %v5458 = vmul.f32 %v5454, %v217
    %v5459 = vadd.f32 %v5455, 1e-06
    %v5460 = vadd.f32 %v5456, 1e-06
    %v5461 = vadd.f32 %v5457, 1e-06
    %v5462 = vadd.f32 %v5458, 1e-06
    %v5463 = vrsqrt.pop %v5459
    %v5464 = vrsqrt.pop %v5460
    %v5465 = vrsqrt.pop %v5461
    %v5466 = vrsqrt.pop %v5462
    %v5467 = vmul.f32 %v5439, %v5463
    %v5468 = vmul.f32 %v5440, %v5464
    %v5469 = vmul.f32 %v5441, %v5465
    %v5470 = vmul.f32 %v5442, %v5466
    %v5471 = vlaneseq
    %v5472 = vshrl.u32 %v5471, 7
    %v5473 = vsub.s32 4, %v5472
    %v5474 = vrot.slane %v188, %v5473
    %v5475 = vmul.f32 %v5467, %v5474
    %v5476 = vmul.f32 %v5468, %v5474
    %v5477 = vmul.f32 %v5469, %v5474
    %v5478 = vmul.f32 %v5470, %v5474
    %v5479 = vpack.c.bf16 %v5476, %v5475
    %v5480 = vpack.c.bf16 %v5478, %v5477
    %v5481 = vld [vmem:[#allocation17] sm:$0xff]
    %v5482 = vld [vmem:[#allocation17 + $0x8] sm:$0xff]
    %v5483 = vld [vmem:[#allocation17 + $0x10] sm:$0xff]
    %v5484 = vld [vmem:[#allocation17 + $0x18] sm:$0xff]
    %v5485 = vld [vmem:[#allocation17 + $0x20] sm:$0xff]
    %v5486 = vld [vmem:[#allocation17 + $0x28] sm:$0xff]
    %v5487 = vld [vmem:[#allocation17 + $0x30] sm:$0xff]
    %v5488 = vld [vmem:[#allocation17 + $0x38] sm:$0xff]
    %v5489 = vld [vmem:[#allocation17 + $0x40] sm:$0xff]
    %v5490 = vld [vmem:[#allocation17 + $0x48] sm:$0xff]
    %v5491 = vld [vmem:[#allocation17 + $0x50] sm:$0xff]
    %v5492 = vld [vmem:[#allocation17 + $0x58] sm:$0xff]
    %v5493 = vld [vmem:[#allocation17 + $0x60] sm:$0xff]
    %v5494 = vld [vmem:[#allocation17 + $0x68] sm:$0xff]
    %v5495 = vld [vmem:[#allocation17 + $0x70] sm:$0xff]
    %v5496 = vld [vmem:[#allocation17 + $0x78] sm:$0xff]
    %v5513 = vunpack.c.l.b16 %v5481
    %v5514 = vunpack.c.h.b16 %v5481
    %v5515 = vunpack.c.l.b16 %v5482
    %v5516 = vunpack.c.h.b16 %v5482
    %v5517 = vunpack.c.l.b16 %v5483
    %v5518 = vunpack.c.h.b16 %v5483
    %v5519 = vunpack.c.l.b16 %v5484
    %v5520 = vunpack.c.h.b16 %v5484
    %v5521 = vunpack.c.l.b16 %v5485
    %v5522 = vunpack.c.h.b16 %v5485
    %v5523 = vunpack.c.l.b16 %v5486
    %v5524 = vunpack.c.h.b16 %v5486
    %v5525 = vunpack.c.l.b16 %v5487
    %v5526 = vunpack.c.h.b16 %v5487
    %v5527 = vunpack.c.l.b16 %v5488
    %v5528 = vunpack.c.h.b16 %v5488
    %v5529 = vunpack.c.l.b16 %v5489
    %v5530 = vunpack.c.h.b16 %v5489
    %v5531 = vunpack.c.l.b16 %v5490
    %v5532 = vunpack.c.h.b16 %v5490
    %v5533 = vunpack.c.l.b16 %v5491
    %v5534 = vunpack.c.h.b16 %v5491
    %v5535 = vunpack.c.l.b16 %v5492
    %v5536 = vunpack.c.h.b16 %v5492
    %v5537 = vunpack.c.l.b16 %v5493
    %v5538 = vunpack.c.h.b16 %v5493
    %v5539 = vunpack.c.l.b16 %v5494
    %v5540 = vunpack.c.h.b16 %v5494
    %v5541 = vunpack.c.l.b16 %v5495
    %v5542 = vunpack.c.h.b16 %v5495
    %v5543 = vunpack.c.l.b16 %v5496
    %v5544 = vunpack.c.h.b16 %v5496
    %v5545 = vpack.c.b16 %v5515, %v5513
    %v5546 = vpack.c.b16 %v5516, %v5514
    %v5547 = vpack.c.b16 %v5519, %v5517
    %v5548 = vpack.c.b16 %v5520, %v5518
    %v5549 = vpack.c.b16 %v5523, %v5521
    %v5550 = vpack.c.b16 %v5524, %v5522
    %v5551 = vpack.c.b16 %v5527, %v5525
    %v5552 = vpack.c.b16 %v5528, %v5526
    %v5553 = vpack.c.b16 %v5531, %v5529
    %v5554 = vpack.c.b16 %v5532, %v5530
    %v5555 = vpack.c.b16 %v5535, %v5533
    %v5556 = vpack.c.b16 %v5536, %v5534
    %v5557 = vpack.c.b16 %v5539, %v5537
    %v5558 = vpack.c.b16 %v5540, %v5538
    %v5559 = vpack.c.b16 %v5543, %v5541
    %v5560 = vpack.c.b16 %v5544, %v5542
    %5577 = vmatprep.subr.bf16.mxu0 %v5560
    %5578 = vmatpush1.bf16.msra.mxu0 %v5559
    %5579 = vmatprep.subr.bf16.mxu0 %v5558
    %5580 = vmatpush1.bf16.msra.mxu0 %v5557
    %5581 = vmatprep.subr.bf16.mxu0 %v5556
    %5582 = vmatpush1.bf16.msra.mxu0 %v5555
    %5583 = vmatprep.subr.bf16.mxu0 %v5554
    %5584 = vmatpush1.bf16.msra.mxu0 %v5553
    %5585 = vmatprep.subr.bf16.mxu0 %v5552
    %5586 = vmatpush1.bf16.msra.mxu0 %v5551
    %5587 = vmatprep.subr.bf16.mxu0 %v5550
    %5588 = vmatpush1.bf16.msra.mxu0 %v5549
    %5589 = vmatprep.subr.bf16.mxu0 %v5548
    %5590 = vmatpush1.bf16.msra.mxu0 %v5547
    %5591 = vmatprep.subr.bf16.mxu0 %v5546
    %5592 = vmatpush1.bf16.msra.mxu0 %v5545
    %5593 = vmatprep.subr.bf16.mxu0 0
    %5594 = vmatpush2.bf16.msra.mxu0 0
    %5595 = vmatprep.subr.bf16.mxu0 0
    %5596 = vmatpush2.bf16.msra.mxu0 0
    %5597 = vmatprep.subr.bf16.mxu0 0
    %5598 = vmatpush2.bf16.msra.mxu0 0
    %5599 = vmatprep.subr.bf16.mxu0 0
    %5600 = vmatpush2.bf16.msra.mxu0 0
    %5601 = vmatprep.subr.bf16.mxu0 0
    %5602 = vmatpush2.bf16.msra.mxu0 0
    %5603 = vmatprep.subr.bf16.mxu0 0
    %5604 = vmatpush2.bf16.msra.mxu0 0
    %5605 = vmatprep.subr.bf16.mxu0 0
    %5606 = vmatpush2.bf16.msra.mxu0 0
    %5607 = vmatprep.subr.bf16.mxu0 0
    %5608 = vmatpush2.bf16.msra.mxu0 0
    %5609 = vmatprep.mubr.bf16.mxu0 0
    %5610 = vmatmul.mubr.bf16.gmra.mxu0 %v5479
    %v5611 = vpop.f32.mrf.mxu0
    %v5612 = vadd.f32 0.0, %v5611
    %v5613 = vpop.f32.mrf.mxu0
    %v5614 = vadd.f32 0.0, %v5613
    %v5615 = vpop.f32.mrf.mxu0
    %v5616 = vadd.f32 0.0, %v5615
    %v5617 = vpop.f32.mrf.mxu0
    %v5618 = vadd.f32 0.0, %v5617
    %5619 = vmatprep.mubr.bf16.mxu0 0
    %5620 = vmatmul.mubr.bf16.gmra.mxu0 %v5480
    %v5621 = vpop.f32.mrf.mxu0
    %v5622 = vadd.f32 0.0, %v5621
    %v5623 = vpop.f32.mrf.mxu0
    %v5624 = vadd.f32 0.0, %v5623
    %v5625 = vpop.f32.mrf.mxu0
    %v5626 = vadd.f32 0.0, %v5625
    %v5627 = vpop.f32.mrf.mxu0
    %v5628 = vadd.f32 0.0, %v5627
    %5629 = vdwg.mxu0
    %5630 = vst [vmem:[#allocation19] sm:$0xff] %v5612
    %5631 = vst [vmem:[#allocation19 + $0x8] sm:$0xff] %v5614
    %5632 = vst [vmem:[#allocation19 + $0x10] sm:$0xff] %v5616
    %5633 = vst [vmem:[#allocation19 + $0x18] sm:$0xff] %v5618
    %5634 = vst [vmem:[#allocation19 + $0x20] sm:$0xff] %v5622
    %5635 = vst [vmem:[#allocation19 + $0x28] sm:$0xff] %v5624
    %5636 = vst [vmem:[#allocation19 + $0x30] sm:$0xff] %v5626
    %5637 = vst [vmem:[#allocation19 + $0x38] sm:$0xff] %v5628
    // Predicated region
    $region82: #{tpu_custom_call.1} parent=1 // pred_check
      _
    $region83: #{tpu_custom_call.1} parent=1 // pred_check_branch
      %5639 = sbr.rel (0) target = $region85
    $region84: #{tpu_custom_call.1} parent=1 // pred_region
      %s5641 = ssub.s32 1024, 1024
      %5642 = vsyncadd [#allocation4], %s5641
      %s5643 = sshll.u32 [#allocation19], 4
      %s5644 = int_to_ptr.vmem [resolvable:$true] %s5643
      %5649 = dma.vmem_to_hbm [thread:$0]  %s5644, 1024, %s10, [#allocation4], 256, 256, 16
    $region85: #{tpu_custom_call.1} parent=1 // pred_fallthru
      _
    // Predicated region
    $region86: #{tpu_custom_call.1} parent=1 // pred_check
      _
    $region87: #{tpu_custom_call.1} parent=1 // pred_check_branch
      %5651 = sbr.rel (0) target = $region89
    $region88: #{tpu_custom_call.1} parent=1 // pred_region
      %5652 = dma.done [#allocation4], 1024
    $region89: #{tpu_custom_call.1} parent=1 // pred_fallthru
      _
    %5653 = vsyncpa [#allocation3], 1
    %5654 = vsyncpa [#allocation6], 1
    %5655 = vsyncpa [#allocation9], 1
    %5656 = vsyncpa [#allocation12], 1
    %5657 = vsyncpa [#allocation15], 1
    %5658 = vsyncpa [#allocation18], 1
    %5659 = vsyncpa [#allocation4], 1

</llo_original>
